<compile_context>
chip_gen: v7x
topology: tpu7x:2x2x1
jax: 0.10.0
libtpu: 0.0.40
codegen_flags: <defaults>
</compile_context>

<pallas_src>
import jax
import jax.numpy as jnp
from jax.experimental import pallas as pl
from jax.experimental.pallas import tpu as pltpu

# ----------------------------------------------------------------------------
# Static model dimensions. Input (N, Cin=1, D, H, W) with W=2 (bid/ask side).
# conv1 k=(1,3,2) p=(0,1,0) collapses W->1; MaxPool3d(1,2,1) halves H;
# conv2 k=(3,3,1) p=(1,1,0) keeps (D,H); MaxPool3d(2,2,1) halves both;
# fc_in = C2 * D/2 * H/4 * 1 (the lazily-derived fc1 input dim).
# ----------------------------------------------------------------------------
N_BATCH = 2
D, H, W = 8, 16, 2
C1, C2 = 16, 32
H1 = H // 2                  # after MaxPool3d(1, 2, 1)
D2, H2 = D // 2, H1 // 2     # after MaxPool3d(2, 2, 1)
FC_IN = C2 * D2 * H2 * 1     # = 512
FC_HID = 128
NUM_CLASSES = 2
LANE = 128                   # pad the class dim to a lane-dense (128-wide) store
BN_EPS = 1e-5
VMEM_LIMIT = 32 * 1024 * 1024


# ----------------------------------------------------------------------------
# Fused forward kernel: conv1 block -> conv2 block -> flatten -> fc1 -> output
# ----------------------------------------------------------------------------
def _deepvol_kernel(x_ref, w1_ref, t1_ref, w2_ref, t2_ref,
                    wf1_ref, bf1_ref, wo_ref, bo_ref, o_ref,
                    xpad1, xpad2, feat):
    # x_ref : (N, D, H, W)        f32   (Cin=1 squeezed)
    # w1    : (6, C1)             f32   conv1 taps (kh,kw) with BN scale folded
    # t1    : (1, C1)             f32   folded conv1 bias / BN shift
    # w2    : (9, C1, C2)         bf16  conv2 taps (kd*3+kh), BN scale folded
    # t2    : (1, C2)             f32
    # wf1   : (FC_IN, FC_HID)     bf16  fc1 weights, rows permuted to (d2,h2,c2)
    # bf1   : (1, FC_HID)         f32
    # wo    : (FC_HID, LANE)      bf16  output weights zero-padded past classes
    # bo    : (1, LANE)           f32
    # o_ref : (N, LANE)           f32   lane-dense store
    # xpad1 : (N, D, H+2, W)      f32   scratch (H-padded conv1 input)
    # xpad2 : (N, D+2, H1+2, C1)  f32   scratch ((D,H)-padded conv2 input)
    # feat  : (N, FC_IN)          f32   scratch (flattened conv2 output)
    f32 = jnp.float32

    # ---- conv1: Conv3d(1->C1, k=(1,3,2), pad=(0,1,0)) on the VPU -------------
    # Zero only the two H halo rows, then write the interior once.
    xpad1[:, :, 0:1, :] = jnp.zeros((N_BATCH, D, 1, W), f32)
    xpad1[:, :, H + 1:H + 2, :] = jnp.zeros((N_BATCH, D, 1, W), f32)
    xpad1[:, :, 1:H + 1, :] = x_ref[...]

    w1 = w1_ref[...]                                        # (6, C1)
    acc1 = jnp.zeros((N_BATCH, D, H, C1), f32)
    for kh in range(3):                                     # 6 broadcast FMAs
        tap = xpad1[:, :, kh:kh + H, :]                     # (N, D, H, W)
        for kw in range(W):
            k = kh * W + kw
            acc1 = acc1 + tap[:, :, :, kw:kw + 1] * w1[k:k + 1, :]

    # MaxPool3d(1,2,1) on the register accumulator, then BN shift + ReLU.
    # (pool-before-shift is valid: per-channel shift, monotone max/ReLU)
    v1 = acc1.reshape(N_BATCH * D * H1, 2, C1)
    p1 = jnp.maximum(v1[:, 0:1, :], v1[:, 1:2, :]).reshape(N_BATCH * D * H1, C1)
    y1 = jnp.maximum(p1 + t1_ref[...], 0.0)                 # (N*D*H1, C1) f32

    # ---- conv2: Conv3d(C1->C2, k=(3,3,1), pad=(1,1,0)) on the MXU ------------
    # Halo-ring-only zeroing of the padded buffer, one interior write.
    xpad2[:, 0:1, :, :] = jnp.zeros((N_BATCH, 1, H1 + 2, C1), f32)
    xpad2[:, D + 1:D + 2, :, :] = jnp.zeros((N_BATCH, 1, H1 + 2, C1), f32)
    xpad2[:, 1:D + 1, 0:1, :] = jnp.zeros((N_BATCH, D, 1, C1), f32)
    xpad2[:, 1:D + 1, H1 + 1:H1 + 2, :] = jnp.zeros((N_BATCH, D, 1, C1), f32)
    xpad2[:, 1:D + 1, 1:H1 + 1, :] = y1.reshape(N_BATCH, D, H1, C1)

    acc2 = jnp.zeros((N_BATCH * D * H1, C2), f32)
    for kd in range(3):                                     # in-VMEM im2col
        for kh in range(3):
            tap = xpad2[:, kd:kd + D, kh:kh + H1, :].reshape(N_BATCH * D * H1, C1)
            acc2 = acc2 + jnp.dot(tap.astype(jnp.bfloat16), w2_ref[kd * 3 + kh],
                                  preferred_element_type=f32)

    # MaxPool3d(2,2,1): pool H, BN shift + ReLU, then pool D (all on registers).
    v2 = acc2.reshape(N_BATCH * D * H2, 2, C2)
    p2 = jnp.maximum(v2[:, 0:1, :], v2[:, 1:2, :]).reshape(N_BATCH * D * H2, C2)
    z2 = jnp.maximum(p2 + t2_ref[...], 0.0)                 # (N*D*H2, C2)
    v3 = z2.reshape(N_BATCH * D2, 2 * H2, C2)               # rows (n,d2); inner (d%2,h2)
    y2 = jnp.maximum(v3[:, :H2, :], v3[:, H2:, :])          # (N*D2, H2, C2)
    y2 = y2.reshape(N_BATCH, D2, H2, C2)

    # ---- flatten (kernel order (d2,h2,c2); fc1 rows pre-permuted to match) ---
    for d2 in range(D2):
        for h2 in range(H2):
            off = (d2 * H2 + h2) * C2
            feat[:, off:off + C2] = y2[:, d2:d2 + 1, h2:h2 + 1, :].reshape(N_BATCH, C2)

    # ---- fc1 (Linear + ReLU + Dropout) fused with the output Linear ----------
    fx = feat[...].astype(jnp.bfloat16)                     # (N, FC_IN)
    hid = jnp.dot(fx, wf1_ref[...], preferred_element_type=f32) + bf1_ref[...]
    hid = jnp.maximum(hid, 0.0)
    # TODO(synk): Dropout(0.3) is identity under eval-mode semantics (no RNG mask).
    o_ref[...] = jnp.dot(hid.astype(jnp.bfloat16), wo_ref[...],
                         preferred_element_type=f32) + bo_ref[...]


# ----------------------------------------------------------------------------
# Parameters (deterministic, synthetic) and forward pass
# ----------------------------------------------------------------------------
class _KeyGen:
    def __init__(self, key):
        self._key = key

    def __call__(self):
        self._key, sub = jax.random.split(self._key)
        return sub


def init_params(key):
    kg = _KeyGen(key)

    def conv3d(kd, kh, kw, cin, cout):
        fan_in = kd * kh * kw * cin
        std = (2.0 / fan_in) ** 0.5
        return {
            # weight stored as (kD, kH, kW, Cin, Cout)
            "w": std * jax.random.normal(kg(), (kd, kh, kw, cin, cout), jnp.float32),
            "b": 0.05 * jax.random.normal(kg(), (cout,), jnp.float32),
            "gamma": 1.0 + 0.1 * jax.random.normal(kg(), (cout,), jnp.float32),
            "beta": 0.1 * jax.random.normal(kg(), (cout,), jnp.float32),
            "mean": 0.1 * jax.random.normal(kg(), (cout,), jnp.float32),
            "var": jax.random.uniform(kg(), (cout,), jnp.float32, 0.5, 1.5),
        }

    def linear(fin, fout):
        std = (1.0 / fin) ** 0.5
        return {"w": std * jax.random.normal(kg(), (fin, fout), jnp.float32),
                "b": 0.05 * jax.random.normal(kg(), (fout,), jnp.float32)}

    return {
        "conv1": conv3d(1, 3, 2, 1, C1),
        "conv2": conv3d(3, 3, 1, C1, C2),
        "fc1": linear(FC_IN, FC_HID),      # fin indexed in torch-flatten order
        "out": linear(FC_HID, NUM_CLASSES),
    }


def deepvol_forward(params, x_ncdhw):
    n = x_ncdhw.shape[0]
    assert n == N_BATCH
    # (N, 1, D, H, W) -> (N, D, H, W): Cin=1, so the feature axis is just W.
    x = x_ncdhw.reshape(n, D, H, W).astype(jnp.float32)

    # TODO(synk): BatchNorm3d uses eval-mode running statistics (folded into the
    # conv weights); training-mode batch statistics are not implemented.

    # conv1: fold BN scale into weights; kept f32 (conv1 runs on the VPU).
    p = params["conv1"]
    s1 = p["gamma"] * jax.lax.rsqrt(p["var"] + BN_EPS)
    w1 = (p["w"][0, :, :, 0, :] * s1).reshape(3 * W, C1)              # (6, C1)
    t1 = ((p["b"] - p["mean"]) * s1 + p["beta"]).reshape(1, C1)

    # conv2: BN scale folded; bf16 MXU operands.
    p = params["conv2"]
    s2 = p["gamma"] * jax.lax.rsqrt(p["var"] + BN_EPS)
    w2 = (p["w"][:, :, 0, :, :] * s2).reshape(9, C1, C2).astype(jnp.bfloat16)
    t2 = ((p["b"] - p["mean"]) * s2 + p["beta"]).reshape(1, C2)

    # fc1: permute rows from torch-flatten (c2,d2,h2) order to the kernel's
    # (d2,h2,c2) flatten order so no in-kernel transpose is needed.
    wf1 = params["fc1"]["w"].reshape(C2, D2, H2, FC_HID)
    wf1 = jnp.transpose(wf1, (1, 2, 0, 3)).reshape(FC_IN, FC_HID).astype(jnp.bfloat16)
    bf1 = params["fc1"]["b"].reshape(1, FC_HID)

    # Output head: zero-pad the class dim to 128 for a lane-dense store.
    wo = jnp.zeros((FC_HID, LANE), jnp.float32)
    wo = wo.at[:, :NUM_CLASSES].set(params["out"]["w"]).astype(jnp.bfloat16)
    bo = jnp.zeros((1, LANE), jnp.float32)
    bo = bo.at[:, :NUM_CLASSES].set(params["out"]["b"].reshape(1, NUM_CLASSES))

    out = pl.pallas_call(
        _deepvol_kernel,
        out_shape=jax.ShapeDtypeStruct((n, LANE), jnp.float32),
        grid=(1,),
        in_specs=[
            pl.BlockSpec((n, D, H, W), lambda i: (0, 0, 0, 0)),
            pl.BlockSpec((3 * W, C1), lambda i: (0, 0)),
            pl.BlockSpec((1, C1), lambda i: (0, 0)),
            pl.BlockSpec((9, C1, C2), lambda i: (0, 0, 0)),
            pl.BlockSpec((1, C2), lambda i: (0, 0)),
            pl.BlockSpec((FC_IN, FC_HID), lambda i: (0, 0)),
            pl.BlockSpec((1, FC_HID), lambda i: (0, 0)),
            pl.BlockSpec((FC_HID, LANE), lambda i: (0, 0)),
            pl.BlockSpec((1, LANE), lambda i: (0, 0)),
        ],
        out_specs=pl.BlockSpec((n, LANE), lambda i: (0, 0)),
        scratch_shapes=[
            pltpu.VMEM((n, D, H + 2, W), jnp.float32),
            pltpu.VMEM((n, D + 2, H1 + 2, C1), jnp.float32),
            pltpu.VMEM((n, FC_IN), jnp.float32),
        ],
        compiler_params=pltpu.CompilerParams(
            dimension_semantics=("arbitrary",),
            vmem_limit_bytes=VMEM_LIMIT),
    )(x, w1, t1, w2, t2, wf1, bf1, wo, bo)

    return out[:, :NUM_CLASSES]                                       # (N, 2) f32


if __name__ == "__main__":
    key = jax.random.PRNGKey(0)
    kp, kx = jax.random.split(key)

    params = init_params(kp)
    x = jax.random.normal(kx, (N_BATCH, 1, D, H, W), jnp.float32)

    out = jax.jit(deepvol_forward)(params, x)
    out = jax.block_until_ready(out)
    assert out.shape == (N_BATCH, NUM_CLASSES) and out.dtype == jnp.float32
    print("KERNEL_OK")
</pallas_src>

<mosaic_0001>
module attributes {stable_mosaic.version = 11 : i64} {
  func.func @_deepvol_kernel(%arg0: i32, %arg1: memref<2x8x16x2xf32, #tpu.memory_space<vmem>>, %arg2: memref<6x16xf32, #tpu.memory_space<vmem>>, %arg3: memref<1x16xf32, #tpu.memory_space<vmem>>, %arg4: memref<9x16x32xbf16, #tpu.memory_space<vmem>>, %arg5: memref<1x32xf32, #tpu.memory_space<vmem>>, %arg6: memref<512x128xbf16, #tpu.memory_space<vmem>>, %arg7: memref<1x128xf32, #tpu.memory_space<vmem>>, %arg8: memref<128x128xbf16, #tpu.memory_space<vmem>>, %arg9: memref<1x128xf32, #tpu.memory_space<vmem>>, %arg10: memref<2x128xf32, #tpu.memory_space<vmem>>, %arg11: memref<2x8x18x2xf32, #tpu.memory_space<vmem>>, %arg12: memref<2x10x10x16xf32, #tpu.memory_space<vmem>>, %arg13: memref<2x512xf32, #tpu.memory_space<vmem>>) attributes {dimension_semantics = [#tpu.dimension_semantics<arbitrary>], iteration_bounds = array<i64: 1>, scalar_prefetch = 0 : i64, scratch_operands = 3 : i64, tpu.core_type = #tpu.core_type<tc>, window_params = [{pipeline_mode = #tpu.pipeline_mode<synchronous>, transform_indices = @transform_0, window_bounds = array<i64: 2, 8, 16, 2>}, {pipeline_mode = #tpu.pipeline_mode<synchronous>, transform_indices = @transform_1, window_bounds = array<i64: 6, 16>}, {pipeline_mode = #tpu.pipeline_mode<synchronous>, transform_indices = @transform_2, window_bounds = array<i64: 1, 16>}, {pipeline_mode = #tpu.pipeline_mode<synchronous>, transform_indices = @transform_3, window_bounds = array<i64: 9, 16, 32>}, {pipeline_mode = #tpu.pipeline_mode<synchronous>, transform_indices = @transform_4, window_bounds = array<i64: 1, 32>}, {pipeline_mode = #tpu.pipeline_mode<synchronous>, transform_indices = @transform_5, window_bounds = array<i64: 512, 128>}, {pipeline_mode = #tpu.pipeline_mode<synchronous>, transform_indices = @transform_6, window_bounds = array<i64: 1, 128>}, {pipeline_mode = #tpu.pipeline_mode<synchronous>, transform_indices = @transform_7, window_bounds = array<i64: 128, 128>}, {pipeline_mode = #tpu.pipeline_mode<synchronous>, transform_indices = @transform_8, window_bounds = array<i64: 1, 128>}, {pipeline_mode = #tpu.pipeline_mode<synchronous>, transform_indices = @transform_9, window_bounds = array<i64: 2, 128>}]} {
    %cst = arith.constant 0.000000e+00 : f32
    %0 = vector.broadcast %cst : f32 to vector<2x8x1x2xf32>
    %c0 = arith.constant 0 : index
    %c0_0 = arith.constant 0 : index
    %c0_1 = arith.constant 0 : index
    %c0_2 = arith.constant 0 : index
    %1 = vector.load %arg11[%c0, %c0_0, %c0_1, %c0_2] : memref<2x8x18x2xf32, #tpu.memory_space<vmem>>, vector<2x8x1x2xf32>
    tpu.vector_store %arg11[%c0, %c0_0, %c0_1, %c0_2], %0 {strides = array<i32>} : memref<2x8x18x2xf32, #tpu.memory_space<vmem>>, vector<2x8x1x2xf32>,
    %cst_3 = arith.constant 0.000000e+00 : f32
    %2 = vector.broadcast %cst_3 : f32 to vector<2x8x1x2xf32>
    %c0_4 = arith.constant 0 : index
    %c0_5 = arith.constant 0 : index
    %c17 = arith.constant 17 : index
    %c0_6 = arith.constant 0 : index
    %3 = vector.load %arg11[%c0_4, %c0_5, %c17, %c0_6] : memref<2x8x18x2xf32, #tpu.memory_space<vmem>>, vector<2x8x1x2xf32>
    tpu.vector_store %arg11[%c0_4, %c0_5, %c17, %c0_6], %2 {strides = array<i32>} : memref<2x8x18x2xf32, #tpu.memory_space<vmem>>, vector<2x8x1x2xf32>,
    %c0_7 = arith.constant 0 : index
    %c0_8 = arith.constant 0 : index
    %c0_9 = arith.constant 0 : index
    %c0_10 = arith.constant 0 : index
    %4 = vector.load %arg1[%c0_7, %c0_8, %c0_9, %c0_10] : memref<2x8x16x2xf32, #tpu.memory_space<vmem>>, vector<2x8x16x2xf32>
    %c0_11 = arith.constant 0 : index
    %c0_12 = arith.constant 0 : index
    %c1 = arith.constant 1 : index
    %c0_13 = arith.constant 0 : index
    %5 = vector.load %arg11[%c0_11, %c0_12, %c1, %c0_13] : memref<2x8x18x2xf32, #tpu.memory_space<vmem>>, vector<2x8x16x2xf32>
    tpu.vector_store %arg11[%c0_11, %c0_12, %c1, %c0_13], %4 {strides = array<i32>} : memref<2x8x18x2xf32, #tpu.memory_space<vmem>>, vector<2x8x16x2xf32>,
    %c0_14 = arith.constant 0 : index
    %c0_15 = arith.constant 0 : index
    %6 = vector.load %arg2[%c0_14, %c0_15] : memref<6x16xf32, #tpu.memory_space<vmem>>, vector<6x16xf32>
    %cst_16 = arith.constant 0.000000e+00 : f32
    %7 = vector.broadcast %cst_16 : f32 to vector<2x8x16x16xf32>
    %c0_17 = arith.constant 0 : index
    %c0_18 = arith.constant 0 : index
    %c0_19 = arith.constant 0 : index
    %c0_20 = arith.constant 0 : index
    %8 = vector.load %arg11[%c0_17, %c0_18, %c0_19, %c0_20] : memref<2x8x18x2xf32, #tpu.memory_space<vmem>>, vector<2x8x16x2xf32>
    %9 = vector.extract_strided_slice %8 {offsets = [0, 0, 0, 0], sizes = [2, 8, 16, 1], strides = [1, 1, 1, 1]} : vector<2x8x16x2xf32> to vector<2x8x16x1xf32>
    %10 = vector.extract_strided_slice %6 {offsets = [0, 0], sizes = [1, 16], strides = [1, 1]} : vector<6x16xf32> to vector<1x16xf32>
    %11 = vector.shape_cast %10 : vector<1x16xf32> to vector<1x1x1x16xf32>
    %12 = vector.broadcast %9 : vector<2x8x16x1xf32> to vector<2x8x16x16xf32>
    %13 = vector.broadcast %11 : vector<1x1x1x16xf32> to vector<2x8x16x16xf32>
    %14 = arith.mulf %12, %13 : vector<2x8x16x16xf32>
    %15 = arith.addf %7, %14 : vector<2x8x16x16xf32>
    %16 = vector.extract_strided_slice %8 {offsets = [0, 0, 0, 1], sizes = [2, 8, 16, 1], strides = [1, 1, 1, 1]} : vector<2x8x16x2xf32> to vector<2x8x16x1xf32>
    %17 = vector.extract_strided_slice %6 {offsets = [1, 0], sizes = [1, 16], strides = [1, 1]} : vector<6x16xf32> to vector<1x16xf32>
    %18 = vector.shape_cast %17 : vector<1x16xf32> to vector<1x1x1x16xf32>
    %19 = vector.broadcast %16 : vector<2x8x16x1xf32> to vector<2x8x16x16xf32>
    %20 = vector.broadcast %18 : vector<1x1x1x16xf32> to vector<2x8x16x16xf32>
    %21 = arith.mulf %19, %20 : vector<2x8x16x16xf32>
    %22 = arith.addf %15, %21 : vector<2x8x16x16xf32>
    %c0_21 = arith.constant 0 : index
    %c0_22 = arith.constant 0 : index
    %c1_23 = arith.constant 1 : index
    %c0_24 = arith.constant 0 : index
    %23 = vector.load %arg11[%c0_21, %c0_22, %c1_23, %c0_24] : memref<2x8x18x2xf32, #tpu.memory_space<vmem>>, vector<2x8x16x2xf32>
    %24 = vector.extract_strided_slice %23 {offsets = [0, 0, 0, 0], sizes = [2, 8, 16, 1], strides = [1, 1, 1, 1]} : vector<2x8x16x2xf32> to vector<2x8x16x1xf32>
    %25 = vector.extract_strided_slice %6 {offsets = [2, 0], sizes = [1, 16], strides = [1, 1]} : vector<6x16xf32> to vector<1x16xf32>
    %26 = vector.shape_cast %25 : vector<1x16xf32> to vector<1x1x1x16xf32>
    %27 = vector.broadcast %24 : vector<2x8x16x1xf32> to vector<2x8x16x16xf32>
    %28 = vector.broadcast %26 : vector<1x1x1x16xf32> to vector<2x8x16x16xf32>
    %29 = arith.mulf %27, %28 : vector<2x8x16x16xf32>
    %30 = arith.addf %22, %29 : vector<2x8x16x16xf32>
    %31 = vector.extract_strided_slice %23 {offsets = [0, 0, 0, 1], sizes = [2, 8, 16, 1], strides = [1, 1, 1, 1]} : vector<2x8x16x2xf32> to vector<2x8x16x1xf32>
    %32 = vector.extract_strided_slice %6 {offsets = [3, 0], sizes = [1, 16], strides = [1, 1]} : vector<6x16xf32> to vector<1x16xf32>
    %33 = vector.shape_cast %32 : vector<1x16xf32> to vector<1x1x1x16xf32>
    %34 = vector.broadcast %31 : vector<2x8x16x1xf32> to vector<2x8x16x16xf32>
    %35 = vector.broadcast %33 : vector<1x1x1x16xf32> to vector<2x8x16x16xf32>
    %36 = arith.mulf %34, %35 : vector<2x8x16x16xf32>
    %37 = arith.addf %30, %36 : vector<2x8x16x16xf32>
    %c0_25 = arith.constant 0 : index
    %c0_26 = arith.constant 0 : index
    %c2 = arith.constant 2 : index
    %c0_27 = arith.constant 0 : index
    %38 = vector.load %arg11[%c0_25, %c0_26, %c2, %c0_27] : memref<2x8x18x2xf32, #tpu.memory_space<vmem>>, vector<2x8x16x2xf32>
    %39 = vector.extract_strided_slice %38 {offsets = [0, 0, 0, 0], sizes = [2, 8, 16, 1], strides = [1, 1, 1, 1]} : vector<2x8x16x2xf32> to vector<2x8x16x1xf32>
    %40 = vector.extract_strided_slice %6 {offsets = [4, 0], sizes = [1, 16], strides = [1, 1]} : vector<6x16xf32> to vector<1x16xf32>
    %41 = vector.shape_cast %40 : vector<1x16xf32> to vector<1x1x1x16xf32>
    %42 = vector.broadcast %39 : vector<2x8x16x1xf32> to vector<2x8x16x16xf32>
    %43 = vector.broadcast %41 : vector<1x1x1x16xf32> to vector<2x8x16x16xf32>
    %44 = arith.mulf %42, %43 : vector<2x8x16x16xf32>
    %45 = arith.addf %37, %44 : vector<2x8x16x16xf32>
    %46 = vector.extract_strided_slice %38 {offsets = [0, 0, 0, 1], sizes = [2, 8, 16, 1], strides = [1, 1, 1, 1]} : vector<2x8x16x2xf32> to vector<2x8x16x1xf32>
    %47 = vector.extract_strided_slice %6 {offsets = [5, 0], sizes = [1, 16], strides = [1, 1]} : vector<6x16xf32> to vector<1x16xf32>
    %48 = vector.shape_cast %47 : vector<1x16xf32> to vector<1x1x1x16xf32>
    %49 = vector.broadcast %46 : vector<2x8x16x1xf32> to vector<2x8x16x16xf32>
    %50 = vector.broadcast %48 : vector<1x1x1x16xf32> to vector<2x8x16x16xf32>
    %51 = arith.mulf %49, %50 : vector<2x8x16x16xf32>
    %52 = arith.addf %45, %51 : vector<2x8x16x16xf32>
    %53 = vector.shape_cast %52 : vector<2x8x16x16xf32> to vector<128x2x16xf32>
    %54 = vector.extract_strided_slice %53 {offsets = [0, 0, 0], sizes = [128, 1, 16], strides = [1, 1, 1]} : vector<128x2x16xf32> to vector<128x1x16xf32>
    %55 = vector.extract_strided_slice %53 {offsets = [0, 1, 0], sizes = [128, 1, 16], strides = [1, 1, 1]} : vector<128x2x16xf32> to vector<128x1x16xf32>
    %56 = arith.maximumf %54, %55 : vector<128x1x16xf32>
    %57 = vector.shape_cast %56 : vector<128x1x16xf32> to vector<128x16xf32>
    %c0_28 = arith.constant 0 : index
    %c0_29 = arith.constant 0 : index
    %58 = vector.load %arg3[%c0_28, %c0_29] : memref<1x16xf32, #tpu.memory_space<vmem>>, vector<1x16xf32>
    %59 = vector.broadcast %58 : vector<1x16xf32> to vector<128x16xf32>
    %60 = arith.addf %57, %59 : vector<128x16xf32>
    %cst_30 = arith.constant 0.000000e+00 : f32
    %61 = vector.broadcast %cst_30 : f32 to vector<128x16xf32>
    %62 = arith.maximumf %60, %61 : vector<128x16xf32>
    %cst_31 = arith.constant 0.000000e+00 : f32
    %63 = vector.broadcast %cst_31 : f32 to vector<2x1x10x16xf32>
    %c0_32 = arith.constant 0 : index
    %c0_33 = arith.constant 0 : index
    %c0_34 = arith.constant 0 : index
    %c0_35 = arith.constant 0 : index
    %64 = vector.load %arg12[%c0_32, %c0_33, %c0_34, %c0_35] : memref<2x10x10x16xf32, #tpu.memory_space<vmem>>, vector<2x1x10x16xf32>
    tpu.vector_store %arg12[%c0_32, %c0_33, %c0_34, %c0_35], %63 {strides = array<i32>} : memref<2x10x10x16xf32, #tpu.memory_space<vmem>>, vector<2x1x10x16xf32>,
    %cst_36 = arith.constant 0.000000e+00 : f32
    %65 = vector.broadcast %cst_36 : f32 to vector<2x1x10x16xf32>
    %c0_37 = arith.constant 0 : index
    %c9 = arith.constant 9 : index
    %c0_38 = arith.constant 0 : index
    %c0_39 = arith.constant 0 : index
    %66 = vector.load %arg12[%c0_37, %c9, %c0_38, %c0_39] : memref<2x10x10x16xf32, #tpu.memory_space<vmem>>, vector<2x1x10x16xf32>
    tpu.vector_store %arg12[%c0_37, %c9, %c0_38, %c0_39], %65 {strides = array<i32>} : memref<2x10x10x16xf32, #tpu.memory_space<vmem>>, vector<2x1x10x16xf32>,
    %cst_40 = arith.constant 0.000000e+00 : f32
    %67 = vector.broadcast %cst_40 : f32 to vector<2x8x1x16xf32>
    %c0_41 = arith.constant 0 : index
    %c1_42 = arith.constant 1 : index
    %c0_43 = arith.constant 0 : index
    %c0_44 = arith.constant 0 : index
    %68 = vector.load %arg12[%c0_41, %c1_42, %c0_43, %c0_44] : memref<2x10x10x16xf32, #tpu.memory_space<vmem>>, vector<2x8x1x16xf32>
    tpu.vector_store %arg12[%c0_41, %c1_42, %c0_43, %c0_44], %67 {strides = array<i32>} : memref<2x10x10x16xf32, #tpu.memory_space<vmem>>, vector<2x8x1x16xf32>,
    %cst_45 = arith.constant 0.000000e+00 : f32
    %69 = vector.broadcast %cst_45 : f32 to vector<2x8x1x16xf32>
    %c0_46 = arith.constant 0 : index
    %c1_47 = arith.constant 1 : index
    %c9_48 = arith.constant 9 : index
    %c0_49 = arith.constant 0 : index
    %70 = vector.load %arg12[%c0_46, %c1_47, %c9_48, %c0_49] : memref<2x10x10x16xf32, #tpu.memory_space<vmem>>, vector<2x8x1x16xf32>
    tpu.vector_store %arg12[%c0_46, %c1_47, %c9_48, %c0_49], %69 {strides = array<i32>} : memref<2x10x10x16xf32, #tpu.memory_space<vmem>>, vector<2x8x1x16xf32>,
    %71 = vector.shape_cast %62 : vector<128x16xf32> to vector<2x8x8x16xf32>
    %c0_50 = arith.constant 0 : index
    %c1_51 = arith.constant 1 : index
    %c1_52 = arith.constant 1 : index
    %c0_53 = arith.constant 0 : index
    %72 = vector.load %arg12[%c0_50, %c1_51, %c1_52, %c0_53] : memref<2x10x10x16xf32, #tpu.memory_space<vmem>>, vector<2x8x8x16xf32>
    tpu.vector_store %arg12[%c0_50, %c1_51, %c1_52, %c0_53], %71 {strides = array<i32>} : memref<2x10x10x16xf32, #tpu.memory_space<vmem>>, vector<2x8x8x16xf32>,
    %cst_54 = arith.constant 0.000000e+00 : f32
    %73 = vector.broadcast %cst_54 : f32 to vector<128x32xf32>
    %c0_55 = arith.constant 0 : index
    %c0_56 = arith.constant 0 : index
    %c0_57 = arith.constant 0 : index
    %c0_58 = arith.constant 0 : index
    %74 = vector.load %arg12[%c0_55, %c0_56, %c0_57, %c0_58] : memref<2x10x10x16xf32, #tpu.memory_space<vmem>>, vector<2x8x8x16xf32>
    %75 = vector.shape_cast %74 : vector<2x8x8x16xf32> to vector<128x16xf32>
    %76 = arith.truncf %75 : vector<128x16xf32> to vector<128x16xbf16>
    %c0_59 = arith.constant 0 : index
    %c0_60 = arith.constant 0 : index
    %c0_61 = arith.constant 0 : index
    %77 = vector.load %arg4[%c0_59, %c0_60, %c0_61] : memref<9x16x32xbf16, #tpu.memory_space<vmem>>, vector<1x16x32xbf16>
    %78 = vector.shape_cast %77 : vector<1x16x32xbf16> to vector<16x32xbf16>
    %cst_62 = arith.constant dense<0.000000e+00> : vector<128x32xf32>
    %79 = tpu.matmul %76, %78, %cst_62 {dimension_numbers = #tpu.dot_dimension_numbers<[1], [0], [0], [1], [0, 0, 1, 1], [], []>} : vector<128x16xbf16>, vector<16x32xbf16>, vector<128x32xf32> -> vector<128x32xf32>
    %80 = arith.addf %73, %79 : vector<128x32xf32>
    %c0_63 = arith.constant 0 : index
    %c0_64 = arith.constant 0 : index
    %c1_65 = arith.constant 1 : index
    %c0_66 = arith.constant 0 : index
    %81 = vector.load %arg12[%c0_63, %c0_64, %c1_65, %c0_66] : memref<2x10x10x16xf32, #tpu.memory_space<vmem>>, vector<2x8x8x16xf32>
    %82 = vector.shape_cast %81 : vector<2x8x8x16xf32> to vector<128x16xf32>
    %83 = arith.truncf %82 : vector<128x16xf32> to vector<128x16xbf16>
    %c1_67 = arith.constant 1 : index
    %c0_68 = arith.constant 0 : index
    %c0_69 = arith.constant 0 : index
    %84 = vector.load %arg4[%c1_67, %c0_68, %c0_69] : memref<9x16x32xbf16, #tpu.memory_space<vmem>>, vector<1x16x32xbf16>
    %85 = vector.shape_cast %84 : vector<1x16x32xbf16> to vector<16x32xbf16>
    %cst_70 = arith.constant dense<0.000000e+00> : vector<128x32xf32>
    %86 = tpu.matmul %83, %85, %cst_70 {dimension_numbers = #tpu.dot_dimension_numbers<[1], [0], [0], [1], [0, 0, 1, 1], [], []>} : vector<128x16xbf16>, vector<16x32xbf16>, vector<128x32xf32> -> vector<128x32xf32>
    %87 = arith.addf %80, %86 : vector<128x32xf32>
    %c0_71 = arith.constant 0 : index
    %c0_72 = arith.constant 0 : index
    %c2_73 = arith.constant 2 : index
    %c0_74 = arith.constant 0 : index
    %88 = vector.load %arg12[%c0_71, %c0_72, %c2_73, %c0_74] : memref<2x10x10x16xf32, #tpu.memory_space<vmem>>, vector<2x8x8x16xf32>
    %89 = vector.shape_cast %88 : vector<2x8x8x16xf32> to vector<128x16xf32>
    %90 = arith.truncf %89 : vector<128x16xf32> to vector<128x16xbf16>
    %c2_75 = arith.constant 2 : index
    %c0_76 = arith.constant 0 : index
    %c0_77 = arith.constant 0 : index
    %91 = vector.load %arg4[%c2_75, %c0_76, %c0_77] : memref<9x16x32xbf16, #tpu.memory_space<vmem>>, vector<1x16x32xbf16>
    %92 = vector.shape_cast %91 : vector<1x16x32xbf16> to vector<16x32xbf16>
    %cst_78 = arith.constant dense<0.000000e+00> : vector<128x32xf32>
    %93 = tpu.matmul %90, %92, %cst_78 {dimension_numbers = #tpu.dot_dimension_numbers<[1], [0], [0], [1], [0, 0, 1, 1], [], []>} : vector<128x16xbf16>, vector<16x32xbf16>, vector<128x32xf32> -> vector<128x32xf32>
    %94 = arith.addf %87, %93 : vector<128x32xf32>
    %c0_79 = arith.constant 0 : index
    %c1_80 = arith.constant 1 : index
    %c0_81 = arith.constant 0 : index
    %c0_82 = arith.constant 0 : index
    %95 = vector.load %arg12[%c0_79, %c1_80, %c0_81, %c0_82] : memref<2x10x10x16xf32, #tpu.memory_space<vmem>>, vector<2x8x8x16xf32>
    %96 = vector.shape_cast %95 : vector<2x8x8x16xf32> to vector<128x16xf32>
    %97 = arith.truncf %96 : vector<128x16xf32> to vector<128x16xbf16>
    %c3 = arith.constant 3 : index
    %c0_83 = arith.constant 0 : index
    %c0_84 = arith.constant 0 : index
    %98 = vector.load %arg4[%c3, %c0_83, %c0_84] : memref<9x16x32xbf16, #tpu.memory_space<vmem>>, vector<1x16x32xbf16>
    %99 = vector.shape_cast %98 : vector<1x16x32xbf16> to vector<16x32xbf16>
    %cst_85 = arith.constant dense<0.000000e+00> : vector<128x32xf32>
    %100 = tpu.matmul %97, %99, %cst_85 {dimension_numbers = #tpu.dot_dimension_numbers<[1], [0], [0], [1], [0, 0, 1, 1], [], []>} : vector<128x16xbf16>, vector<16x32xbf16>, vector<128x32xf32> -> vector<128x32xf32>
    %101 = arith.addf %94, %100 : vector<128x32xf32>
    %c0_86 = arith.constant 0 : index
    %c1_87 = arith.constant 1 : index
    %c1_88 = arith.constant 1 : index
    %c0_89 = arith.constant 0 : index
    %102 = vector.load %arg12[%c0_86, %c1_87, %c1_88, %c0_89] : memref<2x10x10x16xf32, #tpu.memory_space<vmem>>, vector<2x8x8x16xf32>
    %103 = vector.shape_cast %102 : vector<2x8x8x16xf32> to vector<128x16xf32>
    %104 = arith.truncf %103 : vector<128x16xf32> to vector<128x16xbf16>
    %c4 = arith.constant 4 : index
    %c0_90 = arith.constant 0 : index
    %c0_91 = arith.constant 0 : index
    %105 = vector.load %arg4[%c4, %c0_90, %c0_91] : memref<9x16x32xbf16, #tpu.memory_space<vmem>>, vector<1x16x32xbf16>
    %106 = vector.shape_cast %105 : vector<1x16x32xbf16> to vector<16x32xbf16>
    %cst_92 = arith.constant dense<0.000000e+00> : vector<128x32xf32>
    %107 = tpu.matmul %104, %106, %cst_92 {dimension_numbers = #tpu.dot_dimension_numbers<[1], [0], [0], [1], [0, 0, 1, 1], [], []>} : vector<128x16xbf16>, vector<16x32xbf16>, vector<128x32xf32> -> vector<128x32xf32>
    %108 = arith.addf %101, %107 : vector<128x32xf32>
    %c0_93 = arith.constant 0 : index
    %c1_94 = arith.constant 1 : index
    %c2_95 = arith.constant 2 : index
    %c0_96 = arith.constant 0 : index
    %109 = vector.load %arg12[%c0_93, %c1_94, %c2_95, %c0_96] : memref<2x10x10x16xf32, #tpu.memory_space<vmem>>, vector<2x8x8x16xf32>
    %110 = vector.shape_cast %109 : vector<2x8x8x16xf32> to vector<128x16xf32>
    %111 = arith.truncf %110 : vector<128x16xf32> to vector<128x16xbf16>
    %c5 = arith.constant 5 : index
    %c0_97 = arith.constant 0 : index
    %c0_98 = arith.constant 0 : index
    %112 = vector.load %arg4[%c5, %c0_97, %c0_98] : memref<9x16x32xbf16, #tpu.memory_space<vmem>>, vector<1x16x32xbf16>
    %113 = vector.shape_cast %112 : vector<1x16x32xbf16> to vector<16x32xbf16>
    %cst_99 = arith.constant dense<0.000000e+00> : vector<128x32xf32>
    %114 = tpu.matmul %111, %113, %cst_99 {dimension_numbers = #tpu.dot_dimension_numbers<[1], [0], [0], [1], [0, 0, 1, 1], [], []>} : vector<128x16xbf16>, vector<16x32xbf16>, vector<128x32xf32> -> vector<128x32xf32>
    %115 = arith.addf %108, %114 : vector<128x32xf32>
    %c0_100 = arith.constant 0 : index
    %c2_101 = arith.constant 2 : index
    %c0_102 = arith.constant 0 : index
    %c0_103 = arith.constant 0 : index
    %116 = vector.load %arg12[%c0_100, %c2_101, %c0_102, %c0_103] : memref<2x10x10x16xf32, #tpu.memory_space<vmem>>, vector<2x8x8x16xf32>
    %117 = vector.shape_cast %116 : vector<2x8x8x16xf32> to vector<128x16xf32>
    %118 = arith.truncf %117 : vector<128x16xf32> to vector<128x16xbf16>
    %c6 = arith.constant 6 : index
    %c0_104 = arith.constant 0 : index
    %c0_105 = arith.constant 0 : index
    %119 = vector.load %arg4[%c6, %c0_104, %c0_105] : memref<9x16x32xbf16, #tpu.memory_space<vmem>>, vector<1x16x32xbf16>
    %120 = vector.shape_cast %119 : vector<1x16x32xbf16> to vector<16x32xbf16>
    %cst_106 = arith.constant dense<0.000000e+00> : vector<128x32xf32>
    %121 = tpu.matmul %118, %120, %cst_106 {dimension_numbers = #tpu.dot_dimension_numbers<[1], [0], [0], [1], [0, 0, 1, 1], [], []>} : vector<128x16xbf16>, vector<16x32xbf16>, vector<128x32xf32> -> vector<128x32xf32>
    %122 = arith.addf %115, %121 : vector<128x32xf32>
    %c0_107 = arith.constant 0 : index
    %c2_108 = arith.constant 2 : index
    %c1_109 = arith.constant 1 : index
    %c0_110 = arith.constant 0 : index
    %123 = vector.load %arg12[%c0_107, %c2_108, %c1_109, %c0_110] : memref<2x10x10x16xf32, #tpu.memory_space<vmem>>, vector<2x8x8x16xf32>
    %124 = vector.shape_cast %123 : vector<2x8x8x16xf32> to vector<128x16xf32>
    %125 = arith.truncf %124 : vector<128x16xf32> to vector<128x16xbf16>
    %c7 = arith.constant 7 : index
    %c0_111 = arith.constant 0 : index
    %c0_112 = arith.constant 0 : index
    %126 = vector.load %arg4[%c7, %c0_111, %c0_112] : memref<9x16x32xbf16, #tpu.memory_space<vmem>>, vector<1x16x32xbf16>
    %127 = vector.shape_cast %126 : vector<1x16x32xbf16> to vector<16x32xbf16>
    %cst_113 = arith.constant dense<0.000000e+00> : vector<128x32xf32>
    %128 = tpu.matmul %125, %127, %cst_113 {dimension_numbers = #tpu.dot_dimension_numbers<[1], [0], [0], [1], [0, 0, 1, 1], [], []>} : vector<128x16xbf16>, vector<16x32xbf16>, vector<128x32xf32> -> vector<128x32xf32>
    %129 = arith.addf %122, %128 : vector<128x32xf32>
    %c0_114 = arith.constant 0 : index
    %c2_115 = arith.constant 2 : index
    %c2_116 = arith.constant 2 : index
    %c0_117 = arith.constant 0 : index
    %130 = vector.load %arg12[%c0_114, %c2_115, %c2_116, %c0_117] : memref<2x10x10x16xf32, #tpu.memory_space<vmem>>, vector<2x8x8x16xf32>
    %131 = vector.shape_cast %130 : vector<2x8x8x16xf32> to vector<128x16xf32>
    %132 = arith.truncf %131 : vector<128x16xf32> to vector<128x16xbf16>
    %c8 = arith.constant 8 : index
    %c0_118 = arith.constant 0 : index
    %c0_119 = arith.constant 0 : index
    %133 = vector.load %arg4[%c8, %c0_118, %c0_119] : memref<9x16x32xbf16, #tpu.memory_space<vmem>>, vector<1x16x32xbf16>
    %134 = vector.shape_cast %133 : vector<1x16x32xbf16> to vector<16x32xbf16>
    %cst_120 = arith.constant dense<0.000000e+00> : vector<128x32xf32>
    %135 = tpu.matmul %132, %134, %cst_120 {dimension_numbers = #tpu.dot_dimension_numbers<[1], [0], [0], [1], [0, 0, 1, 1], [], []>} : vector<128x16xbf16>, vector<16x32xbf16>, vector<128x32xf32> -> vector<128x32xf32>
    %136 = arith.addf %129, %135 : vector<128x32xf32>
    %137 = vector.shape_cast %136 : vector<128x32xf32> to vector<64x2x32xf32>
    %138 = vector.extract_strided_slice %137 {offsets = [0, 0, 0], sizes = [64, 1, 32], strides = [1, 1, 1]} : vector<64x2x32xf32> to vector<64x1x32xf32>
    %139 = vector.extract_strided_slice %137 {offsets = [0, 1, 0], sizes = [64, 1, 32], strides = [1, 1, 1]} : vector<64x2x32xf32> to vector<64x1x32xf32>
    %140 = arith.maximumf %138, %139 : vector<64x1x32xf32>
    %141 = vector.shape_cast %140 : vector<64x1x32xf32> to vector<64x32xf32>
    %c0_121 = arith.constant 0 : index
    %c0_122 = arith.constant 0 : index
    %142 = vector.load %arg5[%c0_121, %c0_122] : memref<1x32xf32, #tpu.memory_space<vmem>>, vector<1x32xf32>
    %143 = vector.broadcast %142 : vector<1x32xf32> to vector<64x32xf32>
    %144 = arith.addf %141, %143 : vector<64x32xf32>
    %cst_123 = arith.constant 0.000000e+00 : f32
    %145 = vector.broadcast %cst_123 : f32 to vector<64x32xf32>
    %146 = arith.maximumf %144, %145 : vector<64x32xf32>
    %147 = vector.shape_cast %146 : vector<64x32xf32> to vector<8x8x32xf32>
    %148 = vector.extract_strided_slice %147 {offsets = [0, 0, 0], sizes = [8, 4, 32], strides = [1, 1, 1]} : vector<8x8x32xf32> to vector<8x4x32xf32>
    %149 = vector.extract_strided_slice %147 {offsets = [0, 4, 0], sizes = [8, 4, 32], strides = [1, 1, 1]} : vector<8x8x32xf32> to vector<8x4x32xf32>
    %150 = arith.maximumf %148, %149 : vector<8x4x32xf32>
    %151 = vector.shape_cast %150 : vector<8x4x32xf32> to vector<2x4x4x32xf32>
    %152 = vector.extract_strided_slice %151 {offsets = [0, 0, 0, 0], sizes = [2, 1, 1, 32], strides = [1, 1, 1, 1]} : vector<2x4x4x32xf32> to vector<2x1x1x32xf32>
    %153 = vector.shape_cast %152 : vector<2x1x1x32xf32> to vector<2x32xf32>
    %c0_124 = arith.constant 0 : index
    %c0_125 = arith.constant 0 : index
    %154 = vector.load %arg13[%c0_124, %c0_125] : memref<2x512xf32, #tpu.memory_space<vmem>>, vector<2x32xf32>
    tpu.vector_store %arg13[%c0_124, %c0_125], %153 {strides = array<i32>} : memref<2x512xf32, #tpu.memory_space<vmem>>, vector<2x32xf32>,
    %155 = vector.extract_strided_slice %151 {offsets = [0, 0, 1, 0], sizes = [2, 1, 1, 32], strides = [1, 1, 1, 1]} : vector<2x4x4x32xf32> to vector<2x1x1x32xf32>
    %156 = vector.shape_cast %155 : vector<2x1x1x32xf32> to vector<2x32xf32>
    %c0_126 = arith.constant 0 : index
    %c32 = arith.constant 32 : index
    %157 = vector.load %arg13[%c0_126, %c32] : memref<2x512xf32, #tpu.memory_space<vmem>>, vector<2x32xf32>
    tpu.vector_store %arg13[%c0_126, %c32], %156 {strides = array<i32>} : memref<2x512xf32, #tpu.memory_space<vmem>>, vector<2x32xf32>,
    %158 = vector.extract_strided_slice %151 {offsets = [0, 0, 2, 0], sizes = [2, 1, 1, 32], strides = [1, 1, 1, 1]} : vector<2x4x4x32xf32> to vector<2x1x1x32xf32>
    %159 = vector.shape_cast %158 : vector<2x1x1x32xf32> to vector<2x32xf32>
    %c0_127 = arith.constant 0 : index
    %c64 = arith.constant 64 : index
    %160 = vector.load %arg13[%c0_127, %c64] : memref<2x512xf32, #tpu.memory_space<vmem>>, vector<2x32xf32>
    tpu.vector_store %arg13[%c0_127, %c64], %159 {strides = array<i32>} : memref<2x512xf32, #tpu.memory_space<vmem>>, vector<2x32xf32>,
    %161 = vector.extract_strided_slice %151 {offsets = [0, 0, 3, 0], sizes = [2, 1, 1, 32], strides = [1, 1, 1, 1]} : vector<2x4x4x32xf32> to vector<2x1x1x32xf32>
    %162 = vector.shape_cast %161 : vector<2x1x1x32xf32> to vector<2x32xf32>
    %c0_128 = arith.constant 0 : index
    %c96 = arith.constant 96 : index
    %163 = vector.load %arg13[%c0_128, %c96] : memref<2x512xf32, #tpu.memory_space<vmem>>, vector<2x32xf32>
    tpu.vector_store %arg13[%c0_128, %c96], %162 {strides = array<i32>} : memref<2x512xf32, #tpu.memory_space<vmem>>, vector<2x32xf32>,
    %164 = vector.extract_strided_slice %151 {offsets = [0, 1, 0, 0], sizes = [2, 1, 1, 32], strides = [1, 1, 1, 1]} : vector<2x4x4x32xf32> to vector<2x1x1x32xf32>
    %165 = vector.shape_cast %164 : vector<2x1x1x32xf32> to vector<2x32xf32>
    %c0_129 = arith.constant 0 : index
    %c128 = arith.constant 128 : index
    %166 = vector.load %arg13[%c0_129, %c128] : memref<2x512xf32, #tpu.memory_space<vmem>>, vector<2x32xf32>
    tpu.vector_store %arg13[%c0_129, %c128], %165 {strides = array<i32>} : memref<2x512xf32, #tpu.memory_space<vmem>>, vector<2x32xf32>,
    %167 = vector.extract_strided_slice %151 {offsets = [0, 1, 1, 0], sizes = [2, 1, 1, 32], strides = [1, 1, 1, 1]} : vector<2x4x4x32xf32> to vector<2x1x1x32xf32>
    %168 = vector.shape_cast %167 : vector<2x1x1x32xf32> to vector<2x32xf32>
    %c0_130 = arith.constant 0 : index
    %c160 = arith.constant 160 : index
    %169 = vector.load %arg13[%c0_130, %c160] : memref<2x512xf32, #tpu.memory_space<vmem>>, vector<2x32xf32>
    tpu.vector_store %arg13[%c0_130, %c160], %168 {strides = array<i32>} : memref<2x512xf32, #tpu.memory_space<vmem>>, vector<2x32xf32>,
    %170 = vector.extract_strided_slice %151 {offsets = [0, 1, 2, 0], sizes = [2, 1, 1, 32], strides = [1, 1, 1, 1]} : vector<2x4x4x32xf32> to vector<2x1x1x32xf32>
    %171 = vector.shape_cast %170 : vector<2x1x1x32xf32> to vector<2x32xf32>
    %c0_131 = arith.constant 0 : index
    %c192 = arith.constant 192 : index
    %172 = vector.load %arg13[%c0_131, %c192] : memref<2x512xf32, #tpu.memory_space<vmem>>, vector<2x32xf32>
    tpu.vector_store %arg13[%c0_131, %c192], %171 {strides = array<i32>} : memref<2x512xf32, #tpu.memory_space<vmem>>, vector<2x32xf32>,
    %173 = vector.extract_strided_slice %151 {offsets = [0, 1, 3, 0], sizes = [2, 1, 1, 32], strides = [1, 1, 1, 1]} : vector<2x4x4x32xf32> to vector<2x1x1x32xf32>
    %174 = vector.shape_cast %173 : vector<2x1x1x32xf32> to vector<2x32xf32>
    %c0_132 = arith.constant 0 : index
    %c224 = arith.constant 224 : index
    %175 = vector.load %arg13[%c0_132, %c224] : memref<2x512xf32, #tpu.memory_space<vmem>>, vector<2x32xf32>
    tpu.vector_store %arg13[%c0_132, %c224], %174 {strides = array<i32>} : memref<2x512xf32, #tpu.memory_space<vmem>>, vector<2x32xf32>,
    %176 = vector.extract_strided_slice %151 {offsets = [0, 2, 0, 0], sizes = [2, 1, 1, 32], strides = [1, 1, 1, 1]} : vector<2x4x4x32xf32> to vector<2x1x1x32xf32>
    %177 = vector.shape_cast %176 : vector<2x1x1x32xf32> to vector<2x32xf32>
    %c0_133 = arith.constant 0 : index
    %c256 = arith.constant 256 : index
    %178 = vector.load %arg13[%c0_133, %c256] : memref<2x512xf32, #tpu.memory_space<vmem>>, vector<2x32xf32>
    tpu.vector_store %arg13[%c0_133, %c256], %177 {strides = array<i32>} : memref<2x512xf32, #tpu.memory_space<vmem>>, vector<2x32xf32>,
    %179 = vector.extract_strided_slice %151 {offsets = [0, 2, 1, 0], sizes = [2, 1, 1, 32], strides = [1, 1, 1, 1]} : vector<2x4x4x32xf32> to vector<2x1x1x32xf32>
    %180 = vector.shape_cast %179 : vector<2x1x1x32xf32> to vector<2x32xf32>
    %c0_134 = arith.constant 0 : index
    %c288 = arith.constant 288 : index
    %181 = vector.load %arg13[%c0_134, %c288] : memref<2x512xf32, #tpu.memory_space<vmem>>, vector<2x32xf32>
    tpu.vector_store %arg13[%c0_134, %c288], %180 {strides = array<i32>} : memref<2x512xf32, #tpu.memory_space<vmem>>, vector<2x32xf32>,
    %182 = vector.extract_strided_slice %151 {offsets = [0, 2, 2, 0], sizes = [2, 1, 1, 32], strides = [1, 1, 1, 1]} : vector<2x4x4x32xf32> to vector<2x1x1x32xf32>
    %183 = vector.shape_cast %182 : vector<2x1x1x32xf32> to vector<2x32xf32>
    %c0_135 = arith.constant 0 : index
    %c320 = arith.constant 320 : index
    %184 = vector.load %arg13[%c0_135, %c320] : memref<2x512xf32, #tpu.memory_space<vmem>>, vector<2x32xf32>
    tpu.vector_store %arg13[%c0_135, %c320], %183 {strides = array<i32>} : memref<2x512xf32, #tpu.memory_space<vmem>>, vector<2x32xf32>,
    %185 = vector.extract_strided_slice %151 {offsets = [0, 2, 3, 0], sizes = [2, 1, 1, 32], strides = [1, 1, 1, 1]} : vector<2x4x4x32xf32> to vector<2x1x1x32xf32>
    %186 = vector.shape_cast %185 : vector<2x1x1x32xf32> to vector<2x32xf32>
    %c0_136 = arith.constant 0 : index
    %c352 = arith.constant 352 : index
    %187 = vector.load %arg13[%c0_136, %c352] : memref<2x512xf32, #tpu.memory_space<vmem>>, vector<2x32xf32>
    tpu.vector_store %arg13[%c0_136, %c352], %186 {strides = array<i32>} : memref<2x512xf32, #tpu.memory_space<vmem>>, vector<2x32xf32>,
    %188 = vector.extract_strided_slice %151 {offsets = [0, 3, 0, 0], sizes = [2, 1, 1, 32], strides = [1, 1, 1, 1]} : vector<2x4x4x32xf32> to vector<2x1x1x32xf32>
    %189 = vector.shape_cast %188 : vector<2x1x1x32xf32> to vector<2x32xf32>
    %c0_137 = arith.constant 0 : index
    %c384 = arith.constant 384 : index
    %190 = vector.load %arg13[%c0_137, %c384] : memref<2x512xf32, #tpu.memory_space<vmem>>, vector<2x32xf32>
    tpu.vector_store %arg13[%c0_137, %c384], %189 {strides = array<i32>} : memref<2x512xf32, #tpu.memory_space<vmem>>, vector<2x32xf32>,
    %191 = vector.extract_strided_slice %151 {offsets = [0, 3, 1, 0], sizes = [2, 1, 1, 32], strides = [1, 1, 1, 1]} : vector<2x4x4x32xf32> to vector<2x1x1x32xf32>
    %192 = vector.shape_cast %191 : vector<2x1x1x32xf32> to vector<2x32xf32>
    %c0_138 = arith.constant 0 : index
    %c416 = arith.constant 416 : index
    %193 = vector.load %arg13[%c0_138, %c416] : memref<2x512xf32, #tpu.memory_space<vmem>>, vector<2x32xf32>
    tpu.vector_store %arg13[%c0_138, %c416], %192 {strides = array<i32>} : memref<2x512xf32, #tpu.memory_space<vmem>>, vector<2x32xf32>,
    %194 = vector.extract_strided_slice %151 {offsets = [0, 3, 2, 0], sizes = [2, 1, 1, 32], strides = [1, 1, 1, 1]} : vector<2x4x4x32xf32> to vector<2x1x1x32xf32>
    %195 = vector.shape_cast %194 : vector<2x1x1x32xf32> to vector<2x32xf32>
    %c0_139 = arith.constant 0 : index
    %c448 = arith.constant 448 : index
    %196 = vector.load %arg13[%c0_139, %c448] : memref<2x512xf32, #tpu.memory_space<vmem>>, vector<2x32xf32>
    tpu.vector_store %arg13[%c0_139, %c448], %195 {strides = array<i32>} : memref<2x512xf32, #tpu.memory_space<vmem>>, vector<2x32xf32>,
    %197 = vector.extract_strided_slice %151 {offsets = [0, 3, 3, 0], sizes = [2, 1, 1, 32], strides = [1, 1, 1, 1]} : vector<2x4x4x32xf32> to vector<2x1x1x32xf32>
    %198 = vector.shape_cast %197 : vector<2x1x1x32xf32> to vector<2x32xf32>
    %c0_140 = arith.constant 0 : index
    %c480 = arith.constant 480 : index
    %199 = vector.load %arg13[%c0_140, %c480] : memref<2x512xf32, #tpu.memory_space<vmem>>, vector<2x32xf32>
    tpu.vector_store %arg13[%c0_140, %c480], %198 {strides = array<i32>} : memref<2x512xf32, #tpu.memory_space<vmem>>, vector<2x32xf32>,
    %c0_141 = arith.constant 0 : index
    %c0_142 = arith.constant 0 : index
    %200 = vector.load %arg13[%c0_141, %c0_142] : memref<2x512xf32, #tpu.memory_space<vmem>>, vector<2x512xf32>
    %201 = arith.truncf %200 : vector<2x512xf32> to vector<2x512xbf16>
    %c0_143 = arith.constant 0 : index
    %c0_144 = arith.constant 0 : index
    %202 = vector.load %arg6[%c0_143, %c0_144] : memref<512x128xbf16, #tpu.memory_space<vmem>>, vector<512x128xbf16>
    %cst_145 = arith.constant dense<0.000000e+00> : vector<2x128xf32>
    %203 = tpu.matmul %201, %202, %cst_145 {dimension_numbers = #tpu.dot_dimension_numbers<[1], [0], [0], [1], [0, 0, 1, 1], [], []>} : vector<2x512xbf16>, vector<512x128xbf16>, vector<2x128xf32> -> vector<2x128xf32>
    %c0_146 = arith.constant 0 : index
    %c0_147 = arith.constant 0 : index
    %204 = vector.load %arg7[%c0_146, %c0_147] : memref<1x128xf32, #tpu.memory_space<vmem>>, vector<1x128xf32>
    %205 = vector.broadcast %204 : vector<1x128xf32> to vector<2x128xf32>
    %206 = arith.addf %203, %205 : vector<2x128xf32>
    %cst_148 = arith.constant 0.000000e+00 : f32
    %207 = vector.broadcast %cst_148 : f32 to vector<2x128xf32>
    %208 = arith.maximumf %206, %207 : vector<2x128xf32>
    %209 = arith.truncf %208 : vector<2x128xf32> to vector<2x128xbf16>
    %c0_149 = arith.constant 0 : index
    %c0_150 = arith.constant 0 : index
    %210 = vector.load %arg8[%c0_149, %c0_150] : memref<128x128xbf16, #tpu.memory_space<vmem>>, vector<128x128xbf16>
    %cst_151 = arith.constant dense<0.000000e+00> : vector<2x128xf32>
    %211 = tpu.matmul %209, %210, %cst_151 {dimension_numbers = #tpu.dot_dimension_numbers<[1], [0], [0], [1], [0, 0, 1, 1], [], []>} : vector<2x128xbf16>, vector<128x128xbf16>, vector<2x128xf32> -> vector<2x128xf32>
    %c0_152 = arith.constant 0 : index
    %c0_153 = arith.constant 0 : index
    %212 = vector.load %arg9[%c0_152, %c0_153] : memref<1x128xf32, #tpu.memory_space<vmem>>, vector<1x128xf32>
    %213 = vector.broadcast %212 : vector<1x128xf32> to vector<2x128xf32>
    %214 = arith.addf %211, %213 : vector<2x128xf32>
    %c0_154 = arith.constant 0 : index
    %c0_155 = arith.constant 0 : index
    %215 = vector.load %arg10[%c0_154, %c0_155] : memref<2x128xf32, #tpu.memory_space<vmem>>, vector<2x128xf32>
    tpu.vector_store %arg10[%c0_154, %c0_155], %214 {strides = array<i32>} : memref<2x128xf32, #tpu.memory_space<vmem>>, vector<2x128xf32>,
    return
  }
  func.func @transform_0(%arg0: i32) -> (i32, i32, i32, i32) {
    %c0_i32 = arith.constant 0 : i32
    %c0_i32_0 = arith.constant 0 : i32
    %c0_i32_1 = arith.constant 0 : i32
    %c0_i32_2 = arith.constant 0 : i32
    %c0_i32_3 = arith.constant 0 : i32
    return %c0_i32, %c0_i32_0, %c0_i32_1, %c0_i32_2 : i32, i32, i32, i32
  }
  func.func @transform_1(%arg0: i32) -> (i32, i32) {
    %c0_i32 = arith.constant 0 : i32
    %c0_i32_0 = arith.constant 0 : i32
    %c0_i32_1 = arith.constant 0 : i32
    return %c0_i32, %c0_i32_0 : i32, i32
  }
  func.func @transform_2(%arg0: i32) -> (i32, i32) {
    %c0_i32 = arith.constant 0 : i32
    %c0_i32_0 = arith.constant 0 : i32
    %c0_i32_1 = arith.constant 0 : i32
    return %c0_i32, %c0_i32_0 : i32, i32
  }
  func.func @transform_3(%arg0: i32) -> (i32, i32, i32) {
    %c0_i32 = arith.constant 0 : i32
    %c0_i32_0 = arith.constant 0 : i32
    %c0_i32_1 = arith.constant 0 : i32
    %c0_i32_2 = arith.constant 0 : i32
    return %c0_i32, %c0_i32_0, %c0_i32_1 : i32, i32, i32
  }
  func.func @transform_4(%arg0: i32) -> (i32, i32) {
    %c0_i32 = arith.constant 0 : i32
    %c0_i32_0 = arith.constant 0 : i32
    %c0_i32_1 = arith.constant 0 : i32
    return %c0_i32, %c0_i32_0 : i32, i32
  }
  func.func @transform_5(%arg0: i32) -> (i32, i32) {
    %c0_i32 = arith.constant 0 : i32
    %c0_i32_0 = arith.constant 0 : i32
    %c0_i32_1 = arith.constant 0 : i32
    return %c0_i32, %c0_i32_0 : i32, i32
  }
  func.func @transform_6(%arg0: i32) -> (i32, i32) {
    %c0_i32 = arith.constant 0 : i32
    %c0_i32_0 = arith.constant 0 : i32
    %c0_i32_1 = arith.constant 0 : i32
    return %c0_i32, %c0_i32_0 : i32, i32
  }
  func.func @transform_7(%arg0: i32) -> (i32, i32) {
    %c0_i32 = arith.constant 0 : i32
    %c0_i32_0 = arith.constant 0 : i32
    %c0_i32_1 = arith.constant 0 : i32
    return %c0_i32, %c0_i32_0 : i32, i32
  }
  func.func @transform_8(%arg0: i32) -> (i32, i32) {
    %c0_i32 = arith.constant 0 : i32
    %c0_i32_0 = arith.constant 0 : i32
    %c0_i32_1 = arith.constant 0 : i32
    return %c0_i32, %c0_i32_0 : i32, i32
  }
  func.func @transform_9(%arg0: i32) -> (i32, i32) {
    %c0_i32 = arith.constant 0 : i32
    %c0_i32_0 = arith.constant 0 : i32
    %c0_i32_1 = arith.constant 0 : i32
    return %c0_i32, %c0_i32_0 : i32, i32
  }
}

</mosaic_0001>

<llo_original>
// kernel: deepvol_forward.1
$region0: #{deepvol_forward.1}
  #allocation0 [shape = 'u32[]', space=smem, size = 0x4, offset = 0x4, fixed_abs, tag = 'smem constant byte address 0x4 - core index']
  #allocation1 [shape = 'u32[144,128]{1,0:T(1,128)}', space=vmem, size = 0x12000, scoped, tag = 'internal scratch']
  #allocation2 [shape = 'f32[2,8,18,2]{3,2,1,0:T(8,128)}', space=vmem, size = 0x30000, scoped, tag = 'scratch operand']
  #allocation3 [shape = 'f32[2,10,10,16]{3,2,1,0:T(8,128)}', space=vmem, size = 0x28000, scoped, tag = 'scratch operand']
  #allocation4 [shape = 'f32[2,512]{1,0:T(2,128)}', space=vmem, size = 0x1000, scoped, tag = 'scratch operand']
  %s0 = inlined_call_operand.vmem [shape: f32[2,8,16,2], index: 0, kind: input, shape index: {}]
  %s1 = inlined_call_operand.vmem [shape: f32[6,16], index: 1, kind: input, shape index: {}]
  %s2 = inlined_call_operand.vmem [shape: f32[1,16], index: 2, kind: input, shape index: {}]
  %s3 = inlined_call_operand.vmem [shape: bf16[9,16,32], index: 3, kind: input, shape index: {}]
  %s4 = inlined_call_operand.vmem [shape: f32[1,32], index: 4, kind: input, shape index: {}]
  %s5 = inlined_call_operand.vmem [shape: bf16[512,128], index: 5, kind: input, shape index: {}]
  %s6 = inlined_call_operand.vmem [shape: f32[1,128], index: 6, kind: input, shape index: {}]
  %s7 = inlined_call_operand.vmem [shape: bf16[128,128], index: 7, kind: input, shape index: {}]
  %s8 = inlined_call_operand.vmem [shape: f32[1,128], index: 8, kind: input, shape index: {}]
  %s9 = inlined_call_operand.hbm [shape: f32[2,128], index: 9, kind: output, shape index: {}]
  %s10 = sld [smem:[#allocation0]]
  $region46: #{deepvol_forward.1} parent=0
    _
  %s12 = ssub.s32 1, %s10
  %s13 = scalar_select 0, %s12, %s10
  $region1: #{deepvol_forward.1} parent=0
    #allocation5 [shape = 'u8[1024]{0}', space=vmem, size = 0x400, scoped, tag = 'output window, operand 0, single buffered']
    #allocation6 [shape = 's32[1]{0}', space=sflag, size = 0x4, scoped, tag = 'scoped memory for deepvol_forward.1']
    %14 = vsyncpa [#allocation6], 0
    // Predicated region
    $region2: #{deepvol_forward.1} parent=1 // pred_check
      _
    $region3: #{deepvol_forward.1} parent=1 // pred_check_branch
      %16 = sbr.rel (0) target = $region5
    $region4: #{deepvol_forward.1} parent=1 // pred_region
      _
    $region5: #{deepvol_forward.1} parent=1 // pred_fallthru
      _
    // Predicated region
    $region6: #{deepvol_forward.1} parent=1 // pred_check
      _
    $region7: #{deepvol_forward.1} parent=1 // pred_check_branch
      %18 = sbr.rel (0) target = $region9
    $region8: #{deepvol_forward.1} parent=1 // pred_region
      _
    $region9: #{deepvol_forward.1} parent=1 // pred_fallthru
      _
    // Predicated region
    $region10: #{deepvol_forward.1} parent=1 // pred_check
      _
    $region11: #{deepvol_forward.1} parent=1 // pred_check_branch
      %20 = sbr.rel (0) target = $region13
    $region12: #{deepvol_forward.1} parent=1 // pred_region
      _
    $region13: #{deepvol_forward.1} parent=1 // pred_fallthru
      _
    // Predicated region
    $region14: #{deepvol_forward.1} parent=1 // pred_check
      _
    $region15: #{deepvol_forward.1} parent=1 // pred_check_branch
      %22 = sbr.rel (0) target = $region17
    $region16: #{deepvol_forward.1} parent=1 // pred_region
      _
    $region17: #{deepvol_forward.1} parent=1 // pred_fallthru
      _
    // Predicated region
    $region18: #{deepvol_forward.1} parent=1 // pred_check
      _
    $region19: #{deepvol_forward.1} parent=1 // pred_check_branch
      %24 = sbr.rel (0) target = $region21
    $region20: #{deepvol_forward.1} parent=1 // pred_region
      _
    $region21: #{deepvol_forward.1} parent=1 // pred_fallthru
      _
    // Predicated region
    $region22: #{deepvol_forward.1} parent=1 // pred_check
      _
    $region23: #{deepvol_forward.1} parent=1 // pred_check_branch
      %26 = sbr.rel (0) target = $region25
    $region24: #{deepvol_forward.1} parent=1 // pred_region
      _
    $region25: #{deepvol_forward.1} parent=1 // pred_fallthru
      _
    // Predicated region
    $region26: #{deepvol_forward.1} parent=1 // pred_check
      _
    $region27: #{deepvol_forward.1} parent=1 // pred_check_branch
      %28 = sbr.rel (0) target = $region29
    $region28: #{deepvol_forward.1} parent=1 // pred_region
      _
    $region29: #{deepvol_forward.1} parent=1 // pred_fallthru
      _
    // Predicated region
    $region30: #{deepvol_forward.1} parent=1 // pred_check
      _
    $region31: #{deepvol_forward.1} parent=1 // pred_check_branch
      %30 = sbr.rel (0) target = $region33
    $region32: #{deepvol_forward.1} parent=1 // pred_region
      _
    $region33: #{deepvol_forward.1} parent=1 // pred_fallthru
      _
    // Predicated region
    $region34: #{deepvol_forward.1} parent=1 // pred_check
      _
    $region35: #{deepvol_forward.1} parent=1 // pred_check_branch
      %32 = sbr.rel (0) target = $region37
    $region36: #{deepvol_forward.1} parent=1 // pred_region
      _
    $region37: #{deepvol_forward.1} parent=1 // pred_fallthru
      _
    %vm34 = vcmask 8192
    %35 = vst.msk [vmem:[#allocation2] sm:$0x1] %vm34, 0.0
    %36 = vst.msk [vmem:[#allocation2 + $0x18] sm:$0x1] %vm34, 0.0
    %37 = vst.msk [vmem:[#allocation2 + $0x30] sm:$0x1] %vm34, 0.0
    %38 = vst.msk [vmem:[#allocation2 + $0x48] sm:$0x1] %vm34, 0.0
    %39 = vst.msk [vmem:[#allocation2 + $0x60] sm:$0x1] %vm34, 0.0
    %40 = vst.msk [vmem:[#allocation2 + $0x78] sm:$0x1] %vm34, 0.0
    %41 = vst.msk [vmem:[#allocation2 + $0x90] sm:$0x1] %vm34, 0.0
    %42 = vst.msk [vmem:[#allocation2 + $0xa8] sm:$0x1] %vm34, 0.0
    %43 = vst.msk [vmem:[#allocation2 + $0xc0] sm:$0x1] %vm34, 0.0
    %44 = vst.msk [vmem:[#allocation2 + $0xd8] sm:$0x1] %vm34, 0.0
    %45 = vst.msk [vmem:[#allocation2 + $0xf0] sm:$0x1] %vm34, 0.0
    %46 = vst.msk [vmem:[#allocation2 + $0x108] sm:$0x1] %vm34, 0.0
    %47 = vst.msk [vmem:[#allocation2 + $0x120] sm:$0x1] %vm34, 0.0
    %48 = vst.msk [vmem:[#allocation2 + $0x138] sm:$0x1] %vm34, 0.0
    %49 = vst.msk [vmem:[#allocation2 + $0x150] sm:$0x1] %vm34, 0.0
    %50 = vst.msk [vmem:[#allocation2 + $0x168] sm:$0x1] %vm34, 0.0
    %51 = vst.msk [vmem:[#allocation2 + $0x11] sm:$0x1] %vm34, 0.0
    %52 = vst.msk [vmem:[#allocation2 + $0x29] sm:$0x1] %vm34, 0.0
    %53 = vst.msk [vmem:[#allocation2 + $0x41] sm:$0x1] %vm34, 0.0
    %54 = vst.msk [vmem:[#allocation2 + $0x59] sm:$0x1] %vm34, 0.0
    %55 = vst.msk [vmem:[#allocation2 + $0x71] sm:$0x1] %vm34, 0.0
    %56 = vst.msk [vmem:[#allocation2 + $0x89] sm:$0x1] %vm34, 0.0
    %57 = vst.msk [vmem:[#allocation2 + $0xa1] sm:$0x1] %vm34, 0.0
    %58 = vst.msk [vmem:[#allocation2 + $0xb9] sm:$0x1] %vm34, 0.0
    %59 = vst.msk [vmem:[#allocation2 + $0xd1] sm:$0x1] %vm34, 0.0
    %60 = vst.msk [vmem:[#allocation2 + $0xe9] sm:$0x1] %vm34, 0.0
    %61 = vst.msk [vmem:[#allocation2 + $0x101] sm:$0x1] %vm34, 0.0
    %62 = vst.msk [vmem:[#allocation2 + $0x119] sm:$0x1] %vm34, 0.0
    %63 = vst.msk [vmem:[#allocation2 + $0x131] sm:$0x1] %vm34, 0.0
    %64 = vst.msk [vmem:[#allocation2 + $0x149] sm:$0x1] %vm34, 0.0
    %65 = vst.msk [vmem:[#allocation2 + $0x161] sm:$0x1] %vm34, 0.0
    %66 = vst.msk [vmem:[#allocation2 + $0x179] sm:$0x1] %vm34, 0.0
    %v67 = vld [vmem:[%s0] sm:$0xff]
    %v68 = vld [vmem:[%s0 + $0x8] sm:$0xff]
    %v69 = vld [vmem:[%s0 + $0x10] sm:$0xff]
    %v70 = vld [vmem:[%s0 + $0x18] sm:$0xff]
    %v71 = vld [vmem:[%s0 + $0x20] sm:$0xff]
    %v72 = vld [vmem:[%s0 + $0x28] sm:$0xff]
    %v73 = vld [vmem:[%s0 + $0x30] sm:$0xff]
    %v74 = vld [vmem:[%s0 + $0x38] sm:$0xff]
    %v75 = vld [vmem:[%s0 + $0x40] sm:$0xff]
    %v76 = vld [vmem:[%s0 + $0x48] sm:$0xff]
    %v77 = vld [vmem:[%s0 + $0x50] sm:$0xff]
    %v78 = vld [vmem:[%s0 + $0x58] sm:$0xff]
    %v79 = vld [vmem:[%s0 + $0x60] sm:$0xff]
    %v80 = vld [vmem:[%s0 + $0x68] sm:$0xff]
    %v81 = vld [vmem:[%s0 + $0x70] sm:$0xff]
    %v82 = vld [vmem:[%s0 + $0x78] sm:$0xff]
    %v83 = vld [vmem:[%s0 + $0x80] sm:$0xff]
    %v84 = vld [vmem:[%s0 + $0x88] sm:$0xff]
    %v85 = vld [vmem:[%s0 + $0x90] sm:$0xff]
    %v86 = vld [vmem:[%s0 + $0x98] sm:$0xff]
    %v87 = vld [vmem:[%s0 + $0xa0] sm:$0xff]
    %v88 = vld [vmem:[%s0 + $0xa8] sm:$0xff]
    %v89 = vld [vmem:[%s0 + $0xb0] sm:$0xff]
    %v90 = vld [vmem:[%s0 + $0xb8] sm:$0xff]
    %v91 = vld [vmem:[%s0 + $0xc0] sm:$0xff]
    %v92 = vld [vmem:[%s0 + $0xc8] sm:$0xff]
    %v93 = vld [vmem:[%s0 + $0xd0] sm:$0xff]
    %v94 = vld [vmem:[%s0 + $0xd8] sm:$0xff]
    %v95 = vld [vmem:[%s0 + $0xe0] sm:$0xff]
    %v96 = vld [vmem:[%s0 + $0xe8] sm:$0xff]
    %v97 = vld [vmem:[%s0 + $0xf0] sm:$0xff]
    %v98 = vld [vmem:[%s0 + $0xf8] sm:$0xff]
    %vm99 = vcmask 15360
    %100 = vst.msk [vmem:[#allocation2 + $0x1] sm:$0xff] %vm99, %v67
    %101 = vst.msk [vmem:[#allocation2 + $0x9] sm:$0xff] %vm99, %v68
    %102 = vst.msk [vmem:[#allocation2 + $0x19] sm:$0xff] %vm99, %v69
    %103 = vst.msk [vmem:[#allocation2 + $0x21] sm:$0xff] %vm99, %v70
    %104 = vst.msk [vmem:[#allocation2 + $0x31] sm:$0xff] %vm99, %v71
    %105 = vst.msk [vmem:[#allocation2 + $0x39] sm:$0xff] %vm99, %v72
    %106 = vst.msk [vmem:[#allocation2 + $0x49] sm:$0xff] %vm99, %v73
    %107 = vst.msk [vmem:[#allocation2 + $0x51] sm:$0xff] %vm99, %v74
    %108 = vst.msk [vmem:[#allocation2 + $0x61] sm:$0xff] %vm99, %v75
    %109 = vst.msk [vmem:[#allocation2 + $0x69] sm:$0xff] %vm99, %v76
    %110 = vst.msk [vmem:[#allocation2 + $0x79] sm:$0xff] %vm99, %v77
    %111 = vst.msk [vmem:[#allocation2 + $0x81] sm:$0xff] %vm99, %v78
    %112 = vst.msk [vmem:[#allocation2 + $0x91] sm:$0xff] %vm99, %v79
    %113 = vst.msk [vmem:[#allocation2 + $0x99] sm:$0xff] %vm99, %v80
    %114 = vst.msk [vmem:[#allocation2 + $0xa9] sm:$0xff] %vm99, %v81
    %115 = vst.msk [vmem:[#allocation2 + $0xb1] sm:$0xff] %vm99, %v82
    %116 = vst.msk [vmem:[#allocation2 + $0xc1] sm:$0xff] %vm99, %v83
    %117 = vst.msk [vmem:[#allocation2 + $0xc9] sm:$0xff] %vm99, %v84
    %118 = vst.msk [vmem:[#allocation2 + $0xd9] sm:$0xff] %vm99, %v85
    %119 = vst.msk [vmem:[#allocation2 + $0xe1] sm:$0xff] %vm99, %v86
    %120 = vst.msk [vmem:[#allocation2 + $0xf1] sm:$0xff] %vm99, %v87
    %121 = vst.msk [vmem:[#allocation2 + $0xf9] sm:$0xff] %vm99, %v88
    %122 = vst.msk [vmem:[#allocation2 + $0x109] sm:$0xff] %vm99, %v89
    %123 = vst.msk [vmem:[#allocation2 + $0x111] sm:$0xff] %vm99, %v90
    %124 = vst.msk [vmem:[#allocation2 + $0x121] sm:$0xff] %vm99, %v91
    %125 = vst.msk [vmem:[#allocation2 + $0x129] sm:$0xff] %vm99, %v92
    %126 = vst.msk [vmem:[#allocation2 + $0x139] sm:$0xff] %vm99, %v93
    %127 = vst.msk [vmem:[#allocation2 + $0x141] sm:$0xff] %vm99, %v94
    %128 = vst.msk [vmem:[#allocation2 + $0x151] sm:$0xff] %vm99, %v95
    %129 = vst.msk [vmem:[#allocation2 + $0x159] sm:$0xff] %vm99, %v96
    %130 = vst.msk [vmem:[#allocation2 + $0x169] sm:$0xff] %vm99, %v97
    %131 = vst.msk [vmem:[#allocation2 + $0x171] sm:$0xff] %vm99, %v98
    %v132 = vld [vmem:[%s1] sm:$0x3f]
    %v133 = vld [vmem:[#allocation2] sm:$0xff]
    %v134 = vld [vmem:[#allocation2 + $0x8] sm:$0xff]
    %v135 = vld [vmem:[#allocation2 + $0x18] sm:$0xff]
    %v136 = vld [vmem:[#allocation2 + $0x20] sm:$0xff]
    %v137 = vld [vmem:[#allocation2 + $0x30] sm:$0xff]
    %v138 = vld [vmem:[#allocation2 + $0x38] sm:$0xff]
    %v139 = vld [vmem:[#allocation2 + $0x48] sm:$0xff]
    %v140 = vld [vmem:[#allocation2 + $0x50] sm:$0xff]
    %v141 = vld [vmem:[#allocation2 + $0x60] sm:$0xff]
    %v142 = vld [vmem:[#allocation2 + $0x68] sm:$0xff]
    %v143 = vld [vmem:[#allocation2 + $0x78] sm:$0xff]
    %v144 = vld [vmem:[#allocation2 + $0x80] sm:$0xff]
    %v145 = vld [vmem:[#allocation2 + $0x90] sm:$0xff]
    %v146 = vld [vmem:[#allocation2 + $0x98] sm:$0xff]
    %v147 = vld [vmem:[#allocation2 + $0xa8] sm:$0xff]
    %v148 = vld [vmem:[#allocation2 + $0xb0] sm:$0xff]
    %v149 = vld [vmem:[#allocation2 + $0xc0] sm:$0xff]
    %v150 = vld [vmem:[#allocation2 + $0xc8] sm:$0xff]
    %v151 = vld [vmem:[#allocation2 + $0xd8] sm:$0xff]
    %v152 = vld [vmem:[#allocation2 + $0xe0] sm:$0xff]
    %v153 = vld [vmem:[#allocation2 + $0xf0] sm:$0xff]
    %v154 = vld [vmem:[#allocation2 + $0xf8] sm:$0xff]
    %v155 = vld [vmem:[#allocation2 + $0x108] sm:$0xff]
    %v156 = vld [vmem:[#allocation2 + $0x110] sm:$0xff]
    %v157 = vld [vmem:[#allocation2 + $0x120] sm:$0xff]
    %v158 = vld [vmem:[#allocation2 + $0x128] sm:$0xff]
    %v159 = vld [vmem:[#allocation2 + $0x138] sm:$0xff]
    %v160 = vld [vmem:[#allocation2 + $0x140] sm:$0xff]
    %v161 = vld [vmem:[#allocation2 + $0x150] sm:$0xff]
    %v162 = vld [vmem:[#allocation2 + $0x158] sm:$0xff]
    %v163 = vld [vmem:[#allocation2 + $0x168] sm:$0xff]
    %v164 = vld [vmem:[#allocation2 + $0x170] sm:$0xff]
    %166 = vset.pattern.permute.xlu0 0
    %167 = vperm.xlu0 %166, %v133
    %v168 = vpop.permute.xlu0 %167
    %171 = vset.pattern.permute.xlu0 0
    %172 = vperm.xlu0 %171, %v134
    %v173 = vpop.permute.xlu0 %172
    %176 = vset.pattern.permute.xlu0 0
    %177 = vperm.xlu0 %176, %v135
    %v178 = vpop.permute.xlu0 %177
    %181 = vset.pattern.permute.xlu0 0
    %182 = vperm.xlu0 %181, %v136
    %v183 = vpop.permute.xlu0 %182
    %186 = vset.pattern.permute.xlu0 0
    %187 = vperm.xlu0 %186, %v137
    %v188 = vpop.permute.xlu0 %187
    %191 = vset.pattern.permute.xlu0 0
    %192 = vperm.xlu0 %191, %v138
    %v193 = vpop.permute.xlu0 %192
    %196 = vset.pattern.permute.xlu0 0
    %197 = vperm.xlu0 %196, %v139
    %v198 = vpop.permute.xlu0 %197
    %201 = vset.pattern.permute.xlu0 0
    %202 = vperm.xlu0 %201, %v140
    %v203 = vpop.permute.xlu0 %202
    %206 = vset.pattern.permute.xlu0 0
    %207 = vperm.xlu0 %206, %v141
    %v208 = vpop.permute.xlu0 %207
    %211 = vset.pattern.permute.xlu0 0
    %212 = vperm.xlu0 %211, %v142
    %v213 = vpop.permute.xlu0 %212
    %216 = vset.pattern.permute.xlu0 0
    %217 = vperm.xlu0 %216, %v143
    %v218 = vpop.permute.xlu0 %217
    %221 = vset.pattern.permute.xlu0 0
    %222 = vperm.xlu0 %221, %v144
    %v223 = vpop.permute.xlu0 %222
    %226 = vset.pattern.permute.xlu0 0
    %227 = vperm.xlu0 %226, %v145
    %v228 = vpop.permute.xlu0 %227
    %231 = vset.pattern.permute.xlu0 0
    %232 = vperm.xlu0 %231, %v146
    %v233 = vpop.permute.xlu0 %232
    %236 = vset.pattern.permute.xlu0 0
    %237 = vperm.xlu0 %236, %v147
    %v238 = vpop.permute.xlu0 %237
    %241 = vset.pattern.permute.xlu0 0
    %242 = vperm.xlu0 %241, %v148
    %v243 = vpop.permute.xlu0 %242
    %246 = vset.pattern.permute.xlu0 0
    %247 = vperm.xlu0 %246, %v149
    %v248 = vpop.permute.xlu0 %247
    %251 = vset.pattern.permute.xlu0 0
    %252 = vperm.xlu0 %251, %v150
    %v253 = vpop.permute.xlu0 %252
    %256 = vset.pattern.permute.xlu0 0
    %257 = vperm.xlu0 %256, %v151
    %v258 = vpop.permute.xlu0 %257
    %261 = vset.pattern.permute.xlu0 0
    %262 = vperm.xlu0 %261, %v152
    %v263 = vpop.permute.xlu0 %262
    %266 = vset.pattern.permute.xlu0 0
    %267 = vperm.xlu0 %266, %v153
    %v268 = vpop.permute.xlu0 %267
    %271 = vset.pattern.permute.xlu0 0
    %272 = vperm.xlu0 %271, %v154
    %v273 = vpop.permute.xlu0 %272
    %276 = vset.pattern.permute.xlu0 0
    %277 = vperm.xlu0 %276, %v155
    %v278 = vpop.permute.xlu0 %277
    %281 = vset.pattern.permute.xlu0 0
    %282 = vperm.xlu0 %281, %v156
    %v283 = vpop.permute.xlu0 %282
    %286 = vset.pattern.permute.xlu0 0
    %287 = vperm.xlu0 %286, %v157
    %v288 = vpop.permute.xlu0 %287
    %291 = vset.pattern.permute.xlu0 0
    %292 = vperm.xlu0 %291, %v158
    %v293 = vpop.permute.xlu0 %292
    %296 = vset.pattern.permute.xlu0 0
    %297 = vperm.xlu0 %296, %v159
    %v298 = vpop.permute.xlu0 %297
    %301 = vset.pattern.permute.xlu0 0
    %302 = vperm.xlu0 %301, %v160
    %v303 = vpop.permute.xlu0 %302
    %306 = vset.pattern.permute.xlu0 0
    %307 = vperm.xlu0 %306, %v161
    %v308 = vpop.permute.xlu0 %307
    %311 = vset.pattern.permute.xlu0 0
    %312 = vperm.xlu0 %311, %v162
    %v313 = vpop.permute.xlu0 %312
    %316 = vset.pattern.permute.xlu0 0
    %317 = vperm.xlu0 %316, %v163
    %v318 = vpop.permute.xlu0 %317
    %321 = vset.pattern.permute.xlu0 0
    %322 = vperm.xlu0 %321, %v164
    %v323 = vpop.permute.xlu0 %322
    %v325 = vlaneseq
    %v326 = vshrl.u32 %v325, 7
    %v327 = vsub.s32 0, %v326
    %v328 = vrot.slane %v132, %v327
    %v329 = vmul.f32 %v168, %v328
    %v330 = vmul.f32 %v173, %v328
    %v331 = vmul.f32 %v178, %v328
    %v332 = vmul.f32 %v183, %v328
    %v333 = vmul.f32 %v188, %v328
    %v334 = vmul.f32 %v193, %v328
    %v335 = vmul.f32 %v198, %v328
    %v336 = vmul.f32 %v203, %v328
    %v337 = vmul.f32 %v208, %v328
    %v338 = vmul.f32 %v213, %v328
    %v339 = vmul.f32 %v218, %v328
    %v340 = vmul.f32 %v223, %v328
    %v341 = vmul.f32 %v228, %v328
    %v342 = vmul.f32 %v233, %v328
    %v343 = vmul.f32 %v238, %v328
    %v344 = vmul.f32 %v243, %v328
    %v345 = vmul.f32 %v248, %v328
    %v346 = vmul.f32 %v253, %v328
    %v347 = vmul.f32 %v258, %v328
    %v348 = vmul.f32 %v263, %v328
    %v349 = vmul.f32 %v268, %v328
    %v350 = vmul.f32 %v273, %v328
    %v351 = vmul.f32 %v278, %v328
    %v352 = vmul.f32 %v283, %v328
    %v353 = vmul.f32 %v288, %v328
    %v354 = vmul.f32 %v293, %v328
    %v355 = vmul.f32 %v298, %v328
    %v356 = vmul.f32 %v303, %v328
    %v357 = vmul.f32 %v308, %v328
    %v358 = vmul.f32 %v313, %v328
    %v359 = vmul.f32 %v318, %v328
    %v360 = vmul.f32 %v323, %v328
    %v361 = vadd.f32 %v329, 0.0
    %v362 = vadd.f32 %v330, 0.0
    %v363 = vadd.f32 %v331, 0.0
    %v364 = vadd.f32 %v332, 0.0
    %v365 = vadd.f32 %v333, 0.0
    %v366 = vadd.f32 %v334, 0.0
    %v367 = vadd.f32 %v335, 0.0
    %v368 = vadd.f32 %v336, 0.0
    %v369 = vadd.f32 %v337, 0.0
    %v370 = vadd.f32 %v338, 0.0
    %v371 = vadd.f32 %v339, 0.0
    %v372 = vadd.f32 %v340, 0.0
    %v373 = vadd.f32 %v341, 0.0
    %v374 = vadd.f32 %v342, 0.0
    %v375 = vadd.f32 %v343, 0.0
    %v376 = vadd.f32 %v344, 0.0
    %v377 = vadd.f32 %v345, 0.0
    %v378 = vadd.f32 %v346, 0.0
    %v379 = vadd.f32 %v347, 0.0
    %v380 = vadd.f32 %v348, 0.0
    %v381 = vadd.f32 %v349, 0.0
    %v382 = vadd.f32 %v350, 0.0
    %v383 = vadd.f32 %v351, 0.0
    %v384 = vadd.f32 %v352, 0.0
    %v385 = vadd.f32 %v353, 0.0
    %v386 = vadd.f32 %v354, 0.0
    %v387 = vadd.f32 %v355, 0.0
    %v388 = vadd.f32 %v356, 0.0
    %v389 = vadd.f32 %v357, 0.0
    %v390 = vadd.f32 %v358, 0.0
    %v391 = vadd.f32 %v359, 0.0
    %v392 = vadd.f32 %v360, 0.0
    %393 = vset.pattern.permute.xlu0 1
    %394 = vperm.xlu0 %393, %v133
    %v395 = vpop.permute.xlu0 %394
    %397 = vset.pattern.permute.xlu0 1
    %398 = vperm.xlu0 %397, %v134
    %v399 = vpop.permute.xlu0 %398
    %401 = vset.pattern.permute.xlu0 1
    %402 = vperm.xlu0 %401, %v135
    %v403 = vpop.permute.xlu0 %402
    %405 = vset.pattern.permute.xlu0 1
    %406 = vperm.xlu0 %405, %v136
    %v407 = vpop.permute.xlu0 %406
    %409 = vset.pattern.permute.xlu0 1
    %410 = vperm.xlu0 %409, %v137
    %v411 = vpop.permute.xlu0 %410
    %413 = vset.pattern.permute.xlu0 1
    %414 = vperm.xlu0 %413, %v138
    %v415 = vpop.permute.xlu0 %414
    %417 = vset.pattern.permute.xlu0 1
    %418 = vperm.xlu0 %417, %v139
    %v419 = vpop.permute.xlu0 %418
    %421 = vset.pattern.permute.xlu0 1
    %422 = vperm.xlu0 %421, %v140
    %v423 = vpop.permute.xlu0 %422
    %425 = vset.pattern.permute.xlu0 1
    %426 = vperm.xlu0 %425, %v141
    %v427 = vpop.permute.xlu0 %426
    %429 = vset.pattern.permute.xlu0 1
    %430 = vperm.xlu0 %429, %v142
    %v431 = vpop.permute.xlu0 %430
    %433 = vset.pattern.permute.xlu0 1
    %434 = vperm.xlu0 %433, %v143
    %v435 = vpop.permute.xlu0 %434
    %437 = vset.pattern.permute.xlu0 1
    %438 = vperm.xlu0 %437, %v144
    %v439 = vpop.permute.xlu0 %438
    %441 = vset.pattern.permute.xlu0 1
    %442 = vperm.xlu0 %441, %v145
    %v443 = vpop.permute.xlu0 %442
    %445 = vset.pattern.permute.xlu0 1
    %446 = vperm.xlu0 %445, %v146
    %v447 = vpop.permute.xlu0 %446
    %449 = vset.pattern.permute.xlu0 1
    %450 = vperm.xlu0 %449, %v147
    %v451 = vpop.permute.xlu0 %450
    %453 = vset.pattern.permute.xlu0 1
    %454 = vperm.xlu0 %453, %v148
    %v455 = vpop.permute.xlu0 %454
    %457 = vset.pattern.permute.xlu0 1
    %458 = vperm.xlu0 %457, %v149
    %v459 = vpop.permute.xlu0 %458
    %461 = vset.pattern.permute.xlu0 1
    %462 = vperm.xlu0 %461, %v150
    %v463 = vpop.permute.xlu0 %462
    %465 = vset.pattern.permute.xlu0 1
    %466 = vperm.xlu0 %465, %v151
    %v467 = vpop.permute.xlu0 %466
    %469 = vset.pattern.permute.xlu0 1
    %470 = vperm.xlu0 %469, %v152
    %v471 = vpop.permute.xlu0 %470
    %473 = vset.pattern.permute.xlu0 1
    %474 = vperm.xlu0 %473, %v153
    %v475 = vpop.permute.xlu0 %474
    %477 = vset.pattern.permute.xlu0 1
    %478 = vperm.xlu0 %477, %v154
    %v479 = vpop.permute.xlu0 %478
    %481 = vset.pattern.permute.xlu0 1
    %482 = vperm.xlu0 %481, %v155
    %v483 = vpop.permute.xlu0 %482
    %485 = vset.pattern.permute.xlu0 1
    %486 = vperm.xlu0 %485, %v156
    %v487 = vpop.permute.xlu0 %486
    %489 = vset.pattern.permute.xlu0 1
    %490 = vperm.xlu0 %489, %v157
    %v491 = vpop.permute.xlu0 %490
    %493 = vset.pattern.permute.xlu0 1
    %494 = vperm.xlu0 %493, %v158
    %v495 = vpop.permute.xlu0 %494
    %497 = vset.pattern.permute.xlu0 1
    %498 = vperm.xlu0 %497, %v159
    %v499 = vpop.permute.xlu0 %498
    %501 = vset.pattern.permute.xlu0 1
    %502 = vperm.xlu0 %501, %v160
    %v503 = vpop.permute.xlu0 %502
    %505 = vset.pattern.permute.xlu0 1
    %506 = vperm.xlu0 %505, %v161
    %v507 = vpop.permute.xlu0 %506
    %509 = vset.pattern.permute.xlu0 1
    %510 = vperm.xlu0 %509, %v162
    %v511 = vpop.permute.xlu0 %510
    %513 = vset.pattern.permute.xlu0 1
    %514 = vperm.xlu0 %513, %v163
    %v515 = vpop.permute.xlu0 %514
    %517 = vset.pattern.permute.xlu0 1
    %518 = vperm.xlu0 %517, %v164
    %v519 = vpop.permute.xlu0 %518
    %v521 = vlaneseq
    %v522 = vshrl.u32 %v521, 7
    %v523 = vsub.s32 1, %v522
    %v524 = vrot.slane %v132, %v523
    %v525 = vmul.f32 %v395, %v524
    %v526 = vmul.f32 %v399, %v524
    %v527 = vmul.f32 %v403, %v524
    %v528 = vmul.f32 %v407, %v524
    %v529 = vmul.f32 %v411, %v524
    %v530 = vmul.f32 %v415, %v524
    %v531 = vmul.f32 %v419, %v524
    %v532 = vmul.f32 %v423, %v524
    %v533 = vmul.f32 %v427, %v524
    %v534 = vmul.f32 %v431, %v524
    %v535 = vmul.f32 %v435, %v524
    %v536 = vmul.f32 %v439, %v524
    %v537 = vmul.f32 %v443, %v524
    %v538 = vmul.f32 %v447, %v524
    %v539 = vmul.f32 %v451, %v524
    %v540 = vmul.f32 %v455, %v524
    %v541 = vmul.f32 %v459, %v524
    %v542 = vmul.f32 %v463, %v524
    %v543 = vmul.f32 %v467, %v524
    %v544 = vmul.f32 %v471, %v524
    %v545 = vmul.f32 %v475, %v524
    %v546 = vmul.f32 %v479, %v524
    %v547 = vmul.f32 %v483, %v524
    %v548 = vmul.f32 %v487, %v524
    %v549 = vmul.f32 %v491, %v524
    %v550 = vmul.f32 %v495, %v524
    %v551 = vmul.f32 %v499, %v524
    %v552 = vmul.f32 %v503, %v524
    %v553 = vmul.f32 %v507, %v524
    %v554 = vmul.f32 %v511, %v524
    %v555 = vmul.f32 %v515, %v524
    %v556 = vmul.f32 %v519, %v524
    %v557 = vadd.f32 %v361, %v525
    %v558 = vadd.f32 %v362, %v526
    %v559 = vadd.f32 %v363, %v527
    %v560 = vadd.f32 %v364, %v528
    %v561 = vadd.f32 %v365, %v529
    %v562 = vadd.f32 %v366, %v530
    %v563 = vadd.f32 %v367, %v531
    %v564 = vadd.f32 %v368, %v532
    %v565 = vadd.f32 %v369, %v533
    %v566 = vadd.f32 %v370, %v534
    %v567 = vadd.f32 %v371, %v535
    %v568 = vadd.f32 %v372, %v536
    %v569 = vadd.f32 %v373, %v537
    %v570 = vadd.f32 %v374, %v538
    %v571 = vadd.f32 %v375, %v539
    %v572 = vadd.f32 %v376, %v540
    %v573 = vadd.f32 %v377, %v541
    %v574 = vadd.f32 %v378, %v542
    %v575 = vadd.f32 %v379, %v543
    %v576 = vadd.f32 %v380, %v544
    %v577 = vadd.f32 %v381, %v545
    %v578 = vadd.f32 %v382, %v546
    %v579 = vadd.f32 %v383, %v547
    %v580 = vadd.f32 %v384, %v548
    %v581 = vadd.f32 %v385, %v549
    %v582 = vadd.f32 %v386, %v550
    %v583 = vadd.f32 %v387, %v551
    %v584 = vadd.f32 %v388, %v552
    %v585 = vadd.f32 %v389, %v553
    %v586 = vadd.f32 %v390, %v554
    %v587 = vadd.f32 %v391, %v555
    %v588 = vadd.f32 %v392, %v556
    %v589 = vld [vmem:[#allocation2 + $0x1] sm:$0xff]
    %v590 = vld [vmem:[#allocation2 + $0x9] sm:$0xff]
    %v591 = vld [vmem:[#allocation2 + $0x19] sm:$0xff]
    %v592 = vld [vmem:[#allocation2 + $0x21] sm:$0xff]
    %v593 = vld [vmem:[#allocation2 + $0x31] sm:$0xff]
    %v594 = vld [vmem:[#allocation2 + $0x39] sm:$0xff]
    %v595 = vld [vmem:[#allocation2 + $0x49] sm:$0xff]
    %v596 = vld [vmem:[#allocation2 + $0x51] sm:$0xff]
    %v597 = vld [vmem:[#allocation2 + $0x61] sm:$0xff]
    %v598 = vld [vmem:[#allocation2 + $0x69] sm:$0xff]
    %v599 = vld [vmem:[#allocation2 + $0x79] sm:$0xff]
    %v600 = vld [vmem:[#allocation2 + $0x81] sm:$0xff]
    %v601 = vld [vmem:[#allocation2 + $0x91] sm:$0xff]
    %v602 = vld [vmem:[#allocation2 + $0x99] sm:$0xff]
    %v603 = vld [vmem:[#allocation2 + $0xa9] sm:$0xff]
    %v604 = vld [vmem:[#allocation2 + $0xb1] sm:$0xff]
    %v605 = vld [vmem:[#allocation2 + $0xc1] sm:$0xff]
    %v606 = vld [vmem:[#allocation2 + $0xc9] sm:$0xff]
    %v607 = vld [vmem:[#allocation2 + $0xd9] sm:$0xff]
    %v608 = vld [vmem:[#allocation2 + $0xe1] sm:$0xff]
    %v609 = vld [vmem:[#allocation2 + $0xf1] sm:$0xff]
    %v610 = vld [vmem:[#allocation2 + $0xf9] sm:$0xff]
    %v611 = vld [vmem:[#allocation2 + $0x109] sm:$0xff]
    %v612 = vld [vmem:[#allocation2 + $0x111] sm:$0xff]
    %v613 = vld [vmem:[#allocation2 + $0x121] sm:$0xff]
    %v614 = vld [vmem:[#allocation2 + $0x129] sm:$0xff]
    %v615 = vld [vmem:[#allocation2 + $0x139] sm:$0xff]
    %v616 = vld [vmem:[#allocation2 + $0x141] sm:$0xff]
    %v617 = vld [vmem:[#allocation2 + $0x151] sm:$0xff]
    %v618 = vld [vmem:[#allocation2 + $0x159] sm:$0xff]
    %v619 = vld [vmem:[#allocation2 + $0x169] sm:$0xff]
    %v620 = vld [vmem:[#allocation2 + $0x171] sm:$0xff]
    %622 = vset.pattern.permute.xlu0 0
    %623 = vperm.xlu0 %622, %v589
    %v624 = vpop.permute.xlu0 %623
    %627 = vset.pattern.permute.xlu0 0
    %628 = vperm.xlu0 %627, %v590
    %v629 = vpop.permute.xlu0 %628
    %632 = vset.pattern.permute.xlu0 0
    %633 = vperm.xlu0 %632, %v591
    %v634 = vpop.permute.xlu0 %633
    %637 = vset.pattern.permute.xlu0 0
    %638 = vperm.xlu0 %637, %v592
    %v639 = vpop.permute.xlu0 %638
    %642 = vset.pattern.permute.xlu0 0
    %643 = vperm.xlu0 %642, %v593
    %v644 = vpop.permute.xlu0 %643
    %647 = vset.pattern.permute.xlu0 0
    %648 = vperm.xlu0 %647, %v594
    %v649 = vpop.permute.xlu0 %648
    %652 = vset.pattern.permute.xlu0 0
    %653 = vperm.xlu0 %652, %v595
    %v654 = vpop.permute.xlu0 %653
    %657 = vset.pattern.permute.xlu0 0
    %658 = vperm.xlu0 %657, %v596
    %v659 = vpop.permute.xlu0 %658
    %662 = vset.pattern.permute.xlu0 0
    %663 = vperm.xlu0 %662, %v597
    %v664 = vpop.permute.xlu0 %663
    %667 = vset.pattern.permute.xlu0 0
    %668 = vperm.xlu0 %667, %v598
    %v669 = vpop.permute.xlu0 %668
    %672 = vset.pattern.permute.xlu0 0
    %673 = vperm.xlu0 %672, %v599
    %v674 = vpop.permute.xlu0 %673
    %677 = vset.pattern.permute.xlu0 0
    %678 = vperm.xlu0 %677, %v600
    %v679 = vpop.permute.xlu0 %678
    %682 = vset.pattern.permute.xlu0 0
    %683 = vperm.xlu0 %682, %v601
    %v684 = vpop.permute.xlu0 %683
    %687 = vset.pattern.permute.xlu0 0
    %688 = vperm.xlu0 %687, %v602
    %v689 = vpop.permute.xlu0 %688
    %692 = vset.pattern.permute.xlu0 0
    %693 = vperm.xlu0 %692, %v603
    %v694 = vpop.permute.xlu0 %693
    %697 = vset.pattern.permute.xlu0 0
    %698 = vperm.xlu0 %697, %v604
    %v699 = vpop.permute.xlu0 %698
    %702 = vset.pattern.permute.xlu0 0
    %703 = vperm.xlu0 %702, %v605
    %v704 = vpop.permute.xlu0 %703
    %707 = vset.pattern.permute.xlu0 0
    %708 = vperm.xlu0 %707, %v606
    %v709 = vpop.permute.xlu0 %708
    %712 = vset.pattern.permute.xlu0 0
    %713 = vperm.xlu0 %712, %v607
    %v714 = vpop.permute.xlu0 %713
    %717 = vset.pattern.permute.xlu0 0
    %718 = vperm.xlu0 %717, %v608
    %v719 = vpop.permute.xlu0 %718
    %722 = vset.pattern.permute.xlu0 0
    %723 = vperm.xlu0 %722, %v609
    %v724 = vpop.permute.xlu0 %723
    %727 = vset.pattern.permute.xlu0 0
    %728 = vperm.xlu0 %727, %v610
    %v729 = vpop.permute.xlu0 %728
    %732 = vset.pattern.permute.xlu0 0
    %733 = vperm.xlu0 %732, %v611
    %v734 = vpop.permute.xlu0 %733
    %737 = vset.pattern.permute.xlu0 0
    %738 = vperm.xlu0 %737, %v612
    %v739 = vpop.permute.xlu0 %738
    %742 = vset.pattern.permute.xlu0 0
    %743 = vperm.xlu0 %742, %v613
    %v744 = vpop.permute.xlu0 %743
    %747 = vset.pattern.permute.xlu0 0
    %748 = vperm.xlu0 %747, %v614
    %v749 = vpop.permute.xlu0 %748
    %752 = vset.pattern.permute.xlu0 0
    %753 = vperm.xlu0 %752, %v615
    %v754 = vpop.permute.xlu0 %753
    %757 = vset.pattern.permute.xlu0 0
    %758 = vperm.xlu0 %757, %v616
    %v759 = vpop.permute.xlu0 %758
    %762 = vset.pattern.permute.xlu0 0
    %763 = vperm.xlu0 %762, %v617
    %v764 = vpop.permute.xlu0 %763
    %767 = vset.pattern.permute.xlu0 0
    %768 = vperm.xlu0 %767, %v618
    %v769 = vpop.permute.xlu0 %768
    %772 = vset.pattern.permute.xlu0 0
    %773 = vperm.xlu0 %772, %v619
    %v774 = vpop.permute.xlu0 %773
    %777 = vset.pattern.permute.xlu0 0
    %778 = vperm.xlu0 %777, %v620
    %v779 = vpop.permute.xlu0 %778
    %v781 = vlaneseq
    %v782 = vshrl.u32 %v781, 7
    %v783 = vsub.s32 2, %v782
    %v784 = vrot.slane %v132, %v783
    %v785 = vmul.f32 %v624, %v784
    %v786 = vmul.f32 %v629, %v784
    %v787 = vmul.f32 %v634, %v784
    %v788 = vmul.f32 %v639, %v784
    %v789 = vmul.f32 %v644, %v784
    %v790 = vmul.f32 %v649, %v784
    %v791 = vmul.f32 %v654, %v784
    %v792 = vmul.f32 %v659, %v784
    %v793 = vmul.f32 %v664, %v784
    %v794 = vmul.f32 %v669, %v784
    %v795 = vmul.f32 %v674, %v784
    %v796 = vmul.f32 %v679, %v784
    %v797 = vmul.f32 %v684, %v784
    %v798 = vmul.f32 %v689, %v784
    %v799 = vmul.f32 %v694, %v784
    %v800 = vmul.f32 %v699, %v784
    %v801 = vmul.f32 %v704, %v784
    %v802 = vmul.f32 %v709, %v784
    %v803 = vmul.f32 %v714, %v784
    %v804 = vmul.f32 %v719, %v784
    %v805 = vmul.f32 %v724, %v784
    %v806 = vmul.f32 %v729, %v784
    %v807 = vmul.f32 %v734, %v784
    %v808 = vmul.f32 %v739, %v784
    %v809 = vmul.f32 %v744, %v784
    %v810 = vmul.f32 %v749, %v784
    %v811 = vmul.f32 %v754, %v784
    %v812 = vmul.f32 %v759, %v784
    %v813 = vmul.f32 %v764, %v784
    %v814 = vmul.f32 %v769, %v784
    %v815 = vmul.f32 %v774, %v784
    %v816 = vmul.f32 %v779, %v784
    %v817 = vadd.f32 %v557, %v785
    %v818 = vadd.f32 %v558, %v786
    %v819 = vadd.f32 %v559, %v787
    %v820 = vadd.f32 %v560, %v788
    %v821 = vadd.f32 %v561, %v789
    %v822 = vadd.f32 %v562, %v790
    %v823 = vadd.f32 %v563, %v791
    %v824 = vadd.f32 %v564, %v792
    %v825 = vadd.f32 %v565, %v793
    %v826 = vadd.f32 %v566, %v794
    %v827 = vadd.f32 %v567, %v795
    %v828 = vadd.f32 %v568, %v796
    %v829 = vadd.f32 %v569, %v797
    %v830 = vadd.f32 %v570, %v798
    %v831 = vadd.f32 %v571, %v799
    %v832 = vadd.f32 %v572, %v800
    %v833 = vadd.f32 %v573, %v801
    %v834 = vadd.f32 %v574, %v802
    %v835 = vadd.f32 %v575, %v803
    %v836 = vadd.f32 %v576, %v804
    %v837 = vadd.f32 %v577, %v805
    %v838 = vadd.f32 %v578, %v806
    %v839 = vadd.f32 %v579, %v807
    %v840 = vadd.f32 %v580, %v808
    %v841 = vadd.f32 %v581, %v809
    %v842 = vadd.f32 %v582, %v810
    %v843 = vadd.f32 %v583, %v811
    %v844 = vadd.f32 %v584, %v812
    %v845 = vadd.f32 %v585, %v813
    %v846 = vadd.f32 %v586, %v814
    %v847 = vadd.f32 %v587, %v815
    %v848 = vadd.f32 %v588, %v816
    %849 = vset.pattern.permute.xlu0 1
    %850 = vperm.xlu0 %849, %v589
    %v851 = vpop.permute.xlu0 %850
    %853 = vset.pattern.permute.xlu0 1
    %854 = vperm.xlu0 %853, %v590
    %v855 = vpop.permute.xlu0 %854
    %857 = vset.pattern.permute.xlu0 1
    %858 = vperm.xlu0 %857, %v591
    %v859 = vpop.permute.xlu0 %858
    %861 = vset.pattern.permute.xlu0 1
    %862 = vperm.xlu0 %861, %v592
    %v863 = vpop.permute.xlu0 %862
    %865 = vset.pattern.permute.xlu0 1
    %866 = vperm.xlu0 %865, %v593
    %v867 = vpop.permute.xlu0 %866
    %869 = vset.pattern.permute.xlu0 1
    %870 = vperm.xlu0 %869, %v594
    %v871 = vpop.permute.xlu0 %870
    %873 = vset.pattern.permute.xlu0 1
    %874 = vperm.xlu0 %873, %v595
    %v875 = vpop.permute.xlu0 %874
    %877 = vset.pattern.permute.xlu0 1
    %878 = vperm.xlu0 %877, %v596
    %v879 = vpop.permute.xlu0 %878
    %881 = vset.pattern.permute.xlu0 1
    %882 = vperm.xlu0 %881, %v597
    %v883 = vpop.permute.xlu0 %882
    %885 = vset.pattern.permute.xlu0 1
    %886 = vperm.xlu0 %885, %v598
    %v887 = vpop.permute.xlu0 %886
    %889 = vset.pattern.permute.xlu0 1
    %890 = vperm.xlu0 %889, %v599
    %v891 = vpop.permute.xlu0 %890
    %893 = vset.pattern.permute.xlu0 1
    %894 = vperm.xlu0 %893, %v600
    %v895 = vpop.permute.xlu0 %894
    %897 = vset.pattern.permute.xlu0 1
    %898 = vperm.xlu0 %897, %v601
    %v899 = vpop.permute.xlu0 %898
    %901 = vset.pattern.permute.xlu0 1
    %902 = vperm.xlu0 %901, %v602
    %v903 = vpop.permute.xlu0 %902
    %905 = vset.pattern.permute.xlu0 1
    %906 = vperm.xlu0 %905, %v603
    %v907 = vpop.permute.xlu0 %906
    %909 = vset.pattern.permute.xlu0 1
    %910 = vperm.xlu0 %909, %v604
    %v911 = vpop.permute.xlu0 %910
    %913 = vset.pattern.permute.xlu0 1
    %914 = vperm.xlu0 %913, %v605
    %v915 = vpop.permute.xlu0 %914
    %917 = vset.pattern.permute.xlu0 1
    %918 = vperm.xlu0 %917, %v606
    %v919 = vpop.permute.xlu0 %918
    %921 = vset.pattern.permute.xlu0 1
    %922 = vperm.xlu0 %921, %v607
    %v923 = vpop.permute.xlu0 %922
    %925 = vset.pattern.permute.xlu0 1
    %926 = vperm.xlu0 %925, %v608
    %v927 = vpop.permute.xlu0 %926
    %929 = vset.pattern.permute.xlu0 1
    %930 = vperm.xlu0 %929, %v609
    %v931 = vpop.permute.xlu0 %930
    %933 = vset.pattern.permute.xlu0 1
    %934 = vperm.xlu0 %933, %v610
    %v935 = vpop.permute.xlu0 %934
    %937 = vset.pattern.permute.xlu0 1
    %938 = vperm.xlu0 %937, %v611
    %v939 = vpop.permute.xlu0 %938
    %941 = vset.pattern.permute.xlu0 1
    %942 = vperm.xlu0 %941, %v612
    %v943 = vpop.permute.xlu0 %942
    %945 = vset.pattern.permute.xlu0 1
    %946 = vperm.xlu0 %945, %v613
    %v947 = vpop.permute.xlu0 %946
    %949 = vset.pattern.permute.xlu0 1
    %950 = vperm.xlu0 %949, %v614
    %v951 = vpop.permute.xlu0 %950
    %953 = vset.pattern.permute.xlu0 1
    %954 = vperm.xlu0 %953, %v615
    %v955 = vpop.permute.xlu0 %954
    %957 = vset.pattern.permute.xlu0 1
    %958 = vperm.xlu0 %957, %v616
    %v959 = vpop.permute.xlu0 %958
    %961 = vset.pattern.permute.xlu0 1
    %962 = vperm.xlu0 %961, %v617
    %v963 = vpop.permute.xlu0 %962
    %965 = vset.pattern.permute.xlu0 1
    %966 = vperm.xlu0 %965, %v618
    %v967 = vpop.permute.xlu0 %966
    %969 = vset.pattern.permute.xlu0 1
    %970 = vperm.xlu0 %969, %v619
    %v971 = vpop.permute.xlu0 %970
    %973 = vset.pattern.permute.xlu0 1
    %974 = vperm.xlu0 %973, %v620
    %v975 = vpop.permute.xlu0 %974
    %v977 = vlaneseq
    %v978 = vshrl.u32 %v977, 7
    %v979 = vsub.s32 3, %v978
    %v980 = vrot.slane %v132, %v979
    %v981 = vmul.f32 %v851, %v980
    %v982 = vmul.f32 %v855, %v980
    %v983 = vmul.f32 %v859, %v980
    %v984 = vmul.f32 %v863, %v980
    %v985 = vmul.f32 %v867, %v980
    %v986 = vmul.f32 %v871, %v980
    %v987 = vmul.f32 %v875, %v980
    %v988 = vmul.f32 %v879, %v980
    %v989 = vmul.f32 %v883, %v980
    %v990 = vmul.f32 %v887, %v980
    %v991 = vmul.f32 %v891, %v980
    %v992 = vmul.f32 %v895, %v980
    %v993 = vmul.f32 %v899, %v980
    %v994 = vmul.f32 %v903, %v980
    %v995 = vmul.f32 %v907, %v980
    %v996 = vmul.f32 %v911, %v980
    %v997 = vmul.f32 %v915, %v980
    %v998 = vmul.f32 %v919, %v980
    %v999 = vmul.f32 %v923, %v980
    %v1000 = vmul.f32 %v927, %v980
    %v1001 = vmul.f32 %v931, %v980
    %v1002 = vmul.f32 %v935, %v980
    %v1003 = vmul.f32 %v939, %v980
    %v1004 = vmul.f32 %v943, %v980
    %v1005 = vmul.f32 %v947, %v980
    %v1006 = vmul.f32 %v951, %v980
    %v1007 = vmul.f32 %v955, %v980
    %v1008 = vmul.f32 %v959, %v980
    %v1009 = vmul.f32 %v963, %v980
    %v1010 = vmul.f32 %v967, %v980
    %v1011 = vmul.f32 %v971, %v980
    %v1012 = vmul.f32 %v975, %v980
    %v1013 = vadd.f32 %v817, %v981
    %v1014 = vadd.f32 %v818, %v982
    %v1015 = vadd.f32 %v819, %v983
    %v1016 = vadd.f32 %v820, %v984
    %v1017 = vadd.f32 %v821, %v985
    %v1018 = vadd.f32 %v822, %v986
    %v1019 = vadd.f32 %v823, %v987
    %v1020 = vadd.f32 %v824, %v988
    %v1021 = vadd.f32 %v825, %v989
    %v1022 = vadd.f32 %v826, %v990
    %v1023 = vadd.f32 %v827, %v991
    %v1024 = vadd.f32 %v828, %v992
    %v1025 = vadd.f32 %v829, %v993
    %v1026 = vadd.f32 %v830, %v994
    %v1027 = vadd.f32 %v831, %v995
    %v1028 = vadd.f32 %v832, %v996
    %v1029 = vadd.f32 %v833, %v997
    %v1030 = vadd.f32 %v834, %v998
    %v1031 = vadd.f32 %v835, %v999
    %v1032 = vadd.f32 %v836, %v1000
    %v1033 = vadd.f32 %v837, %v1001
    %v1034 = vadd.f32 %v838, %v1002
    %v1035 = vadd.f32 %v839, %v1003
    %v1036 = vadd.f32 %v840, %v1004
    %v1037 = vadd.f32 %v841, %v1005
    %v1038 = vadd.f32 %v842, %v1006
    %v1039 = vadd.f32 %v843, %v1007
    %v1040 = vadd.f32 %v844, %v1008
    %v1041 = vadd.f32 %v845, %v1009
    %v1042 = vadd.f32 %v846, %v1010
    %v1043 = vadd.f32 %v847, %v1011
    %v1044 = vadd.f32 %v848, %v1012
    %v1045 = vld [vmem:[#allocation2 + $0x2] sm:$0xff]
    %v1046 = vld [vmem:[#allocation2 + $0xa] sm:$0xff]
    %v1047 = vld [vmem:[#allocation2 + $0x1a] sm:$0xff]
    %v1048 = vld [vmem:[#allocation2 + $0x22] sm:$0xff]
    %v1049 = vld [vmem:[#allocation2 + $0x32] sm:$0xff]
    %v1050 = vld [vmem:[#allocation2 + $0x3a] sm:$0xff]
    %v1051 = vld [vmem:[#allocation2 + $0x4a] sm:$0xff]
    %v1052 = vld [vmem:[#allocation2 + $0x52] sm:$0xff]
    %v1053 = vld [vmem:[#allocation2 + $0x62] sm:$0xff]
    %v1054 = vld [vmem:[#allocation2 + $0x6a] sm:$0xff]
    %v1055 = vld [vmem:[#allocation2 + $0x7a] sm:$0xff]
    %v1056 = vld [vmem:[#allocation2 + $0x82] sm:$0xff]
    %v1057 = vld [vmem:[#allocation2 + $0x92] sm:$0xff]
    %v1058 = vld [vmem:[#allocation2 + $0x9a] sm:$0xff]
    %v1059 = vld [vmem:[#allocation2 + $0xaa] sm:$0xff]
    %v1060 = vld [vmem:[#allocation2 + $0xb2] sm:$0xff]
    %v1061 = vld [vmem:[#allocation2 + $0xc2] sm:$0xff]
    %v1062 = vld [vmem:[#allocation2 + $0xca] sm:$0xff]
    %v1063 = vld [vmem:[#allocation2 + $0xda] sm:$0xff]
    %v1064 = vld [vmem:[#allocation2 + $0xe2] sm:$0xff]
    %v1065 = vld [vmem:[#allocation2 + $0xf2] sm:$0xff]
    %v1066 = vld [vmem:[#allocation2 + $0xfa] sm:$0xff]
    %v1067 = vld [vmem:[#allocation2 + $0x10a] sm:$0xff]
    %v1068 = vld [vmem:[#allocation2 + $0x112] sm:$0xff]
    %v1069 = vld [vmem:[#allocation2 + $0x122] sm:$0xff]
    %v1070 = vld [vmem:[#allocation2 + $0x12a] sm:$0xff]
    %v1071 = vld [vmem:[#allocation2 + $0x13a] sm:$0xff]
    %v1072 = vld [vmem:[#allocation2 + $0x142] sm:$0xff]
    %v1073 = vld [vmem:[#allocation2 + $0x152] sm:$0xff]
    %v1074 = vld [vmem:[#allocation2 + $0x15a] sm:$0xff]
    %v1075 = vld [vmem:[#allocation2 + $0x16a] sm:$0xff]
    %v1076 = vld [vmem:[#allocation2 + $0x172] sm:$0xff]
    %1078 = vset.pattern.permute.xlu0 0
    %1079 = vperm.xlu0 %1078, %v1045
    %v1080 = vpop.permute.xlu0 %1079
    %1083 = vset.pattern.permute.xlu0 0
    %1084 = vperm.xlu0 %1083, %v1046
    %v1085 = vpop.permute.xlu0 %1084
    %1088 = vset.pattern.permute.xlu0 0
    %1089 = vperm.xlu0 %1088, %v1047
    %v1090 = vpop.permute.xlu0 %1089
    %1093 = vset.pattern.permute.xlu0 0
    %1094 = vperm.xlu0 %1093, %v1048
    %v1095 = vpop.permute.xlu0 %1094
    %1098 = vset.pattern.permute.xlu0 0
    %1099 = vperm.xlu0 %1098, %v1049
    %v1100 = vpop.permute.xlu0 %1099
    %1103 = vset.pattern.permute.xlu0 0
    %1104 = vperm.xlu0 %1103, %v1050
    %v1105 = vpop.permute.xlu0 %1104
    %1108 = vset.pattern.permute.xlu0 0
    %1109 = vperm.xlu0 %1108, %v1051
    %v1110 = vpop.permute.xlu0 %1109
    %1113 = vset.pattern.permute.xlu0 0
    %1114 = vperm.xlu0 %1113, %v1052
    %v1115 = vpop.permute.xlu0 %1114
    %1118 = vset.pattern.permute.xlu0 0
    %1119 = vperm.xlu0 %1118, %v1053
    %v1120 = vpop.permute.xlu0 %1119
    %1123 = vset.pattern.permute.xlu0 0
    %1124 = vperm.xlu0 %1123, %v1054
    %v1125 = vpop.permute.xlu0 %1124
    %1128 = vset.pattern.permute.xlu0 0
    %1129 = vperm.xlu0 %1128, %v1055
    %v1130 = vpop.permute.xlu0 %1129
    %1133 = vset.pattern.permute.xlu0 0
    %1134 = vperm.xlu0 %1133, %v1056
    %v1135 = vpop.permute.xlu0 %1134
    %1138 = vset.pattern.permute.xlu0 0
    %1139 = vperm.xlu0 %1138, %v1057
    %v1140 = vpop.permute.xlu0 %1139
    %1143 = vset.pattern.permute.xlu0 0
    %1144 = vperm.xlu0 %1143, %v1058
    %v1145 = vpop.permute.xlu0 %1144
    %1148 = vset.pattern.permute.xlu0 0
    %1149 = vperm.xlu0 %1148, %v1059
    %v1150 = vpop.permute.xlu0 %1149
    %1153 = vset.pattern.permute.xlu0 0
    %1154 = vperm.xlu0 %1153, %v1060
    %v1155 = vpop.permute.xlu0 %1154
    %1158 = vset.pattern.permute.xlu0 0
    %1159 = vperm.xlu0 %1158, %v1061
    %v1160 = vpop.permute.xlu0 %1159
    %1163 = vset.pattern.permute.xlu0 0
    %1164 = vperm.xlu0 %1163, %v1062
    %v1165 = vpop.permute.xlu0 %1164
    %1168 = vset.pattern.permute.xlu0 0
    %1169 = vperm.xlu0 %1168, %v1063
    %v1170 = vpop.permute.xlu0 %1169
    %1173 = vset.pattern.permute.xlu0 0
    %1174 = vperm.xlu0 %1173, %v1064
    %v1175 = vpop.permute.xlu0 %1174
    %1178 = vset.pattern.permute.xlu0 0
    %1179 = vperm.xlu0 %1178, %v1065
    %v1180 = vpop.permute.xlu0 %1179
    %1183 = vset.pattern.permute.xlu0 0
    %1184 = vperm.xlu0 %1183, %v1066
    %v1185 = vpop.permute.xlu0 %1184
    %1188 = vset.pattern.permute.xlu0 0
    %1189 = vperm.xlu0 %1188, %v1067
    %v1190 = vpop.permute.xlu0 %1189
    %1193 = vset.pattern.permute.xlu0 0
    %1194 = vperm.xlu0 %1193, %v1068
    %v1195 = vpop.permute.xlu0 %1194
    %1198 = vset.pattern.permute.xlu0 0
    %1199 = vperm.xlu0 %1198, %v1069
    %v1200 = vpop.permute.xlu0 %1199
    %1203 = vset.pattern.permute.xlu0 0
    %1204 = vperm.xlu0 %1203, %v1070
    %v1205 = vpop.permute.xlu0 %1204
    %1208 = vset.pattern.permute.xlu0 0
    %1209 = vperm.xlu0 %1208, %v1071
    %v1210 = vpop.permute.xlu0 %1209
    %1213 = vset.pattern.permute.xlu0 0
    %1214 = vperm.xlu0 %1213, %v1072
    %v1215 = vpop.permute.xlu0 %1214
    %1218 = vset.pattern.permute.xlu0 0
    %1219 = vperm.xlu0 %1218, %v1073
    %v1220 = vpop.permute.xlu0 %1219
    %1223 = vset.pattern.permute.xlu0 0
    %1224 = vperm.xlu0 %1223, %v1074
    %v1225 = vpop.permute.xlu0 %1224
    %1228 = vset.pattern.permute.xlu0 0
    %1229 = vperm.xlu0 %1228, %v1075
    %v1230 = vpop.permute.xlu0 %1229
    %1233 = vset.pattern.permute.xlu0 0
    %1234 = vperm.xlu0 %1233, %v1076
    %v1235 = vpop.permute.xlu0 %1234
    %v1237 = vlaneseq
    %v1238 = vshrl.u32 %v1237, 7
    %v1239 = vsub.s32 4, %v1238
    %v1240 = vrot.slane %v132, %v1239
    %v1241 = vmul.f32 %v1080, %v1240
    %v1242 = vmul.f32 %v1085, %v1240
    %v1243 = vmul.f32 %v1090, %v1240
    %v1244 = vmul.f32 %v1095, %v1240
    %v1245 = vmul.f32 %v1100, %v1240
    %v1246 = vmul.f32 %v1105, %v1240
    %v1247 = vmul.f32 %v1110, %v1240
    %v1248 = vmul.f32 %v1115, %v1240
    %v1249 = vmul.f32 %v1120, %v1240
    %v1250 = vmul.f32 %v1125, %v1240
    %v1251 = vmul.f32 %v1130, %v1240
    %v1252 = vmul.f32 %v1135, %v1240
    %v1253 = vmul.f32 %v1140, %v1240
    %v1254 = vmul.f32 %v1145, %v1240
    %v1255 = vmul.f32 %v1150, %v1240
    %v1256 = vmul.f32 %v1155, %v1240
    %v1257 = vmul.f32 %v1160, %v1240
    %v1258 = vmul.f32 %v1165, %v1240
    %v1259 = vmul.f32 %v1170, %v1240
    %v1260 = vmul.f32 %v1175, %v1240
    %v1261 = vmul.f32 %v1180, %v1240
    %v1262 = vmul.f32 %v1185, %v1240
    %v1263 = vmul.f32 %v1190, %v1240
    %v1264 = vmul.f32 %v1195, %v1240
    %v1265 = vmul.f32 %v1200, %v1240
    %v1266 = vmul.f32 %v1205, %v1240
    %v1267 = vmul.f32 %v1210, %v1240
    %v1268 = vmul.f32 %v1215, %v1240
    %v1269 = vmul.f32 %v1220, %v1240
    %v1270 = vmul.f32 %v1225, %v1240
    %v1271 = vmul.f32 %v1230, %v1240
    %v1272 = vmul.f32 %v1235, %v1240
    %v1273 = vadd.f32 %v1013, %v1241
    %v1274 = vadd.f32 %v1014, %v1242
    %v1275 = vadd.f32 %v1015, %v1243
    %v1276 = vadd.f32 %v1016, %v1244
    %v1277 = vadd.f32 %v1017, %v1245
    %v1278 = vadd.f32 %v1018, %v1246
    %v1279 = vadd.f32 %v1019, %v1247
    %v1280 = vadd.f32 %v1020, %v1248
    %v1281 = vadd.f32 %v1021, %v1249
    %v1282 = vadd.f32 %v1022, %v1250
    %v1283 = vadd.f32 %v1023, %v1251
    %v1284 = vadd.f32 %v1024, %v1252
    %v1285 = vadd.f32 %v1025, %v1253
    %v1286 = vadd.f32 %v1026, %v1254
    %v1287 = vadd.f32 %v1027, %v1255
    %v1288 = vadd.f32 %v1028, %v1256
    %v1289 = vadd.f32 %v1029, %v1257
    %v1290 = vadd.f32 %v1030, %v1258
    %v1291 = vadd.f32 %v1031, %v1259
    %v1292 = vadd.f32 %v1032, %v1260
    %v1293 = vadd.f32 %v1033, %v1261
    %v1294 = vadd.f32 %v1034, %v1262
    %v1295 = vadd.f32 %v1035, %v1263
    %v1296 = vadd.f32 %v1036, %v1264
    %v1297 = vadd.f32 %v1037, %v1265
    %v1298 = vadd.f32 %v1038, %v1266
    %v1299 = vadd.f32 %v1039, %v1267
    %v1300 = vadd.f32 %v1040, %v1268
    %v1301 = vadd.f32 %v1041, %v1269
    %v1302 = vadd.f32 %v1042, %v1270
    %v1303 = vadd.f32 %v1043, %v1271
    %v1304 = vadd.f32 %v1044, %v1272
    %1305 = vset.pattern.permute.xlu0 1
    %1306 = vperm.xlu0 %1305, %v1045
    %v1307 = vpop.permute.xlu0 %1306
    %1309 = vset.pattern.permute.xlu0 1
    %1310 = vperm.xlu0 %1309, %v1046
    %v1311 = vpop.permute.xlu0 %1310
    %1313 = vset.pattern.permute.xlu0 1
    %1314 = vperm.xlu0 %1313, %v1047
    %v1315 = vpop.permute.xlu0 %1314
    %1317 = vset.pattern.permute.xlu0 1
    %1318 = vperm.xlu0 %1317, %v1048
    %v1319 = vpop.permute.xlu0 %1318
    %1321 = vset.pattern.permute.xlu0 1
    %1322 = vperm.xlu0 %1321, %v1049
    %v1323 = vpop.permute.xlu0 %1322
    %1325 = vset.pattern.permute.xlu0 1
    %1326 = vperm.xlu0 %1325, %v1050
    %v1327 = vpop.permute.xlu0 %1326
    %1329 = vset.pattern.permute.xlu0 1
    %1330 = vperm.xlu0 %1329, %v1051
    %v1331 = vpop.permute.xlu0 %1330
    %1333 = vset.pattern.permute.xlu0 1
    %1334 = vperm.xlu0 %1333, %v1052
    %v1335 = vpop.permute.xlu0 %1334
    %1337 = vset.pattern.permute.xlu0 1
    %1338 = vperm.xlu0 %1337, %v1053
    %v1339 = vpop.permute.xlu0 %1338
    %1341 = vset.pattern.permute.xlu0 1
    %1342 = vperm.xlu0 %1341, %v1054
    %v1343 = vpop.permute.xlu0 %1342
    %1345 = vset.pattern.permute.xlu0 1
    %1346 = vperm.xlu0 %1345, %v1055
    %v1347 = vpop.permute.xlu0 %1346
    %1349 = vset.pattern.permute.xlu0 1
    %1350 = vperm.xlu0 %1349, %v1056
    %v1351 = vpop.permute.xlu0 %1350
    %1353 = vset.pattern.permute.xlu0 1
    %1354 = vperm.xlu0 %1353, %v1057
    %v1355 = vpop.permute.xlu0 %1354
    %1357 = vset.pattern.permute.xlu0 1
    %1358 = vperm.xlu0 %1357, %v1058
    %v1359 = vpop.permute.xlu0 %1358
    %1361 = vset.pattern.permute.xlu0 1
    %1362 = vperm.xlu0 %1361, %v1059
    %v1363 = vpop.permute.xlu0 %1362
    %1365 = vset.pattern.permute.xlu0 1
    %1366 = vperm.xlu0 %1365, %v1060
    %v1367 = vpop.permute.xlu0 %1366
    %1369 = vset.pattern.permute.xlu0 1
    %1370 = vperm.xlu0 %1369, %v1061
    %v1371 = vpop.permute.xlu0 %1370
    %1373 = vset.pattern.permute.xlu0 1
    %1374 = vperm.xlu0 %1373, %v1062
    %v1375 = vpop.permute.xlu0 %1374
    %1377 = vset.pattern.permute.xlu0 1
    %1378 = vperm.xlu0 %1377, %v1063
    %v1379 = vpop.permute.xlu0 %1378
    %1381 = vset.pattern.permute.xlu0 1
    %1382 = vperm.xlu0 %1381, %v1064
    %v1383 = vpop.permute.xlu0 %1382
    %1385 = vset.pattern.permute.xlu0 1
    %1386 = vperm.xlu0 %1385, %v1065
    %v1387 = vpop.permute.xlu0 %1386
    %1389 = vset.pattern.permute.xlu0 1
    %1390 = vperm.xlu0 %1389, %v1066
    %v1391 = vpop.permute.xlu0 %1390
    %1393 = vset.pattern.permute.xlu0 1
    %1394 = vperm.xlu0 %1393, %v1067
    %v1395 = vpop.permute.xlu0 %1394
    %1397 = vset.pattern.permute.xlu0 1
    %1398 = vperm.xlu0 %1397, %v1068
    %v1399 = vpop.permute.xlu0 %1398
    %1401 = vset.pattern.permute.xlu0 1
    %1402 = vperm.xlu0 %1401, %v1069
    %v1403 = vpop.permute.xlu0 %1402
    %1405 = vset.pattern.permute.xlu0 1
    %1406 = vperm.xlu0 %1405, %v1070
    %v1407 = vpop.permute.xlu0 %1406
    %1409 = vset.pattern.permute.xlu0 1
    %1410 = vperm.xlu0 %1409, %v1071
    %v1411 = vpop.permute.xlu0 %1410
    %1413 = vset.pattern.permute.xlu0 1
    %1414 = vperm.xlu0 %1413, %v1072
    %v1415 = vpop.permute.xlu0 %1414
    %1417 = vset.pattern.permute.xlu0 1
    %1418 = vperm.xlu0 %1417, %v1073
    %v1419 = vpop.permute.xlu0 %1418
    %1421 = vset.pattern.permute.xlu0 1
    %1422 = vperm.xlu0 %1421, %v1074
    %v1423 = vpop.permute.xlu0 %1422
    %1425 = vset.pattern.permute.xlu0 1
    %1426 = vperm.xlu0 %1425, %v1075
    %v1427 = vpop.permute.xlu0 %1426
    %1429 = vset.pattern.permute.xlu0 1
    %1430 = vperm.xlu0 %1429, %v1076
    %v1431 = vpop.permute.xlu0 %1430
    %v1433 = vlaneseq
    %v1434 = vshrl.u32 %v1433, 7
    %v1435 = vsub.s32 5, %v1434
    %v1436 = vrot.slane %v132, %v1435
    %v1437 = vmul.f32 %v1307, %v1436
    %v1438 = vmul.f32 %v1311, %v1436
    %v1439 = vmul.f32 %v1315, %v1436
    %v1440 = vmul.f32 %v1319, %v1436
    %v1441 = vmul.f32 %v1323, %v1436
    %v1442 = vmul.f32 %v1327, %v1436
    %v1443 = vmul.f32 %v1331, %v1436
    %v1444 = vmul.f32 %v1335, %v1436
    %v1445 = vmul.f32 %v1339, %v1436
    %v1446 = vmul.f32 %v1343, %v1436
    %v1447 = vmul.f32 %v1347, %v1436
    %v1448 = vmul.f32 %v1351, %v1436
    %v1449 = vmul.f32 %v1355, %v1436
    %v1450 = vmul.f32 %v1359, %v1436
    %v1451 = vmul.f32 %v1363, %v1436
    %v1452 = vmul.f32 %v1367, %v1436
    %v1453 = vmul.f32 %v1371, %v1436
    %v1454 = vmul.f32 %v1375, %v1436
    %v1455 = vmul.f32 %v1379, %v1436
    %v1456 = vmul.f32 %v1383, %v1436
    %v1457 = vmul.f32 %v1387, %v1436
    %v1458 = vmul.f32 %v1391, %v1436
    %v1459 = vmul.f32 %v1395, %v1436
    %v1460 = vmul.f32 %v1399, %v1436
    %v1461 = vmul.f32 %v1403, %v1436
    %v1462 = vmul.f32 %v1407, %v1436
    %v1463 = vmul.f32 %v1411, %v1436
    %v1464 = vmul.f32 %v1415, %v1436
    %v1465 = vmul.f32 %v1419, %v1436
    %v1466 = vmul.f32 %v1423, %v1436
    %v1467 = vmul.f32 %v1427, %v1436
    %v1468 = vmul.f32 %v1431, %v1436
    %v1469 = vadd.f32 %v1273, %v1437
    %v1470 = vadd.f32 %v1274, %v1438
    %v1471 = vadd.f32 %v1275, %v1439
    %v1472 = vadd.f32 %v1276, %v1440
    %v1473 = vadd.f32 %v1277, %v1441
    %v1474 = vadd.f32 %v1278, %v1442
    %v1475 = vadd.f32 %v1279, %v1443
    %v1476 = vadd.f32 %v1280, %v1444
    %v1477 = vadd.f32 %v1281, %v1445
    %v1478 = vadd.f32 %v1282, %v1446
    %v1479 = vadd.f32 %v1283, %v1447
    %v1480 = vadd.f32 %v1284, %v1448
    %v1481 = vadd.f32 %v1285, %v1449
    %v1482 = vadd.f32 %v1286, %v1450
    %v1483 = vadd.f32 %v1287, %v1451
    %v1484 = vadd.f32 %v1288, %v1452
    %v1485 = vadd.f32 %v1289, %v1453
    %v1486 = vadd.f32 %v1290, %v1454
    %v1487 = vadd.f32 %v1291, %v1455
    %v1488 = vadd.f32 %v1292, %v1456
    %v1489 = vadd.f32 %v1293, %v1457
    %v1490 = vadd.f32 %v1294, %v1458
    %v1491 = vadd.f32 %v1295, %v1459
    %v1492 = vadd.f32 %v1296, %v1460
    %v1493 = vadd.f32 %v1297, %v1461
    %v1494 = vadd.f32 %v1298, %v1462
    %v1495 = vadd.f32 %v1299, %v1463
    %v1496 = vadd.f32 %v1300, %v1464
    %v1497 = vadd.f32 %v1301, %v1465
    %v1498 = vadd.f32 %v1302, %v1466
    %v1499 = vadd.f32 %v1303, %v1467
    %v1500 = vadd.f32 %v1304, %v1468
    %v1533 = vcombine.high %v1469, %v1469
    %v1535 = vunpack.c.l.s4 1983009808
    %v1536 = vunpack.c.0.s8 %v1535
    %v1537 = vlaneseq
    %v1538 = vshrl.u32 %v1537, 7
    %v1539 = vsub.s32 %v1536, %v1538
    %v1540 = vrot.slane %v1469, %v1539
    %v1542 = vunpack.c.l.s4 1983009808
    %v1543 = vunpack.c.0.s8 %v1542
    %v1544 = vlaneseq
    %v1545 = vshrl.u32 %v1544, 7
    %v1546 = vsub.s32 %v1543, %v1545
    %v1547 = vrot.slane %v1533, %v1546
    %v1548 = vcombine.high %v1540, %v1540
    %v1549 = vcombine.high %v1547, %v1547
    %v1550 = vcombine.high %v1470, %v1470
    %v1552 = vunpack.c.l.s4 1983009808
    %v1553 = vunpack.c.0.s8 %v1552
    %v1554 = vlaneseq
    %v1555 = vshrl.u32 %v1554, 7
    %v1556 = vsub.s32 %v1553, %v1555
    %v1557 = vrot.slane %v1470, %v1556
    %v1559 = vunpack.c.l.s4 1983009808
    %v1560 = vunpack.c.0.s8 %v1559
    %v1561 = vlaneseq
    %v1562 = vshrl.u32 %v1561, 7
    %v1563 = vsub.s32 %v1560, %v1562
    %v1564 = vrot.slane %v1550, %v1563
    %v1565 = vcombine.high %v1557, %v1557
    %v1566 = vcombine.high %v1564, %v1564
    %v1567 = vcombine.high %v1471, %v1471
    %v1569 = vunpack.c.l.s4 1983009808
    %v1570 = vunpack.c.0.s8 %v1569
    %v1571 = vlaneseq
    %v1572 = vshrl.u32 %v1571, 7
    %v1573 = vsub.s32 %v1570, %v1572
    %v1574 = vrot.slane %v1471, %v1573
    %v1576 = vunpack.c.l.s4 1983009808
    %v1577 = vunpack.c.0.s8 %v1576
    %v1578 = vlaneseq
    %v1579 = vshrl.u32 %v1578, 7
    %v1580 = vsub.s32 %v1577, %v1579
    %v1581 = vrot.slane %v1567, %v1580
    %v1582 = vcombine.high %v1574, %v1574
    %v1583 = vcombine.high %v1581, %v1581
    %v1584 = vcombine.high %v1472, %v1472
    %v1586 = vunpack.c.l.s4 1983009808
    %v1587 = vunpack.c.0.s8 %v1586
    %v1588 = vlaneseq
    %v1589 = vshrl.u32 %v1588, 7
    %v1590 = vsub.s32 %v1587, %v1589
    %v1591 = vrot.slane %v1472, %v1590
    %v1593 = vunpack.c.l.s4 1983009808
    %v1594 = vunpack.c.0.s8 %v1593
    %v1595 = vlaneseq
    %v1596 = vshrl.u32 %v1595, 7
    %v1597 = vsub.s32 %v1594, %v1596
    %v1598 = vrot.slane %v1584, %v1597
    %v1599 = vcombine.high %v1591, %v1591
    %v1600 = vcombine.high %v1598, %v1598
    %v1601 = vcombine.high %v1473, %v1473
    %v1603 = vunpack.c.l.s4 1983009808
    %v1604 = vunpack.c.0.s8 %v1603
    %v1605 = vlaneseq
    %v1606 = vshrl.u32 %v1605, 7
    %v1607 = vsub.s32 %v1604, %v1606
    %v1608 = vrot.slane %v1473, %v1607
    %v1610 = vunpack.c.l.s4 1983009808
    %v1611 = vunpack.c.0.s8 %v1610
    %v1612 = vlaneseq
    %v1613 = vshrl.u32 %v1612, 7
    %v1614 = vsub.s32 %v1611, %v1613
    %v1615 = vrot.slane %v1601, %v1614
    %v1616 = vcombine.high %v1608, %v1608
    %v1617 = vcombine.high %v1615, %v1615
    %v1618 = vcombine.high %v1474, %v1474
    %v1620 = vunpack.c.l.s4 1983009808
    %v1621 = vunpack.c.0.s8 %v1620
    %v1622 = vlaneseq
    %v1623 = vshrl.u32 %v1622, 7
    %v1624 = vsub.s32 %v1621, %v1623
    %v1625 = vrot.slane %v1474, %v1624
    %v1627 = vunpack.c.l.s4 1983009808
    %v1628 = vunpack.c.0.s8 %v1627
    %v1629 = vlaneseq
    %v1630 = vshrl.u32 %v1629, 7
    %v1631 = vsub.s32 %v1628, %v1630
    %v1632 = vrot.slane %v1618, %v1631
    %v1633 = vcombine.high %v1625, %v1625
    %v1634 = vcombine.high %v1632, %v1632
    %v1635 = vcombine.high %v1475, %v1475
    %v1637 = vunpack.c.l.s4 1983009808
    %v1638 = vunpack.c.0.s8 %v1637
    %v1639 = vlaneseq
    %v1640 = vshrl.u32 %v1639, 7
    %v1641 = vsub.s32 %v1638, %v1640
    %v1642 = vrot.slane %v1475, %v1641
    %v1644 = vunpack.c.l.s4 1983009808
    %v1645 = vunpack.c.0.s8 %v1644
    %v1646 = vlaneseq
    %v1647 = vshrl.u32 %v1646, 7
    %v1648 = vsub.s32 %v1645, %v1647
    %v1649 = vrot.slane %v1635, %v1648
    %v1650 = vcombine.high %v1642, %v1642
    %v1651 = vcombine.high %v1649, %v1649
    %v1652 = vcombine.high %v1476, %v1476
    %v1654 = vunpack.c.l.s4 1983009808
    %v1655 = vunpack.c.0.s8 %v1654
    %v1656 = vlaneseq
    %v1657 = vshrl.u32 %v1656, 7
    %v1658 = vsub.s32 %v1655, %v1657
    %v1659 = vrot.slane %v1476, %v1658
    %v1661 = vunpack.c.l.s4 1983009808
    %v1662 = vunpack.c.0.s8 %v1661
    %v1663 = vlaneseq
    %v1664 = vshrl.u32 %v1663, 7
    %v1665 = vsub.s32 %v1662, %v1664
    %v1666 = vrot.slane %v1652, %v1665
    %v1667 = vcombine.high %v1659, %v1659
    %v1668 = vcombine.high %v1666, %v1666
    %v1669 = vcombine.high %v1477, %v1477
    %v1671 = vunpack.c.l.s4 1983009808
    %v1672 = vunpack.c.0.s8 %v1671
    %v1673 = vlaneseq
    %v1674 = vshrl.u32 %v1673, 7
    %v1675 = vsub.s32 %v1672, %v1674
    %v1676 = vrot.slane %v1477, %v1675
    %v1678 = vunpack.c.l.s4 1983009808
    %v1679 = vunpack.c.0.s8 %v1678
    %v1680 = vlaneseq
    %v1681 = vshrl.u32 %v1680, 7
    %v1682 = vsub.s32 %v1679, %v1681
    %v1683 = vrot.slane %v1669, %v1682
    %v1684 = vcombine.high %v1676, %v1676
    %v1685 = vcombine.high %v1683, %v1683
    %v1686 = vcombine.high %v1478, %v1478
    %v1688 = vunpack.c.l.s4 1983009808
    %v1689 = vunpack.c.0.s8 %v1688
    %v1690 = vlaneseq
    %v1691 = vshrl.u32 %v1690, 7
    %v1692 = vsub.s32 %v1689, %v1691
    %v1693 = vrot.slane %v1478, %v1692
    %v1695 = vunpack.c.l.s4 1983009808
    %v1696 = vunpack.c.0.s8 %v1695
    %v1697 = vlaneseq
    %v1698 = vshrl.u32 %v1697, 7
    %v1699 = vsub.s32 %v1696, %v1698
    %v1700 = vrot.slane %v1686, %v1699
    %v1701 = vcombine.high %v1693, %v1693
    %v1702 = vcombine.high %v1700, %v1700
    %v1703 = vcombine.high %v1479, %v1479
    %v1705 = vunpack.c.l.s4 1983009808
    %v1706 = vunpack.c.0.s8 %v1705
    %v1707 = vlaneseq
    %v1708 = vshrl.u32 %v1707, 7
    %v1709 = vsub.s32 %v1706, %v1708
    %v1710 = vrot.slane %v1479, %v1709
    %v1712 = vunpack.c.l.s4 1983009808
    %v1713 = vunpack.c.0.s8 %v1712
    %v1714 = vlaneseq
    %v1715 = vshrl.u32 %v1714, 7
    %v1716 = vsub.s32 %v1713, %v1715
    %v1717 = vrot.slane %v1703, %v1716
    %v1718 = vcombine.high %v1710, %v1710
    %v1719 = vcombine.high %v1717, %v1717
    %v1720 = vcombine.high %v1480, %v1480
    %v1722 = vunpack.c.l.s4 1983009808
    %v1723 = vunpack.c.0.s8 %v1722
    %v1724 = vlaneseq
    %v1725 = vshrl.u32 %v1724, 7
    %v1726 = vsub.s32 %v1723, %v1725
    %v1727 = vrot.slane %v1480, %v1726
    %v1729 = vunpack.c.l.s4 1983009808
    %v1730 = vunpack.c.0.s8 %v1729
    %v1731 = vlaneseq
    %v1732 = vshrl.u32 %v1731, 7
    %v1733 = vsub.s32 %v1730, %v1732
    %v1734 = vrot.slane %v1720, %v1733
    %v1735 = vcombine.high %v1727, %v1727
    %v1736 = vcombine.high %v1734, %v1734
    %v1737 = vcombine.high %v1481, %v1481
    %v1739 = vunpack.c.l.s4 1983009808
    %v1740 = vunpack.c.0.s8 %v1739
    %v1741 = vlaneseq
    %v1742 = vshrl.u32 %v1741, 7
    %v1743 = vsub.s32 %v1740, %v1742
    %v1744 = vrot.slane %v1481, %v1743
    %v1746 = vunpack.c.l.s4 1983009808
    %v1747 = vunpack.c.0.s8 %v1746
    %v1748 = vlaneseq
    %v1749 = vshrl.u32 %v1748, 7
    %v1750 = vsub.s32 %v1747, %v1749
    %v1751 = vrot.slane %v1737, %v1750
    %v1752 = vcombine.high %v1744, %v1744
    %v1753 = vcombine.high %v1751, %v1751
    %v1754 = vcombine.high %v1482, %v1482
    %v1756 = vunpack.c.l.s4 1983009808
    %v1757 = vunpack.c.0.s8 %v1756
    %v1758 = vlaneseq
    %v1759 = vshrl.u32 %v1758, 7
    %v1760 = vsub.s32 %v1757, %v1759
    %v1761 = vrot.slane %v1482, %v1760
    %v1763 = vunpack.c.l.s4 1983009808
    %v1764 = vunpack.c.0.s8 %v1763
    %v1765 = vlaneseq
    %v1766 = vshrl.u32 %v1765, 7
    %v1767 = vsub.s32 %v1764, %v1766
    %v1768 = vrot.slane %v1754, %v1767
    %v1769 = vcombine.high %v1761, %v1761
    %v1770 = vcombine.high %v1768, %v1768
    %v1771 = vcombine.high %v1483, %v1483
    %v1773 = vunpack.c.l.s4 1983009808
    %v1774 = vunpack.c.0.s8 %v1773
    %v1775 = vlaneseq
    %v1776 = vshrl.u32 %v1775, 7
    %v1777 = vsub.s32 %v1774, %v1776
    %v1778 = vrot.slane %v1483, %v1777
    %v1780 = vunpack.c.l.s4 1983009808
    %v1781 = vunpack.c.0.s8 %v1780
    %v1782 = vlaneseq
    %v1783 = vshrl.u32 %v1782, 7
    %v1784 = vsub.s32 %v1781, %v1783
    %v1785 = vrot.slane %v1771, %v1784
    %v1786 = vcombine.high %v1778, %v1778
    %v1787 = vcombine.high %v1785, %v1785
    %v1788 = vcombine.high %v1484, %v1484
    %v1790 = vunpack.c.l.s4 1983009808
    %v1791 = vunpack.c.0.s8 %v1790
    %v1792 = vlaneseq
    %v1793 = vshrl.u32 %v1792, 7
    %v1794 = vsub.s32 %v1791, %v1793
    %v1795 = vrot.slane %v1484, %v1794
    %v1797 = vunpack.c.l.s4 1983009808
    %v1798 = vunpack.c.0.s8 %v1797
    %v1799 = vlaneseq
    %v1800 = vshrl.u32 %v1799, 7
    %v1801 = vsub.s32 %v1798, %v1800
    %v1802 = vrot.slane %v1788, %v1801
    %v1803 = vcombine.high %v1795, %v1795
    %v1804 = vcombine.high %v1802, %v1802
    %v1805 = vcombine.high %v1485, %v1485
    %v1807 = vunpack.c.l.s4 1983009808
    %v1808 = vunpack.c.0.s8 %v1807
    %v1809 = vlaneseq
    %v1810 = vshrl.u32 %v1809, 7
    %v1811 = vsub.s32 %v1808, %v1810
    %v1812 = vrot.slane %v1485, %v1811
    %v1814 = vunpack.c.l.s4 1983009808
    %v1815 = vunpack.c.0.s8 %v1814
    %v1816 = vlaneseq
    %v1817 = vshrl.u32 %v1816, 7
    %v1818 = vsub.s32 %v1815, %v1817
    %v1819 = vrot.slane %v1805, %v1818
    %v1820 = vcombine.high %v1812, %v1812
    %v1821 = vcombine.high %v1819, %v1819
    %v1822 = vcombine.high %v1486, %v1486
    %v1824 = vunpack.c.l.s4 1983009808
    %v1825 = vunpack.c.0.s8 %v1824
    %v1826 = vlaneseq
    %v1827 = vshrl.u32 %v1826, 7
    %v1828 = vsub.s32 %v1825, %v1827
    %v1829 = vrot.slane %v1486, %v1828
    %v1831 = vunpack.c.l.s4 1983009808
    %v1832 = vunpack.c.0.s8 %v1831
    %v1833 = vlaneseq
    %v1834 = vshrl.u32 %v1833, 7
    %v1835 = vsub.s32 %v1832, %v1834
    %v1836 = vrot.slane %v1822, %v1835
    %v1837 = vcombine.high %v1829, %v1829
    %v1838 = vcombine.high %v1836, %v1836
    %v1839 = vcombine.high %v1487, %v1487
    %v1841 = vunpack.c.l.s4 1983009808
    %v1842 = vunpack.c.0.s8 %v1841
    %v1843 = vlaneseq
    %v1844 = vshrl.u32 %v1843, 7
    %v1845 = vsub.s32 %v1842, %v1844
    %v1846 = vrot.slane %v1487, %v1845
    %v1848 = vunpack.c.l.s4 1983009808
    %v1849 = vunpack.c.0.s8 %v1848
    %v1850 = vlaneseq
    %v1851 = vshrl.u32 %v1850, 7
    %v1852 = vsub.s32 %v1849, %v1851
    %v1853 = vrot.slane %v1839, %v1852
    %v1854 = vcombine.high %v1846, %v1846
    %v1855 = vcombine.high %v1853, %v1853
    %v1856 = vcombine.high %v1488, %v1488
    %v1858 = vunpack.c.l.s4 1983009808
    %v1859 = vunpack.c.0.s8 %v1858
    %v1860 = vlaneseq
    %v1861 = vshrl.u32 %v1860, 7
    %v1862 = vsub.s32 %v1859, %v1861
    %v1863 = vrot.slane %v1488, %v1862
    %v1865 = vunpack.c.l.s4 1983009808
    %v1866 = vunpack.c.0.s8 %v1865
    %v1867 = vlaneseq
    %v1868 = vshrl.u32 %v1867, 7
    %v1869 = vsub.s32 %v1866, %v1868
    %v1870 = vrot.slane %v1856, %v1869
    %v1871 = vcombine.high %v1863, %v1863
    %v1872 = vcombine.high %v1870, %v1870
    %v1873 = vcombine.high %v1489, %v1489
    %v1875 = vunpack.c.l.s4 1983009808
    %v1876 = vunpack.c.0.s8 %v1875
    %v1877 = vlaneseq
    %v1878 = vshrl.u32 %v1877, 7
    %v1879 = vsub.s32 %v1876, %v1878
    %v1880 = vrot.slane %v1489, %v1879
    %v1882 = vunpack.c.l.s4 1983009808
    %v1883 = vunpack.c.0.s8 %v1882
    %v1884 = vlaneseq
    %v1885 = vshrl.u32 %v1884, 7
    %v1886 = vsub.s32 %v1883, %v1885
    %v1887 = vrot.slane %v1873, %v1886
    %v1888 = vcombine.high %v1880, %v1880
    %v1889 = vcombine.high %v1887, %v1887
    %v1890 = vcombine.high %v1490, %v1490
    %v1892 = vunpack.c.l.s4 1983009808
    %v1893 = vunpack.c.0.s8 %v1892
    %v1894 = vlaneseq
    %v1895 = vshrl.u32 %v1894, 7
    %v1896 = vsub.s32 %v1893, %v1895
    %v1897 = vrot.slane %v1490, %v1896
    %v1899 = vunpack.c.l.s4 1983009808
    %v1900 = vunpack.c.0.s8 %v1899
    %v1901 = vlaneseq
    %v1902 = vshrl.u32 %v1901, 7
    %v1903 = vsub.s32 %v1900, %v1902
    %v1904 = vrot.slane %v1890, %v1903
    %v1905 = vcombine.high %v1897, %v1897
    %v1906 = vcombine.high %v1904, %v1904
    %v1907 = vcombine.high %v1491, %v1491
    %v1909 = vunpack.c.l.s4 1983009808
    %v1910 = vunpack.c.0.s8 %v1909
    %v1911 = vlaneseq
    %v1912 = vshrl.u32 %v1911, 7
    %v1913 = vsub.s32 %v1910, %v1912
    %v1914 = vrot.slane %v1491, %v1913
    %v1916 = vunpack.c.l.s4 1983009808
    %v1917 = vunpack.c.0.s8 %v1916
    %v1918 = vlaneseq
    %v1919 = vshrl.u32 %v1918, 7
    %v1920 = vsub.s32 %v1917, %v1919
    %v1921 = vrot.slane %v1907, %v1920
    %v1922 = vcombine.high %v1914, %v1914
    %v1923 = vcombine.high %v1921, %v1921
    %v1924 = vcombine.high %v1492, %v1492
    %v1926 = vunpack.c.l.s4 1983009808
    %v1927 = vunpack.c.0.s8 %v1926
    %v1928 = vlaneseq
    %v1929 = vshrl.u32 %v1928, 7
    %v1930 = vsub.s32 %v1927, %v1929
    %v1931 = vrot.slane %v1492, %v1930
    %v1933 = vunpack.c.l.s4 1983009808
    %v1934 = vunpack.c.0.s8 %v1933
    %v1935 = vlaneseq
    %v1936 = vshrl.u32 %v1935, 7
    %v1937 = vsub.s32 %v1934, %v1936
    %v1938 = vrot.slane %v1924, %v1937
    %v1939 = vcombine.high %v1931, %v1931
    %v1940 = vcombine.high %v1938, %v1938
    %v1941 = vcombine.high %v1493, %v1493
    %v1943 = vunpack.c.l.s4 1983009808
    %v1944 = vunpack.c.0.s8 %v1943
    %v1945 = vlaneseq
    %v1946 = vshrl.u32 %v1945, 7
    %v1947 = vsub.s32 %v1944, %v1946
    %v1948 = vrot.slane %v1493, %v1947
    %v1950 = vunpack.c.l.s4 1983009808
    %v1951 = vunpack.c.0.s8 %v1950
    %v1952 = vlaneseq
    %v1953 = vshrl.u32 %v1952, 7
    %v1954 = vsub.s32 %v1951, %v1953
    %v1955 = vrot.slane %v1941, %v1954
    %v1956 = vcombine.high %v1948, %v1948
    %v1957 = vcombine.high %v1955, %v1955
    %v1958 = vcombine.high %v1494, %v1494
    %v1960 = vunpack.c.l.s4 1983009808
    %v1961 = vunpack.c.0.s8 %v1960
    %v1962 = vlaneseq
    %v1963 = vshrl.u32 %v1962, 7
    %v1964 = vsub.s32 %v1961, %v1963
    %v1965 = vrot.slane %v1494, %v1964
    %v1967 = vunpack.c.l.s4 1983009808
    %v1968 = vunpack.c.0.s8 %v1967
    %v1969 = vlaneseq
    %v1970 = vshrl.u32 %v1969, 7
    %v1971 = vsub.s32 %v1968, %v1970
    %v1972 = vrot.slane %v1958, %v1971
    %v1973 = vcombine.high %v1965, %v1965
    %v1974 = vcombine.high %v1972, %v1972
    %v1975 = vcombine.high %v1495, %v1495
    %v1977 = vunpack.c.l.s4 1983009808
    %v1978 = vunpack.c.0.s8 %v1977
    %v1979 = vlaneseq
    %v1980 = vshrl.u32 %v1979, 7
    %v1981 = vsub.s32 %v1978, %v1980
    %v1982 = vrot.slane %v1495, %v1981
    %v1984 = vunpack.c.l.s4 1983009808
    %v1985 = vunpack.c.0.s8 %v1984
    %v1986 = vlaneseq
    %v1987 = vshrl.u32 %v1986, 7
    %v1988 = vsub.s32 %v1985, %v1987
    %v1989 = vrot.slane %v1975, %v1988
    %v1990 = vcombine.high %v1982, %v1982
    %v1991 = vcombine.high %v1989, %v1989
    %v1992 = vcombine.high %v1496, %v1496
    %v1994 = vunpack.c.l.s4 1983009808
    %v1995 = vunpack.c.0.s8 %v1994
    %v1996 = vlaneseq
    %v1997 = vshrl.u32 %v1996, 7
    %v1998 = vsub.s32 %v1995, %v1997
    %v1999 = vrot.slane %v1496, %v1998
    %v2001 = vunpack.c.l.s4 1983009808
    %v2002 = vunpack.c.0.s8 %v2001
    %v2003 = vlaneseq
    %v2004 = vshrl.u32 %v2003, 7
    %v2005 = vsub.s32 %v2002, %v2004
    %v2006 = vrot.slane %v1992, %v2005
    %v2007 = vcombine.high %v1999, %v1999
    %v2008 = vcombine.high %v2006, %v2006
    %v2009 = vcombine.high %v1497, %v1497
    %v2011 = vunpack.c.l.s4 1983009808
    %v2012 = vunpack.c.0.s8 %v2011
    %v2013 = vlaneseq
    %v2014 = vshrl.u32 %v2013, 7
    %v2015 = vsub.s32 %v2012, %v2014
    %v2016 = vrot.slane %v1497, %v2015
    %v2018 = vunpack.c.l.s4 1983009808
    %v2019 = vunpack.c.0.s8 %v2018
    %v2020 = vlaneseq
    %v2021 = vshrl.u32 %v2020, 7
    %v2022 = vsub.s32 %v2019, %v2021
    %v2023 = vrot.slane %v2009, %v2022
    %v2024 = vcombine.high %v2016, %v2016
    %v2025 = vcombine.high %v2023, %v2023
    %v2026 = vcombine.high %v1498, %v1498
    %v2028 = vunpack.c.l.s4 1983009808
    %v2029 = vunpack.c.0.s8 %v2028
    %v2030 = vlaneseq
    %v2031 = vshrl.u32 %v2030, 7
    %v2032 = vsub.s32 %v2029, %v2031
    %v2033 = vrot.slane %v1498, %v2032
    %v2035 = vunpack.c.l.s4 1983009808
    %v2036 = vunpack.c.0.s8 %v2035
    %v2037 = vlaneseq
    %v2038 = vshrl.u32 %v2037, 7
    %v2039 = vsub.s32 %v2036, %v2038
    %v2040 = vrot.slane %v2026, %v2039
    %v2041 = vcombine.high %v2033, %v2033
    %v2042 = vcombine.high %v2040, %v2040
    %v2043 = vcombine.high %v1499, %v1499
    %v2045 = vunpack.c.l.s4 1983009808
    %v2046 = vunpack.c.0.s8 %v2045
    %v2047 = vlaneseq
    %v2048 = vshrl.u32 %v2047, 7
    %v2049 = vsub.s32 %v2046, %v2048
    %v2050 = vrot.slane %v1499, %v2049
    %v2052 = vunpack.c.l.s4 1983009808
    %v2053 = vunpack.c.0.s8 %v2052
    %v2054 = vlaneseq
    %v2055 = vshrl.u32 %v2054, 7
    %v2056 = vsub.s32 %v2053, %v2055
    %v2057 = vrot.slane %v2043, %v2056
    %v2058 = vcombine.high %v2050, %v2050
    %v2059 = vcombine.high %v2057, %v2057
    %v2060 = vcombine.high %v1500, %v1500
    %v2062 = vunpack.c.l.s4 1983009808
    %v2063 = vunpack.c.0.s8 %v2062
    %v2064 = vlaneseq
    %v2065 = vshrl.u32 %v2064, 7
    %v2066 = vsub.s32 %v2063, %v2065
    %v2067 = vrot.slane %v1500, %v2066
    %v2069 = vunpack.c.l.s4 1983009808
    %v2070 = vunpack.c.0.s8 %v2069
    %v2071 = vlaneseq
    %v2072 = vshrl.u32 %v2071, 7
    %v2073 = vsub.s32 %v2070, %v2072
    %v2074 = vrot.slane %v2060, %v2073
    %v2075 = vcombine.high %v2067, %v2067
    %v2076 = vcombine.high %v2074, %v2074
    %v2205 = vrot.slane %v1540, 7
    %v2206 = vrot.slane %v2205, 2
    %v2207 = vrot.slane %v1548, 7
    %v2208 = vrot.slane %v2207, 2
    %v2209 = vrot.slane %v1547, 7
    %v2210 = vrot.slane %v2209, 2
    %v2211 = vrot.slane %v1549, 7
    %v2212 = vrot.slane %v2211, 2
    %v2213 = vrot.slane %v1557, 7
    %v2214 = vrot.slane %v2213, 2
    %v2215 = vrot.slane %v1565, 7
    %v2216 = vrot.slane %v2215, 2
    %v2217 = vrot.slane %v1564, 7
    %v2218 = vrot.slane %v2217, 2
    %v2219 = vrot.slane %v1566, 7
    %v2220 = vrot.slane %v2219, 2
    %v2221 = vrot.slane %v1574, 7
    %v2222 = vrot.slane %v2221, 2
    %v2223 = vrot.slane %v1582, 7
    %v2224 = vrot.slane %v2223, 2
    %v2225 = vrot.slane %v1581, 7
    %v2226 = vrot.slane %v2225, 2
    %v2227 = vrot.slane %v1583, 7
    %v2228 = vrot.slane %v2227, 2
    %v2229 = vrot.slane %v1591, 7
    %v2230 = vrot.slane %v2229, 2
    %v2231 = vrot.slane %v1599, 7
    %v2232 = vrot.slane %v2231, 2
    %v2233 = vrot.slane %v1598, 7
    %v2234 = vrot.slane %v2233, 2
    %v2235 = vrot.slane %v1600, 7
    %v2236 = vrot.slane %v2235, 2
    %v2237 = vrot.slane %v1608, 7
    %v2238 = vrot.slane %v2237, 2
    %v2239 = vrot.slane %v1616, 7
    %v2240 = vrot.slane %v2239, 2
    %v2241 = vrot.slane %v1615, 7
    %v2242 = vrot.slane %v2241, 2
    %v2243 = vrot.slane %v1617, 7
    %v2244 = vrot.slane %v2243, 2
    %v2245 = vrot.slane %v1625, 7
    %v2246 = vrot.slane %v2245, 2
    %v2247 = vrot.slane %v1633, 7
    %v2248 = vrot.slane %v2247, 2
    %v2249 = vrot.slane %v1632, 7
    %v2250 = vrot.slane %v2249, 2
    %v2251 = vrot.slane %v1634, 7
    %v2252 = vrot.slane %v2251, 2
    %v2253 = vrot.slane %v1642, 7
    %v2254 = vrot.slane %v2253, 2
    %v2255 = vrot.slane %v1650, 7
    %v2256 = vrot.slane %v2255, 2
    %v2257 = vrot.slane %v1649, 7
    %v2258 = vrot.slane %v2257, 2
    %v2259 = vrot.slane %v1651, 7
    %v2260 = vrot.slane %v2259, 2
    %v2261 = vrot.slane %v1659, 7
    %v2262 = vrot.slane %v2261, 2
    %v2263 = vrot.slane %v1667, 7
    %v2264 = vrot.slane %v2263, 2
    %v2265 = vrot.slane %v1666, 7
    %v2266 = vrot.slane %v2265, 2
    %v2267 = vrot.slane %v1668, 7
    %v2268 = vrot.slane %v2267, 2
    %v2269 = vrot.slane %v1676, 7
    %v2270 = vrot.slane %v2269, 2
    %v2271 = vrot.slane %v1684, 7
    %v2272 = vrot.slane %v2271, 2
    %v2273 = vrot.slane %v1683, 7
    %v2274 = vrot.slane %v2273, 2
    %v2275 = vrot.slane %v1685, 7
    %v2276 = vrot.slane %v2275, 2
    %v2277 = vrot.slane %v1693, 7
    %v2278 = vrot.slane %v2277, 2
    %v2279 = vrot.slane %v1701, 7
    %v2280 = vrot.slane %v2279, 2
    %v2281 = vrot.slane %v1700, 7
    %v2282 = vrot.slane %v2281, 2
    %v2283 = vrot.slane %v1702, 7
    %v2284 = vrot.slane %v2283, 2
    %v2285 = vrot.slane %v1710, 7
    %v2286 = vrot.slane %v2285, 2
    %v2287 = vrot.slane %v1718, 7
    %v2288 = vrot.slane %v2287, 2
    %v2289 = vrot.slane %v1717, 7
    %v2290 = vrot.slane %v2289, 2
    %v2291 = vrot.slane %v1719, 7
    %v2292 = vrot.slane %v2291, 2
    %v2293 = vrot.slane %v1727, 7
    %v2294 = vrot.slane %v2293, 2
    %v2295 = vrot.slane %v1735, 7
    %v2296 = vrot.slane %v2295, 2
    %v2297 = vrot.slane %v1734, 7
    %v2298 = vrot.slane %v2297, 2
    %v2299 = vrot.slane %v1736, 7
    %v2300 = vrot.slane %v2299, 2
    %v2301 = vrot.slane %v1744, 7
    %v2302 = vrot.slane %v2301, 2
    %v2303 = vrot.slane %v1752, 7
    %v2304 = vrot.slane %v2303, 2
    %v2305 = vrot.slane %v1751, 7
    %v2306 = vrot.slane %v2305, 2
    %v2307 = vrot.slane %v1753, 7
    %v2308 = vrot.slane %v2307, 2
    %v2309 = vrot.slane %v1761, 7
    %v2310 = vrot.slane %v2309, 2
    %v2311 = vrot.slane %v1769, 7
    %v2312 = vrot.slane %v2311, 2
    %v2313 = vrot.slane %v1768, 7
    %v2314 = vrot.slane %v2313, 2
    %v2315 = vrot.slane %v1770, 7
    %v2316 = vrot.slane %v2315, 2
    %v2317 = vrot.slane %v1778, 7
    %v2318 = vrot.slane %v2317, 2
    %v2319 = vrot.slane %v1786, 7
    %v2320 = vrot.slane %v2319, 2
    %v2321 = vrot.slane %v1785, 7
    %v2322 = vrot.slane %v2321, 2
    %v2323 = vrot.slane %v1787, 7
    %v2324 = vrot.slane %v2323, 2
    %v2325 = vrot.slane %v1795, 7
    %v2326 = vrot.slane %v2325, 2
    %v2327 = vrot.slane %v1803, 7
    %v2328 = vrot.slane %v2327, 2
    %v2329 = vrot.slane %v1802, 7
    %v2330 = vrot.slane %v2329, 2
    %v2331 = vrot.slane %v1804, 7
    %v2332 = vrot.slane %v2331, 2
    %v2333 = vrot.slane %v1812, 7
    %v2334 = vrot.slane %v2333, 2
    %v2335 = vrot.slane %v1820, 7
    %v2336 = vrot.slane %v2335, 2
    %v2337 = vrot.slane %v1819, 7
    %v2338 = vrot.slane %v2337, 2
    %v2339 = vrot.slane %v1821, 7
    %v2340 = vrot.slane %v2339, 2
    %v2341 = vrot.slane %v1829, 7
    %v2342 = vrot.slane %v2341, 2
    %v2343 = vrot.slane %v1837, 7
    %v2344 = vrot.slane %v2343, 2
    %v2345 = vrot.slane %v1836, 7
    %v2346 = vrot.slane %v2345, 2
    %v2347 = vrot.slane %v1838, 7
    %v2348 = vrot.slane %v2347, 2
    %v2349 = vrot.slane %v1846, 7
    %v2350 = vrot.slane %v2349, 2
    %v2351 = vrot.slane %v1854, 7
    %v2352 = vrot.slane %v2351, 2
    %v2353 = vrot.slane %v1853, 7
    %v2354 = vrot.slane %v2353, 2
    %v2355 = vrot.slane %v1855, 7
    %v2356 = vrot.slane %v2355, 2
    %v2357 = vrot.slane %v1863, 7
    %v2358 = vrot.slane %v2357, 2
    %v2359 = vrot.slane %v1871, 7
    %v2360 = vrot.slane %v2359, 2
    %v2361 = vrot.slane %v1870, 7
    %v2362 = vrot.slane %v2361, 2
    %v2363 = vrot.slane %v1872, 7
    %v2364 = vrot.slane %v2363, 2
    %v2365 = vrot.slane %v1880, 7
    %v2366 = vrot.slane %v2365, 2
    %v2367 = vrot.slane %v1888, 7
    %v2368 = vrot.slane %v2367, 2
    %v2369 = vrot.slane %v1887, 7
    %v2370 = vrot.slane %v2369, 2
    %v2371 = vrot.slane %v1889, 7
    %v2372 = vrot.slane %v2371, 2
    %v2373 = vrot.slane %v1897, 7
    %v2374 = vrot.slane %v2373, 2
    %v2375 = vrot.slane %v1905, 7
    %v2376 = vrot.slane %v2375, 2
    %v2377 = vrot.slane %v1904, 7
    %v2378 = vrot.slane %v2377, 2
    %v2379 = vrot.slane %v1906, 7
    %v2380 = vrot.slane %v2379, 2
    %v2381 = vrot.slane %v1914, 7
    %v2382 = vrot.slane %v2381, 2
    %v2383 = vrot.slane %v1922, 7
    %v2384 = vrot.slane %v2383, 2
    %v2385 = vrot.slane %v1921, 7
    %v2386 = vrot.slane %v2385, 2
    %v2387 = vrot.slane %v1923, 7
    %v2388 = vrot.slane %v2387, 2
    %v2389 = vrot.slane %v1931, 7
    %v2390 = vrot.slane %v2389, 2
    %v2391 = vrot.slane %v1939, 7
    %v2392 = vrot.slane %v2391, 2
    %v2393 = vrot.slane %v1938, 7
    %v2394 = vrot.slane %v2393, 2
    %v2395 = vrot.slane %v1940, 7
    %v2396 = vrot.slane %v2395, 2
    %v2397 = vrot.slane %v1948, 7
    %v2398 = vrot.slane %v2397, 2
    %v2399 = vrot.slane %v1956, 7
    %v2400 = vrot.slane %v2399, 2
    %v2401 = vrot.slane %v1955, 7
    %v2402 = vrot.slane %v2401, 2
    %v2403 = vrot.slane %v1957, 7
    %v2404 = vrot.slane %v2403, 2
    %v2405 = vrot.slane %v1965, 7
    %v2406 = vrot.slane %v2405, 2
    %v2407 = vrot.slane %v1973, 7
    %v2408 = vrot.slane %v2407, 2
    %v2409 = vrot.slane %v1972, 7
    %v2410 = vrot.slane %v2409, 2
    %v2411 = vrot.slane %v1974, 7
    %v2412 = vrot.slane %v2411, 2
    %v2413 = vrot.slane %v1982, 7
    %v2414 = vrot.slane %v2413, 2
    %v2415 = vrot.slane %v1990, 7
    %v2416 = vrot.slane %v2415, 2
    %v2417 = vrot.slane %v1989, 7
    %v2418 = vrot.slane %v2417, 2
    %v2419 = vrot.slane %v1991, 7
    %v2420 = vrot.slane %v2419, 2
    %v2421 = vrot.slane %v1999, 7
    %v2422 = vrot.slane %v2421, 2
    %v2423 = vrot.slane %v2007, 7
    %v2424 = vrot.slane %v2423, 2
    %v2425 = vrot.slane %v2006, 7
    %v2426 = vrot.slane %v2425, 2
    %v2427 = vrot.slane %v2008, 7
    %v2428 = vrot.slane %v2427, 2
    %v2429 = vrot.slane %v2016, 7
    %v2430 = vrot.slane %v2429, 2
    %v2431 = vrot.slane %v2024, 7
    %v2432 = vrot.slane %v2431, 2
    %v2433 = vrot.slane %v2023, 7
    %v2434 = vrot.slane %v2433, 2
    %v2435 = vrot.slane %v2025, 7
    %v2436 = vrot.slane %v2435, 2
    %v2437 = vrot.slane %v2033, 7
    %v2438 = vrot.slane %v2437, 2
    %v2439 = vrot.slane %v2041, 7
    %v2440 = vrot.slane %v2439, 2
    %v2441 = vrot.slane %v2040, 7
    %v2442 = vrot.slane %v2441, 2
    %v2443 = vrot.slane %v2042, 7
    %v2444 = vrot.slane %v2443, 2
    %v2445 = vrot.slane %v2050, 7
    %v2446 = vrot.slane %v2445, 2
    %v2447 = vrot.slane %v2058, 7
    %v2448 = vrot.slane %v2447, 2
    %v2449 = vrot.slane %v2057, 7
    %v2450 = vrot.slane %v2449, 2
    %v2451 = vrot.slane %v2059, 7
    %v2452 = vrot.slane %v2451, 2
    %v2453 = vrot.slane %v2067, 7
    %v2454 = vrot.slane %v2453, 2
    %v2455 = vrot.slane %v2075, 7
    %v2456 = vrot.slane %v2455, 2
    %v2457 = vrot.slane %v2074, 7
    %v2458 = vrot.slane %v2457, 2
    %v2459 = vrot.slane %v2076, 7
    %v2460 = vrot.slane %v2459, 2
    %v2589 = vmax.f32 %v1540, %v2206
    %v2590 = vmax.f32 %v1548, %v2208
    %v2591 = vmax.f32 %v1547, %v2210
    %v2592 = vmax.f32 %v1549, %v2212
    %v2593 = vmax.f32 %v1557, %v2214
    %v2594 = vmax.f32 %v1565, %v2216
    %v2595 = vmax.f32 %v1564, %v2218
    %v2596 = vmax.f32 %v1566, %v2220
    %v2597 = vmax.f32 %v1574, %v2222
    %v2598 = vmax.f32 %v1582, %v2224
    %v2599 = vmax.f32 %v1581, %v2226
    %v2600 = vmax.f32 %v1583, %v2228
    %v2601 = vmax.f32 %v1591, %v2230
    %v2602 = vmax.f32 %v1599, %v2232
    %v2603 = vmax.f32 %v1598, %v2234
    %v2604 = vmax.f32 %v1600, %v2236
    %v2605 = vmax.f32 %v1608, %v2238
    %v2606 = vmax.f32 %v1616, %v2240
    %v2607 = vmax.f32 %v1615, %v2242
    %v2608 = vmax.f32 %v1617, %v2244
    %v2609 = vmax.f32 %v1625, %v2246
    %v2610 = vmax.f32 %v1633, %v2248
    %v2611 = vmax.f32 %v1632, %v2250
    %v2612 = vmax.f32 %v1634, %v2252
    %v2613 = vmax.f32 %v1642, %v2254
    %v2614 = vmax.f32 %v1650, %v2256
    %v2615 = vmax.f32 %v1649, %v2258
    %v2616 = vmax.f32 %v1651, %v2260
    %v2617 = vmax.f32 %v1659, %v2262
    %v2618 = vmax.f32 %v1667, %v2264
    %v2619 = vmax.f32 %v1666, %v2266
    %v2620 = vmax.f32 %v1668, %v2268
    %v2621 = vmax.f32 %v1676, %v2270
    %v2622 = vmax.f32 %v1684, %v2272
    %v2623 = vmax.f32 %v1683, %v2274
    %v2624 = vmax.f32 %v1685, %v2276
    %v2625 = vmax.f32 %v1693, %v2278
    %v2626 = vmax.f32 %v1701, %v2280
    %v2627 = vmax.f32 %v1700, %v2282
    %v2628 = vmax.f32 %v1702, %v2284
    %v2629 = vmax.f32 %v1710, %v2286
    %v2630 = vmax.f32 %v1718, %v2288
    %v2631 = vmax.f32 %v1717, %v2290
    %v2632 = vmax.f32 %v1719, %v2292
    %v2633 = vmax.f32 %v1727, %v2294
    %v2634 = vmax.f32 %v1735, %v2296
    %v2635 = vmax.f32 %v1734, %v2298
    %v2636 = vmax.f32 %v1736, %v2300
    %v2637 = vmax.f32 %v1744, %v2302
    %v2638 = vmax.f32 %v1752, %v2304
    %v2639 = vmax.f32 %v1751, %v2306
    %v2640 = vmax.f32 %v1753, %v2308
    %v2641 = vmax.f32 %v1761, %v2310
    %v2642 = vmax.f32 %v1769, %v2312
    %v2643 = vmax.f32 %v1768, %v2314
    %v2644 = vmax.f32 %v1770, %v2316
    %v2645 = vmax.f32 %v1778, %v2318
    %v2646 = vmax.f32 %v1786, %v2320
    %v2647 = vmax.f32 %v1785, %v2322
    %v2648 = vmax.f32 %v1787, %v2324
    %v2649 = vmax.f32 %v1795, %v2326
    %v2650 = vmax.f32 %v1803, %v2328
    %v2651 = vmax.f32 %v1802, %v2330
    %v2652 = vmax.f32 %v1804, %v2332
    %v2653 = vmax.f32 %v1812, %v2334
    %v2654 = vmax.f32 %v1820, %v2336
    %v2655 = vmax.f32 %v1819, %v2338
    %v2656 = vmax.f32 %v1821, %v2340
    %v2657 = vmax.f32 %v1829, %v2342
    %v2658 = vmax.f32 %v1837, %v2344
    %v2659 = vmax.f32 %v1836, %v2346
    %v2660 = vmax.f32 %v1838, %v2348
    %v2661 = vmax.f32 %v1846, %v2350
    %v2662 = vmax.f32 %v1854, %v2352
    %v2663 = vmax.f32 %v1853, %v2354
    %v2664 = vmax.f32 %v1855, %v2356
    %v2665 = vmax.f32 %v1863, %v2358
    %v2666 = vmax.f32 %v1871, %v2360
    %v2667 = vmax.f32 %v1870, %v2362
    %v2668 = vmax.f32 %v1872, %v2364
    %v2669 = vmax.f32 %v1880, %v2366
    %v2670 = vmax.f32 %v1888, %v2368
    %v2671 = vmax.f32 %v1887, %v2370
    %v2672 = vmax.f32 %v1889, %v2372
    %v2673 = vmax.f32 %v1897, %v2374
    %v2674 = vmax.f32 %v1905, %v2376
    %v2675 = vmax.f32 %v1904, %v2378
    %v2676 = vmax.f32 %v1906, %v2380
    %v2677 = vmax.f32 %v1914, %v2382
    %v2678 = vmax.f32 %v1922, %v2384
    %v2679 = vmax.f32 %v1921, %v2386
    %v2680 = vmax.f32 %v1923, %v2388
    %v2681 = vmax.f32 %v1931, %v2390
    %v2682 = vmax.f32 %v1939, %v2392
    %v2683 = vmax.f32 %v1938, %v2394
    %v2684 = vmax.f32 %v1940, %v2396
    %v2685 = vmax.f32 %v1948, %v2398
    %v2686 = vmax.f32 %v1956, %v2400
    %v2687 = vmax.f32 %v1955, %v2402
    %v2688 = vmax.f32 %v1957, %v2404
    %v2689 = vmax.f32 %v1965, %v2406
    %v2690 = vmax.f32 %v1973, %v2408
    %v2691 = vmax.f32 %v1972, %v2410
    %v2692 = vmax.f32 %v1974, %v2412
    %v2693 = vmax.f32 %v1982, %v2414
    %v2694 = vmax.f32 %v1990, %v2416
    %v2695 = vmax.f32 %v1989, %v2418
    %v2696 = vmax.f32 %v1991, %v2420
    %v2697 = vmax.f32 %v1999, %v2422
    %v2698 = vmax.f32 %v2007, %v2424
    %v2699 = vmax.f32 %v2006, %v2426
    %v2700 = vmax.f32 %v2008, %v2428
    %v2701 = vmax.f32 %v2016, %v2430
    %v2702 = vmax.f32 %v2024, %v2432
    %v2703 = vmax.f32 %v2023, %v2434
    %v2704 = vmax.f32 %v2025, %v2436
    %v2705 = vmax.f32 %v2033, %v2438
    %v2706 = vmax.f32 %v2041, %v2440
    %v2707 = vmax.f32 %v2040, %v2442
    %v2708 = vmax.f32 %v2042, %v2444
    %v2709 = vmax.f32 %v2050, %v2446
    %v2710 = vmax.f32 %v2058, %v2448
    %v2711 = vmax.f32 %v2057, %v2450
    %v2712 = vmax.f32 %v2059, %v2452
    %v2713 = vmax.f32 %v2067, %v2454
    %v2714 = vmax.f32 %v2075, %v2456
    %v2715 = vmax.f32 %v2074, %v2458
    %v2716 = vmax.f32 %v2076, %v2460
    %v2717 = vld [vmem:[%s2] sm:$0x1]
    %v2719 = vlaneseq
    %v2720 = vshrl.u32 %v2719, 7
    %v2721 = vsub.s32 0, %v2720
    %v2722 = vrot.slane %v2717, %v2721
    %v2723 = vcombine.high %v2722, %v2722
    %v2725 = vunpack.c.l.s4 1983009808
    %v2726 = vunpack.c.0.s8 %v2725
    %v2727 = vlaneseq
    %v2728 = vshrl.u32 %v2727, 7
    %v2729 = vsub.s32 %v2726, %v2728
    %v2730 = vrot.slane %v2722, %v2729
    %v2732 = vunpack.c.l.s4 1983009808
    %v2733 = vunpack.c.0.s8 %v2732
    %v2734 = vlaneseq
    %v2735 = vshrl.u32 %v2734, 7
    %v2736 = vsub.s32 %v2733, %v2735
    %v2737 = vrot.slane %v2723, %v2736
    %v2738 = vcombine.high %v2730, %v2730
    %v2739 = vcombine.high %v2737, %v2737
    %v2740 = vrot.slane %v2730, 1
    %v2741 = vrot.slane %v2738, 1
    %v2742 = vrot.slane %v2737, 1
    %v2743 = vrot.slane %v2739, 1
    %v2752 = vadd.f32 %v2589, %v2730
    %v2753 = vadd.f32 %v2590, %v2740
    %v2754 = vadd.f32 %v2591, %v2738
    %v2755 = vadd.f32 %v2592, %v2741
    %v2756 = vadd.f32 %v2593, %v2737
    %v2757 = vadd.f32 %v2594, %v2742
    %v2758 = vadd.f32 %v2595, %v2739
    %v2759 = vadd.f32 %v2596, %v2743
    %v2760 = vadd.f32 %v2597, %v2730
    %v2761 = vadd.f32 %v2598, %v2740
    %v2762 = vadd.f32 %v2599, %v2738
    %v2763 = vadd.f32 %v2600, %v2741
    %v2764 = vadd.f32 %v2601, %v2737
    %v2765 = vadd.f32 %v2602, %v2742
    %v2766 = vadd.f32 %v2603, %v2739
    %v2767 = vadd.f32 %v2604, %v2743
    %v2768 = vadd.f32 %v2605, %v2730
    %v2769 = vadd.f32 %v2606, %v2740
    %v2770 = vadd.f32 %v2607, %v2738
    %v2771 = vadd.f32 %v2608, %v2741
    %v2772 = vadd.f32 %v2609, %v2737
    %v2773 = vadd.f32 %v2610, %v2742
    %v2774 = vadd.f32 %v2611, %v2739
    %v2775 = vadd.f32 %v2612, %v2743
    %v2776 = vadd.f32 %v2613, %v2730
    %v2777 = vadd.f32 %v2614, %v2740
    %v2778 = vadd.f32 %v2615, %v2738
    %v2779 = vadd.f32 %v2616, %v2741
    %v2780 = vadd.f32 %v2617, %v2737
    %v2781 = vadd.f32 %v2618, %v2742
    %v2782 = vadd.f32 %v2619, %v2739
    %v2783 = vadd.f32 %v2620, %v2743
    %v2784 = vadd.f32 %v2621, %v2730
    %v2785 = vadd.f32 %v2622, %v2740
    %v2786 = vadd.f32 %v2623, %v2738
    %v2787 = vadd.f32 %v2624, %v2741
    %v2788 = vadd.f32 %v2625, %v2737
    %v2789 = vadd.f32 %v2626, %v2742
    %v2790 = vadd.f32 %v2627, %v2739
    %v2791 = vadd.f32 %v2628, %v2743
    %v2792 = vadd.f32 %v2629, %v2730
    %v2793 = vadd.f32 %v2630, %v2740
    %v2794 = vadd.f32 %v2631, %v2738
    %v2795 = vadd.f32 %v2632, %v2741
    %v2796 = vadd.f32 %v2633, %v2737
    %v2797 = vadd.f32 %v2634, %v2742
    %v2798 = vadd.f32 %v2635, %v2739
    %v2799 = vadd.f32 %v2636, %v2743
    %v2800 = vadd.f32 %v2637, %v2730
    %v2801 = vadd.f32 %v2638, %v2740
    %v2802 = vadd.f32 %v2639, %v2738
    %v2803 = vadd.f32 %v2640, %v2741
    %v2804 = vadd.f32 %v2641, %v2737
    %v2805 = vadd.f32 %v2642, %v2742
    %v2806 = vadd.f32 %v2643, %v2739
    %v2807 = vadd.f32 %v2644, %v2743
    %v2808 = vadd.f32 %v2645, %v2730
    %v2809 = vadd.f32 %v2646, %v2740
    %v2810 = vadd.f32 %v2647, %v2738
    %v2811 = vadd.f32 %v2648, %v2741
    %v2812 = vadd.f32 %v2649, %v2737
    %v2813 = vadd.f32 %v2650, %v2742
    %v2814 = vadd.f32 %v2651, %v2739
    %v2815 = vadd.f32 %v2652, %v2743
    %v2816 = vadd.f32 %v2653, %v2730
    %v2817 = vadd.f32 %v2654, %v2740
    %v2818 = vadd.f32 %v2655, %v2738
    %v2819 = vadd.f32 %v2656, %v2741
    %v2820 = vadd.f32 %v2657, %v2737
    %v2821 = vadd.f32 %v2658, %v2742
    %v2822 = vadd.f32 %v2659, %v2739
    %v2823 = vadd.f32 %v2660, %v2743
    %v2824 = vadd.f32 %v2661, %v2730
    %v2825 = vadd.f32 %v2662, %v2740
    %v2826 = vadd.f32 %v2663, %v2738
    %v2827 = vadd.f32 %v2664, %v2741
    %v2828 = vadd.f32 %v2665, %v2737
    %v2829 = vadd.f32 %v2666, %v2742
    %v2830 = vadd.f32 %v2667, %v2739
    %v2831 = vadd.f32 %v2668, %v2743
    %v2832 = vadd.f32 %v2669, %v2730
    %v2833 = vadd.f32 %v2670, %v2740
    %v2834 = vadd.f32 %v2671, %v2738
    %v2835 = vadd.f32 %v2672, %v2741
    %v2836 = vadd.f32 %v2673, %v2737
    %v2837 = vadd.f32 %v2674, %v2742
    %v2838 = vadd.f32 %v2675, %v2739
    %v2839 = vadd.f32 %v2676, %v2743
    %v2840 = vadd.f32 %v2677, %v2730
    %v2841 = vadd.f32 %v2678, %v2740
    %v2842 = vadd.f32 %v2679, %v2738
    %v2843 = vadd.f32 %v2680, %v2741
    %v2844 = vadd.f32 %v2681, %v2737
    %v2845 = vadd.f32 %v2682, %v2742
    %v2846 = vadd.f32 %v2683, %v2739
    %v2847 = vadd.f32 %v2684, %v2743
    %v2848 = vadd.f32 %v2685, %v2730
    %v2849 = vadd.f32 %v2686, %v2740
    %v2850 = vadd.f32 %v2687, %v2738
    %v2851 = vadd.f32 %v2688, %v2741
    %v2852 = vadd.f32 %v2689, %v2737
    %v2853 = vadd.f32 %v2690, %v2742
    %v2854 = vadd.f32 %v2691, %v2739
    %v2855 = vadd.f32 %v2692, %v2743
    %v2856 = vadd.f32 %v2693, %v2730
    %v2857 = vadd.f32 %v2694, %v2740
    %v2858 = vadd.f32 %v2695, %v2738
    %v2859 = vadd.f32 %v2696, %v2741
    %v2860 = vadd.f32 %v2697, %v2737
    %v2861 = vadd.f32 %v2698, %v2742
    %v2862 = vadd.f32 %v2699, %v2739
    %v2863 = vadd.f32 %v2700, %v2743
    %v2864 = vadd.f32 %v2701, %v2730
    %v2865 = vadd.f32 %v2702, %v2740
    %v2866 = vadd.f32 %v2703, %v2738
    %v2867 = vadd.f32 %v2704, %v2741
    %v2868 = vadd.f32 %v2705, %v2737
    %v2869 = vadd.f32 %v2706, %v2742
    %v2870 = vadd.f32 %v2707, %v2739
    %v2871 = vadd.f32 %v2708, %v2743
    %v2872 = vadd.f32 %v2709, %v2730
    %v2873 = vadd.f32 %v2710, %v2740
    %v2874 = vadd.f32 %v2711, %v2738
    %v2875 = vadd.f32 %v2712, %v2741
    %v2876 = vadd.f32 %v2713, %v2737
    %v2877 = vadd.f32 %v2714, %v2742
    %v2878 = vadd.f32 %v2715, %v2739
    %v2879 = vadd.f32 %v2716, %v2743
    %v2880 = vmax.f32 %v2752, 0.0
    %v2881 = vmax.f32 %v2753, 0.0
    %v2882 = vmax.f32 %v2754, 0.0
    %v2883 = vmax.f32 %v2755, 0.0
    %v2884 = vmax.f32 %v2756, 0.0
    %v2885 = vmax.f32 %v2757, 0.0
    %v2886 = vmax.f32 %v2758, 0.0
    %v2887 = vmax.f32 %v2759, 0.0
    %v2888 = vmax.f32 %v2760, 0.0
    %v2889 = vmax.f32 %v2761, 0.0
    %v2890 = vmax.f32 %v2762, 0.0
    %v2891 = vmax.f32 %v2763, 0.0
    %v2892 = vmax.f32 %v2764, 0.0
    %v2893 = vmax.f32 %v2765, 0.0
    %v2894 = vmax.f32 %v2766, 0.0
    %v2895 = vmax.f32 %v2767, 0.0
    %v2896 = vmax.f32 %v2768, 0.0
    %v2897 = vmax.f32 %v2769, 0.0
    %v2898 = vmax.f32 %v2770, 0.0
    %v2899 = vmax.f32 %v2771, 0.0
    %v2900 = vmax.f32 %v2772, 0.0
    %v2901 = vmax.f32 %v2773, 0.0
    %v2902 = vmax.f32 %v2774, 0.0
    %v2903 = vmax.f32 %v2775, 0.0
    %v2904 = vmax.f32 %v2776, 0.0
    %v2905 = vmax.f32 %v2777, 0.0
    %v2906 = vmax.f32 %v2778, 0.0
    %v2907 = vmax.f32 %v2779, 0.0
    %v2908 = vmax.f32 %v2780, 0.0
    %v2909 = vmax.f32 %v2781, 0.0
    %v2910 = vmax.f32 %v2782, 0.0
    %v2911 = vmax.f32 %v2783, 0.0
    %v2912 = vmax.f32 %v2784, 0.0
    %v2913 = vmax.f32 %v2785, 0.0
    %v2914 = vmax.f32 %v2786, 0.0
    %v2915 = vmax.f32 %v2787, 0.0
    %v2916 = vmax.f32 %v2788, 0.0
    %v2917 = vmax.f32 %v2789, 0.0
    %v2918 = vmax.f32 %v2790, 0.0
    %v2919 = vmax.f32 %v2791, 0.0
    %v2920 = vmax.f32 %v2792, 0.0
    %v2921 = vmax.f32 %v2793, 0.0
    %v2922 = vmax.f32 %v2794, 0.0
    %v2923 = vmax.f32 %v2795, 0.0
    %v2924 = vmax.f32 %v2796, 0.0
    %v2925 = vmax.f32 %v2797, 0.0
    %v2926 = vmax.f32 %v2798, 0.0
    %v2927 = vmax.f32 %v2799, 0.0
    %v2928 = vmax.f32 %v2800, 0.0
    %v2929 = vmax.f32 %v2801, 0.0
    %v2930 = vmax.f32 %v2802, 0.0
    %v2931 = vmax.f32 %v2803, 0.0
    %v2932 = vmax.f32 %v2804, 0.0
    %v2933 = vmax.f32 %v2805, 0.0
    %v2934 = vmax.f32 %v2806, 0.0
    %v2935 = vmax.f32 %v2807, 0.0
    %v2936 = vmax.f32 %v2808, 0.0
    %v2937 = vmax.f32 %v2809, 0.0
    %v2938 = vmax.f32 %v2810, 0.0
    %v2939 = vmax.f32 %v2811, 0.0
    %v2940 = vmax.f32 %v2812, 0.0
    %v2941 = vmax.f32 %v2813, 0.0
    %v2942 = vmax.f32 %v2814, 0.0
    %v2943 = vmax.f32 %v2815, 0.0
    %v2944 = vmax.f32 %v2816, 0.0
    %v2945 = vmax.f32 %v2817, 0.0
    %v2946 = vmax.f32 %v2818, 0.0
    %v2947 = vmax.f32 %v2819, 0.0
    %v2948 = vmax.f32 %v2820, 0.0
    %v2949 = vmax.f32 %v2821, 0.0
    %v2950 = vmax.f32 %v2822, 0.0
    %v2951 = vmax.f32 %v2823, 0.0
    %v2952 = vmax.f32 %v2824, 0.0
    %v2953 = vmax.f32 %v2825, 0.0
    %v2954 = vmax.f32 %v2826, 0.0
    %v2955 = vmax.f32 %v2827, 0.0
    %v2956 = vmax.f32 %v2828, 0.0
    %v2957 = vmax.f32 %v2829, 0.0
    %v2958 = vmax.f32 %v2830, 0.0
    %v2959 = vmax.f32 %v2831, 0.0
    %v2960 = vmax.f32 %v2832, 0.0
    %v2961 = vmax.f32 %v2833, 0.0
    %v2962 = vmax.f32 %v2834, 0.0
    %v2963 = vmax.f32 %v2835, 0.0
    %v2964 = vmax.f32 %v2836, 0.0
    %v2965 = vmax.f32 %v2837, 0.0
    %v2966 = vmax.f32 %v2838, 0.0
    %v2967 = vmax.f32 %v2839, 0.0
    %v2968 = vmax.f32 %v2840, 0.0
    %v2969 = vmax.f32 %v2841, 0.0
    %v2970 = vmax.f32 %v2842, 0.0
    %v2971 = vmax.f32 %v2843, 0.0
    %v2972 = vmax.f32 %v2844, 0.0
    %v2973 = vmax.f32 %v2845, 0.0
    %v2974 = vmax.f32 %v2846, 0.0
    %v2975 = vmax.f32 %v2847, 0.0
    %v2976 = vmax.f32 %v2848, 0.0
    %v2977 = vmax.f32 %v2849, 0.0
    %v2978 = vmax.f32 %v2850, 0.0
    %v2979 = vmax.f32 %v2851, 0.0
    %v2980 = vmax.f32 %v2852, 0.0
    %v2981 = vmax.f32 %v2853, 0.0
    %v2982 = vmax.f32 %v2854, 0.0
    %v2983 = vmax.f32 %v2855, 0.0
    %v2984 = vmax.f32 %v2856, 0.0
    %v2985 = vmax.f32 %v2857, 0.0
    %v2986 = vmax.f32 %v2858, 0.0
    %v2987 = vmax.f32 %v2859, 0.0
    %v2988 = vmax.f32 %v2860, 0.0
    %v2989 = vmax.f32 %v2861, 0.0
    %v2990 = vmax.f32 %v2862, 0.0
    %v2991 = vmax.f32 %v2863, 0.0
    %v2992 = vmax.f32 %v2864, 0.0
    %v2993 = vmax.f32 %v2865, 0.0
    %v2994 = vmax.f32 %v2866, 0.0
    %v2995 = vmax.f32 %v2867, 0.0
    %v2996 = vmax.f32 %v2868, 0.0
    %v2997 = vmax.f32 %v2869, 0.0
    %v2998 = vmax.f32 %v2870, 0.0
    %v2999 = vmax.f32 %v2871, 0.0
    %v3000 = vmax.f32 %v2872, 0.0
    %v3001 = vmax.f32 %v2873, 0.0
    %v3002 = vmax.f32 %v2874, 0.0
    %v3003 = vmax.f32 %v2875, 0.0
    %v3004 = vmax.f32 %v2876, 0.0
    %v3005 = vmax.f32 %v2877, 0.0
    %v3006 = vmax.f32 %v2878, 0.0
    %v3007 = vmax.f32 %v2879, 0.0
    %vm3008 = vcmask 130048
    %3009 = vst.msk [vmem:[#allocation3] sm:$0xff] %vm3008, 0.0
    %vm3010 = vcmask 123904
    %3011 = vst.msk [vmem:[#allocation3 + $0x8] sm:$0x3] %vm3010, 0.0
    %3012 = vst.msk [vmem:[#allocation3 + $0xa0] sm:$0xff] %vm3008, 0.0
    %3013 = vst.msk [vmem:[#allocation3 + $0xa8] sm:$0x3] %vm3010, 0.0
    %s3014 = scalar_lea.vmem [#allocation3], 144
    %3015 = vst.msk [vmem:[%s3014] sm:$0xff] %vm3008, 0.0
    %3016 = vst.msk [vmem:[%s3014 + $0x8] sm:$0x3] %vm3010, 0.0
    %3017 = vst.msk [vmem:[%s3014 + $0xa0] sm:$0xff] %vm3008, 0.0
    %3018 = vst.msk [vmem:[%s3014 + $0xa8] sm:$0x3] %vm3010, 0.0
    %s3019 = scalar_lea.vmem [#allocation3], 16
    %vm3020 = vcmask 122880
    %3021 = vst.msk [vmem:[%s3019] sm:$0x1] %vm3020, 0.0
    %3022 = vst.msk [vmem:[%s3019 + $0x10] sm:$0x1] %vm3020, 0.0
    %3023 = vst.msk [vmem:[%s3019 + $0x20] sm:$0x1] %vm3020, 0.0
    %3024 = vst.msk [vmem:[%s3019 + $0x30] sm:$0x1] %vm3020, 0.0
    %3025 = vst.msk [vmem:[%s3019 + $0x40] sm:$0x1] %vm3020, 0.0
    %3026 = vst.msk [vmem:[%s3019 + $0x50] sm:$0x1] %vm3020, 0.0
    %3027 = vst.msk [vmem:[%s3019 + $0x60] sm:$0x1] %vm3020, 0.0
    %3028 = vst.msk [vmem:[%s3019 + $0x70] sm:$0x1] %vm3020, 0.0
    %3029 = vst.msk [vmem:[%s3019 + $0xa0] sm:$0x1] %vm3020, 0.0
    %3030 = vst.msk [vmem:[%s3019 + $0xb0] sm:$0x1] %vm3020, 0.0
    %3031 = vst.msk [vmem:[%s3019 + $0xc0] sm:$0x1] %vm3020, 0.0
    %3032 = vst.msk [vmem:[%s3019 + $0xd0] sm:$0x1] %vm3020, 0.0
    %3033 = vst.msk [vmem:[%s3019 + $0xe0] sm:$0x1] %vm3020, 0.0
    %3034 = vst.msk [vmem:[%s3019 + $0xf0] sm:$0x1] %vm3020, 0.0
    %3035 = vst.msk [vmem:[%s3019 + $0x100] sm:$0x1] %vm3020, 0.0
    %3036 = vst.msk [vmem:[%s3019 + $0x110] sm:$0x1] %vm3020, 0.0
    %3037 = vst.msk [vmem:[%s3019 + $0x9] sm:$0x1] %vm3020, 0.0
    %3038 = vst.msk [vmem:[%s3019 + $0x19] sm:$0x1] %vm3020, 0.0
    %3039 = vst.msk [vmem:[%s3019 + $0x29] sm:$0x1] %vm3020, 0.0
    %3040 = vst.msk [vmem:[%s3019 + $0x39] sm:$0x1] %vm3020, 0.0
    %3041 = vst.msk [vmem:[%s3019 + $0x49] sm:$0x1] %vm3020, 0.0
    %3042 = vst.msk [vmem:[%s3019 + $0x59] sm:$0x1] %vm3020, 0.0
    %3043 = vst.msk [vmem:[%s3019 + $0x69] sm:$0x1] %vm3020, 0.0
    %3044 = vst.msk [vmem:[%s3019 + $0x79] sm:$0x1] %vm3020, 0.0
    %3045 = vst.msk [vmem:[%s3019 + $0xa9] sm:$0x1] %vm3020, 0.0
    %3046 = vst.msk [vmem:[%s3019 + $0xb9] sm:$0x1] %vm3020, 0.0
    %3047 = vst.msk [vmem:[%s3019 + $0xc9] sm:$0x1] %vm3020, 0.0
    %3048 = vst.msk [vmem:[%s3019 + $0xd9] sm:$0x1] %vm3020, 0.0
    %3049 = vst.msk [vmem:[%s3019 + $0xe9] sm:$0x1] %vm3020, 0.0
    %3050 = vst.msk [vmem:[%s3019 + $0xf9] sm:$0x1] %vm3020, 0.0
    %3051 = vst.msk [vmem:[%s3019 + $0x109] sm:$0x1] %vm3020, 0.0
    %3052 = vst.msk [vmem:[%s3019 + $0x119] sm:$0x1] %vm3020, 0.0
    %v3181 = vlaneseq
    %v3182 = vshrl.u32 %v3181, 7
    %v3183 = vsub.s32 0, %v3182
    %v3184 = vrot.slane %v2880, %v3183
    %v3185 = vlaneseq
    %v3186 = vshrl.u32 %v3185, 7
    %v3187 = vsub.s32 0, %v3186
    %v3188 = vrot.slane %v2881, %v3187
    %v3189 = vlaneseq
    %v3190 = vshrl.u32 %v3189, 7
    %v3191 = vsub.s32 0, %v3190
    %v3192 = vrot.slane %v2882, %v3191
    %v3193 = vlaneseq
    %v3194 = vshrl.u32 %v3193, 7
    %v3195 = vsub.s32 0, %v3194
    %v3196 = vrot.slane %v2883, %v3195
    %v3197 = vlaneseq
    %v3198 = vshrl.u32 %v3197, 7
    %v3199 = vsub.s32 0, %v3198
    %v3200 = vrot.slane %v2884, %v3199
    %v3201 = vlaneseq
    %v3202 = vshrl.u32 %v3201, 7
    %v3203 = vsub.s32 0, %v3202
    %v3204 = vrot.slane %v2885, %v3203
    %v3205 = vlaneseq
    %v3206 = vshrl.u32 %v3205, 7
    %v3207 = vsub.s32 0, %v3206
    %v3208 = vrot.slane %v2886, %v3207
    %v3209 = vlaneseq
    %v3210 = vshrl.u32 %v3209, 7
    %v3211 = vsub.s32 0, %v3210
    %v3212 = vrot.slane %v2887, %v3211
    %v3213 = vlaneseq
    %v3214 = vshrl.u32 %v3213, 7
    %v3215 = vsub.s32 0, %v3214
    %v3216 = vrot.slane %v2888, %v3215
    %v3217 = vlaneseq
    %v3218 = vshrl.u32 %v3217, 7
    %v3219 = vsub.s32 0, %v3218
    %v3220 = vrot.slane %v2889, %v3219
    %v3221 = vlaneseq
    %v3222 = vshrl.u32 %v3221, 7
    %v3223 = vsub.s32 0, %v3222
    %v3224 = vrot.slane %v2890, %v3223
    %v3225 = vlaneseq
    %v3226 = vshrl.u32 %v3225, 7
    %v3227 = vsub.s32 0, %v3226
    %v3228 = vrot.slane %v2891, %v3227
    %v3229 = vlaneseq
    %v3230 = vshrl.u32 %v3229, 7
    %v3231 = vsub.s32 0, %v3230
    %v3232 = vrot.slane %v2892, %v3231
    %v3233 = vlaneseq
    %v3234 = vshrl.u32 %v3233, 7
    %v3235 = vsub.s32 0, %v3234
    %v3236 = vrot.slane %v2893, %v3235
    %v3237 = vlaneseq
    %v3238 = vshrl.u32 %v3237, 7
    %v3239 = vsub.s32 0, %v3238
    %v3240 = vrot.slane %v2894, %v3239
    %v3241 = vlaneseq
    %v3242 = vshrl.u32 %v3241, 7
    %v3243 = vsub.s32 0, %v3242
    %v3244 = vrot.slane %v2895, %v3243
    %v3245 = vlaneseq
    %v3246 = vshrl.u32 %v3245, 7
    %v3247 = vsub.s32 0, %v3246
    %v3248 = vrot.slane %v2896, %v3247
    %v3249 = vlaneseq
    %v3250 = vshrl.u32 %v3249, 7
    %v3251 = vsub.s32 0, %v3250
    %v3252 = vrot.slane %v2897, %v3251
    %v3253 = vlaneseq
    %v3254 = vshrl.u32 %v3253, 7
    %v3255 = vsub.s32 0, %v3254
    %v3256 = vrot.slane %v2898, %v3255
    %v3257 = vlaneseq
    %v3258 = vshrl.u32 %v3257, 7
    %v3259 = vsub.s32 0, %v3258
    %v3260 = vrot.slane %v2899, %v3259
    %v3261 = vlaneseq
    %v3262 = vshrl.u32 %v3261, 7
    %v3263 = vsub.s32 0, %v3262
    %v3264 = vrot.slane %v2900, %v3263
    %v3265 = vlaneseq
    %v3266 = vshrl.u32 %v3265, 7
    %v3267 = vsub.s32 0, %v3266
    %v3268 = vrot.slane %v2901, %v3267
    %v3269 = vlaneseq
    %v3270 = vshrl.u32 %v3269, 7
    %v3271 = vsub.s32 0, %v3270
    %v3272 = vrot.slane %v2902, %v3271
    %v3273 = vlaneseq
    %v3274 = vshrl.u32 %v3273, 7
    %v3275 = vsub.s32 0, %v3274
    %v3276 = vrot.slane %v2903, %v3275
    %v3277 = vlaneseq
    %v3278 = vshrl.u32 %v3277, 7
    %v3279 = vsub.s32 0, %v3278
    %v3280 = vrot.slane %v2904, %v3279
    %v3281 = vlaneseq
    %v3282 = vshrl.u32 %v3281, 7
    %v3283 = vsub.s32 0, %v3282
    %v3284 = vrot.slane %v2905, %v3283
    %v3285 = vlaneseq
    %v3286 = vshrl.u32 %v3285, 7
    %v3287 = vsub.s32 0, %v3286
    %v3288 = vrot.slane %v2906, %v3287
    %v3289 = vlaneseq
    %v3290 = vshrl.u32 %v3289, 7
    %v3291 = vsub.s32 0, %v3290
    %v3292 = vrot.slane %v2907, %v3291
    %v3293 = vlaneseq
    %v3294 = vshrl.u32 %v3293, 7
    %v3295 = vsub.s32 0, %v3294
    %v3296 = vrot.slane %v2908, %v3295
    %v3297 = vlaneseq
    %v3298 = vshrl.u32 %v3297, 7
    %v3299 = vsub.s32 0, %v3298
    %v3300 = vrot.slane %v2909, %v3299
    %v3301 = vlaneseq
    %v3302 = vshrl.u32 %v3301, 7
    %v3303 = vsub.s32 0, %v3302
    %v3304 = vrot.slane %v2910, %v3303
    %v3305 = vlaneseq
    %v3306 = vshrl.u32 %v3305, 7
    %v3307 = vsub.s32 0, %v3306
    %v3308 = vrot.slane %v2911, %v3307
    %v3309 = vlaneseq
    %v3310 = vshrl.u32 %v3309, 7
    %v3311 = vsub.s32 0, %v3310
    %v3312 = vrot.slane %v2912, %v3311
    %v3313 = vlaneseq
    %v3314 = vshrl.u32 %v3313, 7
    %v3315 = vsub.s32 0, %v3314
    %v3316 = vrot.slane %v2913, %v3315
    %v3317 = vlaneseq
    %v3318 = vshrl.u32 %v3317, 7
    %v3319 = vsub.s32 0, %v3318
    %v3320 = vrot.slane %v2914, %v3319
    %v3321 = vlaneseq
    %v3322 = vshrl.u32 %v3321, 7
    %v3323 = vsub.s32 0, %v3322
    %v3324 = vrot.slane %v2915, %v3323
    %v3325 = vlaneseq
    %v3326 = vshrl.u32 %v3325, 7
    %v3327 = vsub.s32 0, %v3326
    %v3328 = vrot.slane %v2916, %v3327
    %v3329 = vlaneseq
    %v3330 = vshrl.u32 %v3329, 7
    %v3331 = vsub.s32 0, %v3330
    %v3332 = vrot.slane %v2917, %v3331
    %v3333 = vlaneseq
    %v3334 = vshrl.u32 %v3333, 7
    %v3335 = vsub.s32 0, %v3334
    %v3336 = vrot.slane %v2918, %v3335
    %v3337 = vlaneseq
    %v3338 = vshrl.u32 %v3337, 7
    %v3339 = vsub.s32 0, %v3338
    %v3340 = vrot.slane %v2919, %v3339
    %v3341 = vlaneseq
    %v3342 = vshrl.u32 %v3341, 7
    %v3343 = vsub.s32 0, %v3342
    %v3344 = vrot.slane %v2920, %v3343
    %v3345 = vlaneseq
    %v3346 = vshrl.u32 %v3345, 7
    %v3347 = vsub.s32 0, %v3346
    %v3348 = vrot.slane %v2921, %v3347
    %v3349 = vlaneseq
    %v3350 = vshrl.u32 %v3349, 7
    %v3351 = vsub.s32 0, %v3350
    %v3352 = vrot.slane %v2922, %v3351
    %v3353 = vlaneseq
    %v3354 = vshrl.u32 %v3353, 7
    %v3355 = vsub.s32 0, %v3354
    %v3356 = vrot.slane %v2923, %v3355
    %v3357 = vlaneseq
    %v3358 = vshrl.u32 %v3357, 7
    %v3359 = vsub.s32 0, %v3358
    %v3360 = vrot.slane %v2924, %v3359
    %v3361 = vlaneseq
    %v3362 = vshrl.u32 %v3361, 7
    %v3363 = vsub.s32 0, %v3362
    %v3364 = vrot.slane %v2925, %v3363
    %v3365 = vlaneseq
    %v3366 = vshrl.u32 %v3365, 7
    %v3367 = vsub.s32 0, %v3366
    %v3368 = vrot.slane %v2926, %v3367
    %v3369 = vlaneseq
    %v3370 = vshrl.u32 %v3369, 7
    %v3371 = vsub.s32 0, %v3370
    %v3372 = vrot.slane %v2927, %v3371
    %v3373 = vlaneseq
    %v3374 = vshrl.u32 %v3373, 7
    %v3375 = vsub.s32 0, %v3374
    %v3376 = vrot.slane %v2928, %v3375
    %v3377 = vlaneseq
    %v3378 = vshrl.u32 %v3377, 7
    %v3379 = vsub.s32 0, %v3378
    %v3380 = vrot.slane %v2929, %v3379
    %v3381 = vlaneseq
    %v3382 = vshrl.u32 %v3381, 7
    %v3383 = vsub.s32 0, %v3382
    %v3384 = vrot.slane %v2930, %v3383
    %v3385 = vlaneseq
    %v3386 = vshrl.u32 %v3385, 7
    %v3387 = vsub.s32 0, %v3386
    %v3388 = vrot.slane %v2931, %v3387
    %v3389 = vlaneseq
    %v3390 = vshrl.u32 %v3389, 7
    %v3391 = vsub.s32 0, %v3390
    %v3392 = vrot.slane %v2932, %v3391
    %v3393 = vlaneseq
    %v3394 = vshrl.u32 %v3393, 7
    %v3395 = vsub.s32 0, %v3394
    %v3396 = vrot.slane %v2933, %v3395
    %v3397 = vlaneseq
    %v3398 = vshrl.u32 %v3397, 7
    %v3399 = vsub.s32 0, %v3398
    %v3400 = vrot.slane %v2934, %v3399
    %v3401 = vlaneseq
    %v3402 = vshrl.u32 %v3401, 7
    %v3403 = vsub.s32 0, %v3402
    %v3404 = vrot.slane %v2935, %v3403
    %v3405 = vlaneseq
    %v3406 = vshrl.u32 %v3405, 7
    %v3407 = vsub.s32 0, %v3406
    %v3408 = vrot.slane %v2936, %v3407
    %v3409 = vlaneseq
    %v3410 = vshrl.u32 %v3409, 7
    %v3411 = vsub.s32 0, %v3410
    %v3412 = vrot.slane %v2937, %v3411
    %v3413 = vlaneseq
    %v3414 = vshrl.u32 %v3413, 7
    %v3415 = vsub.s32 0, %v3414
    %v3416 = vrot.slane %v2938, %v3415
    %v3417 = vlaneseq
    %v3418 = vshrl.u32 %v3417, 7
    %v3419 = vsub.s32 0, %v3418
    %v3420 = vrot.slane %v2939, %v3419
    %v3421 = vlaneseq
    %v3422 = vshrl.u32 %v3421, 7
    %v3423 = vsub.s32 0, %v3422
    %v3424 = vrot.slane %v2940, %v3423
    %v3425 = vlaneseq
    %v3426 = vshrl.u32 %v3425, 7
    %v3427 = vsub.s32 0, %v3426
    %v3428 = vrot.slane %v2941, %v3427
    %v3429 = vlaneseq
    %v3430 = vshrl.u32 %v3429, 7
    %v3431 = vsub.s32 0, %v3430
    %v3432 = vrot.slane %v2942, %v3431
    %v3433 = vlaneseq
    %v3434 = vshrl.u32 %v3433, 7
    %v3435 = vsub.s32 0, %v3434
    %v3436 = vrot.slane %v2943, %v3435
    %v3437 = vlaneseq
    %v3438 = vshrl.u32 %v3437, 7
    %v3439 = vsub.s32 0, %v3438
    %v3440 = vrot.slane %v2944, %v3439
    %v3441 = vlaneseq
    %v3442 = vshrl.u32 %v3441, 7
    %v3443 = vsub.s32 0, %v3442
    %v3444 = vrot.slane %v2945, %v3443
    %v3445 = vlaneseq
    %v3446 = vshrl.u32 %v3445, 7
    %v3447 = vsub.s32 0, %v3446
    %v3448 = vrot.slane %v2946, %v3447
    %v3449 = vlaneseq
    %v3450 = vshrl.u32 %v3449, 7
    %v3451 = vsub.s32 0, %v3450
    %v3452 = vrot.slane %v2947, %v3451
    %v3453 = vlaneseq
    %v3454 = vshrl.u32 %v3453, 7
    %v3455 = vsub.s32 0, %v3454
    %v3456 = vrot.slane %v2948, %v3455
    %v3457 = vlaneseq
    %v3458 = vshrl.u32 %v3457, 7
    %v3459 = vsub.s32 0, %v3458
    %v3460 = vrot.slane %v2949, %v3459
    %v3461 = vlaneseq
    %v3462 = vshrl.u32 %v3461, 7
    %v3463 = vsub.s32 0, %v3462
    %v3464 = vrot.slane %v2950, %v3463
    %v3465 = vlaneseq
    %v3466 = vshrl.u32 %v3465, 7
    %v3467 = vsub.s32 0, %v3466
    %v3468 = vrot.slane %v2951, %v3467
    %v3469 = vlaneseq
    %v3470 = vshrl.u32 %v3469, 7
    %v3471 = vsub.s32 0, %v3470
    %v3472 = vrot.slane %v2952, %v3471
    %v3473 = vlaneseq
    %v3474 = vshrl.u32 %v3473, 7
    %v3475 = vsub.s32 0, %v3474
    %v3476 = vrot.slane %v2953, %v3475
    %v3477 = vlaneseq
    %v3478 = vshrl.u32 %v3477, 7
    %v3479 = vsub.s32 0, %v3478
    %v3480 = vrot.slane %v2954, %v3479
    %v3481 = vlaneseq
    %v3482 = vshrl.u32 %v3481, 7
    %v3483 = vsub.s32 0, %v3482
    %v3484 = vrot.slane %v2955, %v3483
    %v3485 = vlaneseq
    %v3486 = vshrl.u32 %v3485, 7
    %v3487 = vsub.s32 0, %v3486
    %v3488 = vrot.slane %v2956, %v3487
    %v3489 = vlaneseq
    %v3490 = vshrl.u32 %v3489, 7
    %v3491 = vsub.s32 0, %v3490
    %v3492 = vrot.slane %v2957, %v3491
    %v3493 = vlaneseq
    %v3494 = vshrl.u32 %v3493, 7
    %v3495 = vsub.s32 0, %v3494
    %v3496 = vrot.slane %v2958, %v3495
    %v3497 = vlaneseq
    %v3498 = vshrl.u32 %v3497, 7
    %v3499 = vsub.s32 0, %v3498
    %v3500 = vrot.slane %v2959, %v3499
    %v3501 = vlaneseq
    %v3502 = vshrl.u32 %v3501, 7
    %v3503 = vsub.s32 0, %v3502
    %v3504 = vrot.slane %v2960, %v3503
    %v3505 = vlaneseq
    %v3506 = vshrl.u32 %v3505, 7
    %v3507 = vsub.s32 0, %v3506
    %v3508 = vrot.slane %v2961, %v3507
    %v3509 = vlaneseq
    %v3510 = vshrl.u32 %v3509, 7
    %v3511 = vsub.s32 0, %v3510
    %v3512 = vrot.slane %v2962, %v3511
    %v3513 = vlaneseq
    %v3514 = vshrl.u32 %v3513, 7
    %v3515 = vsub.s32 0, %v3514
    %v3516 = vrot.slane %v2963, %v3515
    %v3517 = vlaneseq
    %v3518 = vshrl.u32 %v3517, 7
    %v3519 = vsub.s32 0, %v3518
    %v3520 = vrot.slane %v2964, %v3519
    %v3521 = vlaneseq
    %v3522 = vshrl.u32 %v3521, 7
    %v3523 = vsub.s32 0, %v3522
    %v3524 = vrot.slane %v2965, %v3523
    %v3525 = vlaneseq
    %v3526 = vshrl.u32 %v3525, 7
    %v3527 = vsub.s32 0, %v3526
    %v3528 = vrot.slane %v2966, %v3527
    %v3529 = vlaneseq
    %v3530 = vshrl.u32 %v3529, 7
    %v3531 = vsub.s32 0, %v3530
    %v3532 = vrot.slane %v2967, %v3531
    %v3533 = vlaneseq
    %v3534 = vshrl.u32 %v3533, 7
    %v3535 = vsub.s32 0, %v3534
    %v3536 = vrot.slane %v2968, %v3535
    %v3537 = vlaneseq
    %v3538 = vshrl.u32 %v3537, 7
    %v3539 = vsub.s32 0, %v3538
    %v3540 = vrot.slane %v2969, %v3539
    %v3541 = vlaneseq
    %v3542 = vshrl.u32 %v3541, 7
    %v3543 = vsub.s32 0, %v3542
    %v3544 = vrot.slane %v2970, %v3543
    %v3545 = vlaneseq
    %v3546 = vshrl.u32 %v3545, 7
    %v3547 = vsub.s32 0, %v3546
    %v3548 = vrot.slane %v2971, %v3547
    %v3549 = vlaneseq
    %v3550 = vshrl.u32 %v3549, 7
    %v3551 = vsub.s32 0, %v3550
    %v3552 = vrot.slane %v2972, %v3551
    %v3553 = vlaneseq
    %v3554 = vshrl.u32 %v3553, 7
    %v3555 = vsub.s32 0, %v3554
    %v3556 = vrot.slane %v2973, %v3555
    %v3557 = vlaneseq
    %v3558 = vshrl.u32 %v3557, 7
    %v3559 = vsub.s32 0, %v3558
    %v3560 = vrot.slane %v2974, %v3559
    %v3561 = vlaneseq
    %v3562 = vshrl.u32 %v3561, 7
    %v3563 = vsub.s32 0, %v3562
    %v3564 = vrot.slane %v2975, %v3563
    %v3565 = vlaneseq
    %v3566 = vshrl.u32 %v3565, 7
    %v3567 = vsub.s32 0, %v3566
    %v3568 = vrot.slane %v2976, %v3567
    %v3569 = vlaneseq
    %v3570 = vshrl.u32 %v3569, 7
    %v3571 = vsub.s32 0, %v3570
    %v3572 = vrot.slane %v2977, %v3571
    %v3573 = vlaneseq
    %v3574 = vshrl.u32 %v3573, 7
    %v3575 = vsub.s32 0, %v3574
    %v3576 = vrot.slane %v2978, %v3575
    %v3577 = vlaneseq
    %v3578 = vshrl.u32 %v3577, 7
    %v3579 = vsub.s32 0, %v3578
    %v3580 = vrot.slane %v2979, %v3579
    %v3581 = vlaneseq
    %v3582 = vshrl.u32 %v3581, 7
    %v3583 = vsub.s32 0, %v3582
    %v3584 = vrot.slane %v2980, %v3583
    %v3585 = vlaneseq
    %v3586 = vshrl.u32 %v3585, 7
    %v3587 = vsub.s32 0, %v3586
    %v3588 = vrot.slane %v2981, %v3587
    %v3589 = vlaneseq
    %v3590 = vshrl.u32 %v3589, 7
    %v3591 = vsub.s32 0, %v3590
    %v3592 = vrot.slane %v2982, %v3591
    %v3593 = vlaneseq
    %v3594 = vshrl.u32 %v3593, 7
    %v3595 = vsub.s32 0, %v3594
    %v3596 = vrot.slane %v2983, %v3595
    %v3597 = vlaneseq
    %v3598 = vshrl.u32 %v3597, 7
    %v3599 = vsub.s32 0, %v3598
    %v3600 = vrot.slane %v2984, %v3599
    %v3601 = vlaneseq
    %v3602 = vshrl.u32 %v3601, 7
    %v3603 = vsub.s32 0, %v3602
    %v3604 = vrot.slane %v2985, %v3603
    %v3605 = vlaneseq
    %v3606 = vshrl.u32 %v3605, 7
    %v3607 = vsub.s32 0, %v3606
    %v3608 = vrot.slane %v2986, %v3607
    %v3609 = vlaneseq
    %v3610 = vshrl.u32 %v3609, 7
    %v3611 = vsub.s32 0, %v3610
    %v3612 = vrot.slane %v2987, %v3611
    %v3613 = vlaneseq
    %v3614 = vshrl.u32 %v3613, 7
    %v3615 = vsub.s32 0, %v3614
    %v3616 = vrot.slane %v2988, %v3615
    %v3617 = vlaneseq
    %v3618 = vshrl.u32 %v3617, 7
    %v3619 = vsub.s32 0, %v3618
    %v3620 = vrot.slane %v2989, %v3619
    %v3621 = vlaneseq
    %v3622 = vshrl.u32 %v3621, 7
    %v3623 = vsub.s32 0, %v3622
    %v3624 = vrot.slane %v2990, %v3623
    %v3625 = vlaneseq
    %v3626 = vshrl.u32 %v3625, 7
    %v3627 = vsub.s32 0, %v3626
    %v3628 = vrot.slane %v2991, %v3627
    %v3629 = vlaneseq
    %v3630 = vshrl.u32 %v3629, 7
    %v3631 = vsub.s32 0, %v3630
    %v3632 = vrot.slane %v2992, %v3631
    %v3633 = vlaneseq
    %v3634 = vshrl.u32 %v3633, 7
    %v3635 = vsub.s32 0, %v3634
    %v3636 = vrot.slane %v2993, %v3635
    %v3637 = vlaneseq
    %v3638 = vshrl.u32 %v3637, 7
    %v3639 = vsub.s32 0, %v3638
    %v3640 = vrot.slane %v2994, %v3639
    %v3641 = vlaneseq
    %v3642 = vshrl.u32 %v3641, 7
    %v3643 = vsub.s32 0, %v3642
    %v3644 = vrot.slane %v2995, %v3643
    %v3645 = vlaneseq
    %v3646 = vshrl.u32 %v3645, 7
    %v3647 = vsub.s32 0, %v3646
    %v3648 = vrot.slane %v2996, %v3647
    %v3649 = vlaneseq
    %v3650 = vshrl.u32 %v3649, 7
    %v3651 = vsub.s32 0, %v3650
    %v3652 = vrot.slane %v2997, %v3651
    %v3653 = vlaneseq
    %v3654 = vshrl.u32 %v3653, 7
    %v3655 = vsub.s32 0, %v3654
    %v3656 = vrot.slane %v2998, %v3655
    %v3657 = vlaneseq
    %v3658 = vshrl.u32 %v3657, 7
    %v3659 = vsub.s32 0, %v3658
    %v3660 = vrot.slane %v2999, %v3659
    %v3661 = vlaneseq
    %v3662 = vshrl.u32 %v3661, 7
    %v3663 = vsub.s32 0, %v3662
    %v3664 = vrot.slane %v3000, %v3663
    %v3665 = vlaneseq
    %v3666 = vshrl.u32 %v3665, 7
    %v3667 = vsub.s32 0, %v3666
    %v3668 = vrot.slane %v3001, %v3667
    %v3669 = vlaneseq
    %v3670 = vshrl.u32 %v3669, 7
    %v3671 = vsub.s32 0, %v3670
    %v3672 = vrot.slane %v3002, %v3671
    %v3673 = vlaneseq
    %v3674 = vshrl.u32 %v3673, 7
    %v3675 = vsub.s32 0, %v3674
    %v3676 = vrot.slane %v3003, %v3675
    %v3677 = vlaneseq
    %v3678 = vshrl.u32 %v3677, 7
    %v3679 = vsub.s32 0, %v3678
    %v3680 = vrot.slane %v3004, %v3679
    %v3681 = vlaneseq
    %v3682 = vshrl.u32 %v3681, 7
    %v3683 = vsub.s32 0, %v3682
    %v3684 = vrot.slane %v3005, %v3683
    %v3685 = vlaneseq
    %v3686 = vshrl.u32 %v3685, 7
    %v3687 = vsub.s32 0, %v3686
    %v3688 = vrot.slane %v3006, %v3687
    %v3689 = vlaneseq
    %v3690 = vshrl.u32 %v3689, 7
    %v3691 = vsub.s32 0, %v3690
    %v3692 = vrot.slane %v3007, %v3691
    %vm3693 = vcmask 1041409
    %v3694 = vsel %vm3693, %v3188, %v3184
    %vm3695 = vcmask 1042434
    %v3696 = vsel %vm3695, %v3192, %v3694
    %vm3697 = vcmask 1043459
    %v3698 = vsel %vm3697, %v3196, %v3696
    %vm3699 = vcmask 1044484
    %v3700 = vsel %vm3699, %v3200, %v3698
    %vm3701 = vcmask 1045509
    %v3702 = vsel %vm3701, %v3204, %v3700
    %vm3703 = vcmask 1046534
    %v3704 = vsel %vm3703, %v3208, %v3702
    %vm3705 = vcmask 1047559
    %v3706 = vsel %vm3705, %v3212, %v3704
    %v3707 = vsel %vm3693, %v3220, %v3216
    %v3708 = vsel %vm3695, %v3224, %v3707
    %v3709 = vsel %vm3697, %v3228, %v3708
    %v3710 = vsel %vm3699, %v3232, %v3709
    %v3711 = vsel %vm3701, %v3236, %v3710
    %v3712 = vsel %vm3703, %v3240, %v3711
    %v3713 = vsel %vm3705, %v3244, %v3712
    %v3714 = vsel %vm3693, %v3252, %v3248
    %v3715 = vsel %vm3695, %v3256, %v3714
    %v3716 = vsel %vm3697, %v3260, %v3715
    %v3717 = vsel %vm3699, %v3264, %v3716
    %v3718 = vsel %vm3701, %v3268, %v3717
    %v3719 = vsel %vm3703, %v3272, %v3718
    %v3720 = vsel %vm3705, %v3276, %v3719
    %v3721 = vsel %vm3693, %v3284, %v3280
    %v3722 = vsel %vm3695, %v3288, %v3721
    %v3723 = vsel %vm3697, %v3292, %v3722
    %v3724 = vsel %vm3699, %v3296, %v3723
    %v3725 = vsel %vm3701, %v3300, %v3724
    %v3726 = vsel %vm3703, %v3304, %v3725
    %v3727 = vsel %vm3705, %v3308, %v3726
    %v3728 = vsel %vm3693, %v3316, %v3312
    %v3729 = vsel %vm3695, %v3320, %v3728
    %v3730 = vsel %vm3697, %v3324, %v3729
    %v3731 = vsel %vm3699, %v3328, %v3730
    %v3732 = vsel %vm3701, %v3332, %v3731
    %v3733 = vsel %vm3703, %v3336, %v3732
    %v3734 = vsel %vm3705, %v3340, %v3733
    %v3735 = vsel %vm3693, %v3348, %v3344
    %v3736 = vsel %vm3695, %v3352, %v3735
    %v3737 = vsel %vm3697, %v3356, %v3736
    %v3738 = vsel %vm3699, %v3360, %v3737
    %v3739 = vsel %vm3701, %v3364, %v3738
    %v3740 = vsel %vm3703, %v3368, %v3739
    %v3741 = vsel %vm3705, %v3372, %v3740
    %v3742 = vsel %vm3693, %v3380, %v3376
    %v3743 = vsel %vm3695, %v3384, %v3742
    %v3744 = vsel %vm3697, %v3388, %v3743
    %v3745 = vsel %vm3699, %v3392, %v3744
    %v3746 = vsel %vm3701, %v3396, %v3745
    %v3747 = vsel %vm3703, %v3400, %v3746
    %v3748 = vsel %vm3705, %v3404, %v3747
    %v3749 = vsel %vm3693, %v3412, %v3408
    %v3750 = vsel %vm3695, %v3416, %v3749
    %v3751 = vsel %vm3697, %v3420, %v3750
    %v3752 = vsel %vm3699, %v3424, %v3751
    %v3753 = vsel %vm3701, %v3428, %v3752
    %v3754 = vsel %vm3703, %v3432, %v3753
    %v3755 = vsel %vm3705, %v3436, %v3754
    %v3756 = vsel %vm3693, %v3444, %v3440
    %v3757 = vsel %vm3695, %v3448, %v3756
    %v3758 = vsel %vm3697, %v3452, %v3757
    %v3759 = vsel %vm3699, %v3456, %v3758
    %v3760 = vsel %vm3701, %v3460, %v3759
    %v3761 = vsel %vm3703, %v3464, %v3760
    %v3762 = vsel %vm3705, %v3468, %v3761
    %v3763 = vsel %vm3693, %v3476, %v3472
    %v3764 = vsel %vm3695, %v3480, %v3763
    %v3765 = vsel %vm3697, %v3484, %v3764
    %v3766 = vsel %vm3699, %v3488, %v3765
    %v3767 = vsel %vm3701, %v3492, %v3766
    %v3768 = vsel %vm3703, %v3496, %v3767
    %v3769 = vsel %vm3705, %v3500, %v3768
    %v3770 = vsel %vm3693, %v3508, %v3504
    %v3771 = vsel %vm3695, %v3512, %v3770
    %v3772 = vsel %vm3697, %v3516, %v3771
    %v3773 = vsel %vm3699, %v3520, %v3772
    %v3774 = vsel %vm3701, %v3524, %v3773
    %v3775 = vsel %vm3703, %v3528, %v3774
    %v3776 = vsel %vm3705, %v3532, %v3775
    %v3777 = vsel %vm3693, %v3540, %v3536
    %v3778 = vsel %vm3695, %v3544, %v3777
    %v3779 = vsel %vm3697, %v3548, %v3778
    %v3780 = vsel %vm3699, %v3552, %v3779
    %v3781 = vsel %vm3701, %v3556, %v3780
    %v3782 = vsel %vm3703, %v3560, %v3781
    %v3783 = vsel %vm3705, %v3564, %v3782
    %v3784 = vsel %vm3693, %v3572, %v3568
    %v3785 = vsel %vm3695, %v3576, %v3784
    %v3786 = vsel %vm3697, %v3580, %v3785
    %v3787 = vsel %vm3699, %v3584, %v3786
    %v3788 = vsel %vm3701, %v3588, %v3787
    %v3789 = vsel %vm3703, %v3592, %v3788
    %v3790 = vsel %vm3705, %v3596, %v3789
    %v3791 = vsel %vm3693, %v3604, %v3600
    %v3792 = vsel %vm3695, %v3608, %v3791
    %v3793 = vsel %vm3697, %v3612, %v3792
    %v3794 = vsel %vm3699, %v3616, %v3793
    %v3795 = vsel %vm3701, %v3620, %v3794
    %v3796 = vsel %vm3703, %v3624, %v3795
    %v3797 = vsel %vm3705, %v3628, %v3796
    %v3798 = vsel %vm3693, %v3636, %v3632
    %v3799 = vsel %vm3695, %v3640, %v3798
    %v3800 = vsel %vm3697, %v3644, %v3799
    %v3801 = vsel %vm3699, %v3648, %v3800
    %v3802 = vsel %vm3701, %v3652, %v3801
    %v3803 = vsel %vm3703, %v3656, %v3802
    %v3804 = vsel %vm3705, %v3660, %v3803
    %v3805 = vsel %vm3693, %v3668, %v3664
    %v3806 = vsel %vm3695, %v3672, %v3805
    %v3807 = vsel %vm3697, %v3676, %v3806
    %v3808 = vsel %vm3699, %v3680, %v3807
    %v3809 = vsel %vm3701, %v3684, %v3808
    %v3810 = vsel %vm3703, %v3688, %v3809
    %v3811 = vsel %vm3705, %v3692, %v3810
    %3828 = vst.msk [vmem:[%s3019 + $0x1] sm:$0xff] %vm3008, %v3706
    %3829 = vst.msk [vmem:[%s3019 + $0x11] sm:$0xff] %vm3008, %v3713
    %3830 = vst.msk [vmem:[%s3019 + $0x21] sm:$0xff] %vm3008, %v3720
    %3831 = vst.msk [vmem:[%s3019 + $0x31] sm:$0xff] %vm3008, %v3727
    %3832 = vst.msk [vmem:[%s3019 + $0x41] sm:$0xff] %vm3008, %v3734
    %3833 = vst.msk [vmem:[%s3019 + $0x51] sm:$0xff] %vm3008, %v3741
    %3834 = vst.msk [vmem:[%s3019 + $0x61] sm:$0xff] %vm3008, %v3748
    %3835 = vst.msk [vmem:[%s3019 + $0x71] sm:$0xff] %vm3008, %v3755
    %3836 = vst.msk [vmem:[%s3019 + $0xa1] sm:$0xff] %vm3008, %v3762
    %3837 = vst.msk [vmem:[%s3019 + $0xb1] sm:$0xff] %vm3008, %v3769
    %3838 = vst.msk [vmem:[%s3019 + $0xc1] sm:$0xff] %vm3008, %v3776
    %3839 = vst.msk [vmem:[%s3019 + $0xd1] sm:$0xff] %vm3008, %v3783
    %3840 = vst.msk [vmem:[%s3019 + $0xe1] sm:$0xff] %vm3008, %v3790
    %3841 = vst.msk [vmem:[%s3019 + $0xf1] sm:$0xff] %vm3008, %v3797
    %3842 = vst.msk [vmem:[%s3019 + $0x101] sm:$0xff] %vm3008, %v3804
    %3843 = vst.msk [vmem:[%s3019 + $0x111] sm:$0xff] %vm3008, %v3811
    %v3844 = vld [vmem:[#allocation3] sm:$0xff]
    %v3845 = vld [vmem:[#allocation3 + $0x10] sm:$0xff]
    %v3846 = vld [vmem:[#allocation3 + $0x20] sm:$0xff]
    %v3847 = vld [vmem:[#allocation3 + $0x30] sm:$0xff]
    %v3848 = vld [vmem:[#allocation3 + $0x40] sm:$0xff]
    %v3849 = vld [vmem:[#allocation3 + $0x50] sm:$0xff]
    %v3850 = vld [vmem:[#allocation3 + $0x60] sm:$0xff]
    %v3851 = vld [vmem:[#allocation3 + $0x70] sm:$0xff]
    %v3852 = vld [vmem:[#allocation3 + $0xa0] sm:$0xff]
    %v3853 = vld [vmem:[#allocation3 + $0xb0] sm:$0xff]
    %v3854 = vld [vmem:[#allocation3 + $0xc0] sm:$0xff]
    %v3855 = vld [vmem:[#allocation3 + $0xd0] sm:$0xff]
    %v3856 = vld [vmem:[#allocation3 + $0xe0] sm:$0xff]
    %v3857 = vld [vmem:[#allocation3 + $0xf0] sm:$0xff]
    %v3858 = vld [vmem:[#allocation3 + $0x100] sm:$0xff]
    %v3859 = vld [vmem:[#allocation3 + $0x110] sm:$0xff]
    %v3860 = vpack.c.bf16 %v3845, %v3844
    %v3861 = vpack.c.bf16 %v3847, %v3846
    %v3862 = vpack.c.bf16 %v3849, %v3848
    %v3863 = vpack.c.bf16 %v3851, %v3850
    %v3864 = vpack.c.bf16 %v3853, %v3852
    %v3865 = vpack.c.bf16 %v3855, %v3854
    %v3866 = vpack.c.bf16 %v3857, %v3856
    %v3867 = vpack.c.bf16 %v3859, %v3858
    %v3868 = vld [vmem:[%s3] sm:$0xf]
    %v3869 = vld [vmem:[%s3 + $0x4] sm:$0xf]
    %v3870 = vld [vmem:[#allocation3 + $0x1] sm:$0xff]
    %v3871 = vld [vmem:[#allocation3 + $0x11] sm:$0xff]
    %v3872 = vld [vmem:[#allocation3 + $0x21] sm:$0xff]
    %v3873 = vld [vmem:[#allocation3 + $0x31] sm:$0xff]
    %v3874 = vld [vmem:[#allocation3 + $0x41] sm:$0xff]
    %v3875 = vld [vmem:[#allocation3 + $0x51] sm:$0xff]
    %v3876 = vld [vmem:[#allocation3 + $0x61] sm:$0xff]
    %v3877 = vld [vmem:[#allocation3 + $0x71] sm:$0xff]
    %v3878 = vld [vmem:[#allocation3 + $0xa1] sm:$0xff]
    %v3879 = vld [vmem:[#allocation3 + $0xb1] sm:$0xff]
    %v3880 = vld [vmem:[#allocation3 + $0xc1] sm:$0xff]
    %v3881 = vld [vmem:[#allocation3 + $0xd1] sm:$0xff]
    %v3882 = vld [vmem:[#allocation3 + $0xe1] sm:$0xff]
    %v3883 = vld [vmem:[#allocation3 + $0xf1] sm:$0xff]
    %v3884 = vld [vmem:[#allocation3 + $0x101] sm:$0xff]
    %v3885 = vld [vmem:[#allocation3 + $0x111] sm:$0xff]
    %v3886 = vpack.c.bf16 %v3871, %v3870
    %v3887 = vpack.c.bf16 %v3873, %v3872
    %v3888 = vpack.c.bf16 %v3875, %v3874
    %v3889 = vpack.c.bf16 %v3877, %v3876
    %v3890 = vpack.c.bf16 %v3879, %v3878
    %v3891 = vpack.c.bf16 %v3881, %v3880
    %v3892 = vpack.c.bf16 %v3883, %v3882
    %v3893 = vpack.c.bf16 %v3885, %v3884
    %s3894 = scalar_lea.vmem %s3, 8
    %v3895 = vld [vmem:[%s3894] sm:$0xf]
    %v3896 = vld [vmem:[%s3894 + $0x4] sm:$0xf]
    %v3899 = vunpack.c.l.b16 %v3895
    %v3900 = vunpack.c.l.b16 %v3896
    %v3901 = vpack.c.b16 %v3900, %v3899
    %v3904 = vsel %vm3008, %v3886, 0
    %v3907 = vsel %vm3008, %v3887, 0
    %v3910 = vsel %vm3008, %v3888, 0
    %v3913 = vsel %vm3008, %v3889, 0
    %v3916 = vsel %vm3008, %v3890, 0
    %v3919 = vsel %vm3008, %v3891, 0
    %v3922 = vsel %vm3008, %v3892, 0
    %v3925 = vsel %vm3008, %v3893, 0
    %3927 = vmatprep.subr.bf16.mxu0 0
    %3928 = vmatpush1.bf16.msra.mxu0 %v3901
    %3929 = vmatprep.subr.bf16.mxu0 0
    %3930 = vmatpush1.bf16.msra.mxu0 0
    %3931 = vmatprep.subr.bf16.mxu0 0
    %3932 = vmatpush1.bf16.msra.mxu0 0
    %3933 = vmatprep.subr.bf16.mxu0 0
    %3934 = vmatpush1.bf16.msra.mxu0 0
    %3935 = vmatprep.subr.bf16.mxu0 0
    %3936 = vmatpush1.bf16.msra.mxu0 0
    %3937 = vmatprep.subr.bf16.mxu0 0
    %3938 = vmatpush1.bf16.msra.mxu0 0
    %3939 = vmatprep.subr.bf16.mxu0 0
    %3940 = vmatpush1.bf16.msra.mxu0 0
    %3941 = vmatprep.subr.bf16.mxu0 0
    %3942 = vmatpush1.bf16.msra.mxu0 0
    %3943 = vmatprep.subr.bf16.mxu0 0
    %3944 = vmatpush1.bf16.msra.mxu0 0
    %3945 = vmatprep.subr.bf16.mxu0 0
    %3946 = vmatpush1.bf16.msra.mxu0 0
    %3947 = vmatprep.subr.bf16.mxu0 0
    %3948 = vmatpush1.bf16.msra.mxu0 0
    %3949 = vmatprep.subr.bf16.mxu0 0
    %3950 = vmatpush1.bf16.msra.mxu0 0
    %3951 = vmatprep.subr.bf16.mxu0 0
    %3952 = vmatpush1.bf16.msra.mxu0 0
    %3953 = vmatprep.subr.bf16.mxu0 0
    %3954 = vmatpush1.bf16.msra.mxu0 0
    %3955 = vmatprep.subr.bf16.mxu0 0
    %3956 = vmatpush1.bf16.msra.mxu0 0
    %3957 = vmatprep.subr.bf16.mxu0 0
    %3958 = vmatpush1.bf16.msra.mxu0 0
    %3959 = vmatprep.mubr.bf16.mxu0 0
    %3960 = vmatmul.mubr.bf16.gmra.mrb[0].mxu0 %v3904
    %v3961 = vpop.f32.mrb[0].mxu0
    %v3962 = vadd.f32 0.0, %v3961
    %v3963 = vpop.f32.mrb[0].mxu0
    %v3964 = vpop.f32.mrb[0].mxu0
    %v3965 = vadd.f32 0.0, %v3964
    %v3966 = vpop.f32.mrb[0].mxu0
    %3967 = vmatprep.mubr.bf16.mxu0 0
    %3968 = vmatmul.mubr.bf16.gmra.mrb[0].mxu0 %v3907
    %v3969 = vpop.f32.mrb[0].mxu0
    %v3970 = vadd.f32 0.0, %v3969
    %v3971 = vpop.f32.mrb[0].mxu0
    %v3972 = vpop.f32.mrb[0].mxu0
    %v3973 = vadd.f32 0.0, %v3972
    %v3974 = vpop.f32.mrb[0].mxu0
    %3975 = vmatprep.mubr.bf16.mxu0 0
    %3976 = vmatmul.mubr.bf16.gmra.mrb[0].mxu0 %v3910
    %v3977 = vpop.f32.mrb[0].mxu0
    %v3978 = vadd.f32 0.0, %v3977
    %v3979 = vpop.f32.mrb[0].mxu0
    %v3980 = vpop.f32.mrb[0].mxu0
    %v3981 = vadd.f32 0.0, %v3980
    %v3982 = vpop.f32.mrb[0].mxu0
    %3983 = vmatprep.mubr.bf16.mxu0 0
    %3984 = vmatmul.mubr.bf16.gmra.mrb[0].mxu0 %v3913
    %v3985 = vpop.f32.mrb[0].mxu0
    %v3986 = vadd.f32 0.0, %v3985
    %v3987 = vpop.f32.mrb[0].mxu0
    %v3988 = vpop.f32.mrb[0].mxu0
    %v3989 = vadd.f32 0.0, %v3988
    %v3990 = vpop.f32.mrb[0].mxu0
    %3991 = vmatprep.mubr.bf16.mxu0 0
    %3992 = vmatmul.mubr.bf16.gmra.mrb[0].mxu0 %v3916
    %v3993 = vpop.f32.mrb[0].mxu0
    %v3994 = vadd.f32 0.0, %v3993
    %v3995 = vpop.f32.mrb[0].mxu0
    %v3996 = vpop.f32.mrb[0].mxu0
    %v3997 = vadd.f32 0.0, %v3996
    %v3998 = vpop.f32.mrb[0].mxu0
    %3999 = vmatprep.mubr.bf16.mxu0 0
    %4000 = vmatmul.mubr.bf16.gmra.mrb[0].mxu0 %v3919
    %v4001 = vpop.f32.mrb[0].mxu0
    %v4002 = vadd.f32 0.0, %v4001
    %v4003 = vpop.f32.mrb[0].mxu0
    %v4004 = vpop.f32.mrb[0].mxu0
    %v4005 = vadd.f32 0.0, %v4004
    %v4006 = vpop.f32.mrb[0].mxu0
    %4007 = vmatprep.mubr.bf16.mxu0 0
    %4008 = vmatmul.mubr.bf16.gmra.mrb[0].mxu0 %v3922
    %v4009 = vpop.f32.mrb[0].mxu0
    %v4010 = vadd.f32 0.0, %v4009
    %v4011 = vpop.f32.mrb[0].mxu0
    %v4012 = vpop.f32.mrb[0].mxu0
    %v4013 = vadd.f32 0.0, %v4012
    %v4014 = vpop.f32.mrb[0].mxu0
    %4015 = vmatprep.mubr.bf16.mxu0 0
    %4016 = vmatmul.mubr.bf16.gmra.mrb[0].mxu0 %v3925
    %v4017 = vpop.f32.mrb[0].mxu0
    %v4018 = vadd.f32 0.0, %v4017
    %v4019 = vpop.f32.mrb[0].mxu0
    %v4020 = vpop.f32.mrb[0].mxu0
    %v4021 = vadd.f32 0.0, %v4020
    %v4022 = vpop.f32.mrb[0].mxu0
    %4023 = vdwg.mxu0
    %v4026 = vunpack.c.l.b16 %v3868
    %v4027 = vunpack.c.l.b16 %v3869
    %v4028 = vpack.c.b16 %v4027, %v4026
    %v4031 = vsel %vm3008, %v3860, 0
    %v4034 = vsel %vm3008, %v3861, 0
    %v4037 = vsel %vm3008, %v3862, 0
    %v4040 = vsel %vm3008, %v3863, 0
    %v4043 = vsel %vm3008, %v3864, 0
    %v4046 = vsel %vm3008, %v3865, 0
    %v4049 = vsel %vm3008, %v3866, 0
    %v4052 = vsel %vm3008, %v3867, 0
    %4054 = vmatprep.subr.bf16.mxu0 0
    %4055 = vmatpush1.bf16.msra.mxu0 %v4028
    %4056 = vmatprep.subr.bf16.mxu0 0
    %4057 = vmatpush1.bf16.msra.mxu0 0
    %4058 = vmatprep.subr.bf16.mxu0 0
    %4059 = vmatpush1.bf16.msra.mxu0 0
    %4060 = vmatprep.subr.bf16.mxu0 0
    %4061 = vmatpush1.bf16.msra.mxu0 0
    %4062 = vmatprep.subr.bf16.mxu0 0
    %4063 = vmatpush1.bf16.msra.mxu0 0
    %4064 = vmatprep.subr.bf16.mxu0 0
    %4065 = vmatpush1.bf16.msra.mxu0 0
    %4066 = vmatprep.subr.bf16.mxu0 0
    %4067 = vmatpush1.bf16.msra.mxu0 0
    %4068 = vmatprep.subr.bf16.mxu0 0
    %4069 = vmatpush1.bf16.msra.mxu0 0
    %4070 = vmatprep.subr.bf16.mxu0 0
    %4071 = vmatpush1.bf16.msra.mxu0 0
    %4072 = vmatprep.subr.bf16.mxu0 0
    %4073 = vmatpush1.bf16.msra.mxu0 0
    %4074 = vmatprep.subr.bf16.mxu0 0
    %4075 = vmatpush1.bf16.msra.mxu0 0
    %4076 = vmatprep.subr.bf16.mxu0 0
    %4077 = vmatpush1.bf16.msra.mxu0 0
    %4078 = vmatprep.subr.bf16.mxu0 0
    %4079 = vmatpush1.bf16.msra.mxu0 0
    %4080 = vmatprep.subr.bf16.mxu0 0
    %4081 = vmatpush1.bf16.msra.mxu0 0
    %4082 = vmatprep.subr.bf16.mxu0 0
    %4083 = vmatpush1.bf16.msra.mxu0 0
    %4084 = vmatprep.subr.bf16.mxu0 0
    %4085 = vmatpush1.bf16.msra.mxu0 0
    %4086 = vmatprep.mubr.bf16.mxu0 0
    %4087 = vmatmul.mubr.bf16.gmra.mrb[0].mxu0 %v4031
    %v4088 = vpop.f32.mrb[0].mxu0
    %v4089 = vadd.f32 %v3962, %v4088
    %v4090 = vpop.f32.mrb[0].mxu0
    %v4091 = vpop.f32.mrb[0].mxu0
    %v4092 = vadd.f32 %v3965, %v4091
    %v4093 = vpop.f32.mrb[0].mxu0
    %4094 = vmatprep.mubr.bf16.mxu0 0
    %4095 = vmatmul.mubr.bf16.gmra.mrb[0].mxu0 %v4034
    %v4096 = vpop.f32.mrb[0].mxu0
    %v4097 = vadd.f32 %v3970, %v4096
    %v4098 = vpop.f32.mrb[0].mxu0
    %v4099 = vpop.f32.mrb[0].mxu0
    %v4100 = vadd.f32 %v3973, %v4099
    %v4101 = vpop.f32.mrb[0].mxu0
    %4102 = vmatprep.mubr.bf16.mxu0 0
    %4103 = vmatmul.mubr.bf16.gmra.mrb[0].mxu0 %v4037
    %v4104 = vpop.f32.mrb[0].mxu0
    %v4105 = vadd.f32 %v3978, %v4104
    %v4106 = vpop.f32.mrb[0].mxu0
    %v4107 = vpop.f32.mrb[0].mxu0
    %v4108 = vadd.f32 %v3981, %v4107
    %v4109 = vpop.f32.mrb[0].mxu0
    %4110 = vmatprep.mubr.bf16.mxu0 0
    %4111 = vmatmul.mubr.bf16.gmra.mrb[0].mxu0 %v4040
    %v4112 = vpop.f32.mrb[0].mxu0
    %v4113 = vadd.f32 %v3986, %v4112
    %v4114 = vpop.f32.mrb[0].mxu0
    %v4115 = vpop.f32.mrb[0].mxu0
    %v4116 = vadd.f32 %v3989, %v4115
    %v4117 = vpop.f32.mrb[0].mxu0
    %4118 = vmatprep.mubr.bf16.mxu0 0
    %4119 = vmatmul.mubr.bf16.gmra.mrb[0].mxu0 %v4043
    %v4120 = vpop.f32.mrb[0].mxu0
    %v4121 = vadd.f32 %v3994, %v4120
    %v4122 = vpop.f32.mrb[0].mxu0
    %v4123 = vpop.f32.mrb[0].mxu0
    %v4124 = vadd.f32 %v3997, %v4123
    %v4125 = vpop.f32.mrb[0].mxu0
    %4126 = vmatprep.mubr.bf16.mxu0 0
    %4127 = vmatmul.mubr.bf16.gmra.mrb[0].mxu0 %v4046
    %v4128 = vpop.f32.mrb[0].mxu0
    %v4129 = vadd.f32 %v4002, %v4128
    %v4130 = vpop.f32.mrb[0].mxu0
    %v4131 = vpop.f32.mrb[0].mxu0
    %v4132 = vadd.f32 %v4005, %v4131
    %v4133 = vpop.f32.mrb[0].mxu0
    %4134 = vmatprep.mubr.bf16.mxu0 0
    %4135 = vmatmul.mubr.bf16.gmra.mrb[0].mxu0 %v4049
    %v4136 = vpop.f32.mrb[0].mxu0
    %v4137 = vadd.f32 %v4010, %v4136
    %v4138 = vpop.f32.mrb[0].mxu0
    %v4139 = vpop.f32.mrb[0].mxu0
    %v4140 = vadd.f32 %v4013, %v4139
    %v4141 = vpop.f32.mrb[0].mxu0
    %4142 = vmatprep.mubr.bf16.mxu0 0
    %4143 = vmatmul.mubr.bf16.gmra.mrb[0].mxu0 %v4052
    %v4144 = vpop.f32.mrb[0].mxu0
    %v4145 = vadd.f32 %v4018, %v4144
    %v4146 = vpop.f32.mrb[0].mxu0
    %v4147 = vpop.f32.mrb[0].mxu0
    %v4148 = vadd.f32 %v4021, %v4147
    %v4149 = vpop.f32.mrb[0].mxu0
    %4150 = vdwg.mxu0
    %v4151 = vld [vmem:[#allocation3 + $0x2] sm:$0xff]
    %v4152 = vld [vmem:[#allocation3 + $0x12] sm:$0xff]
    %v4153 = vld [vmem:[#allocation3 + $0x22] sm:$0xff]
    %v4154 = vld [vmem:[#allocation3 + $0x32] sm:$0xff]
    %v4155 = vld [vmem:[#allocation3 + $0x42] sm:$0xff]
    %v4156 = vld [vmem:[#allocation3 + $0x52] sm:$0xff]
    %v4157 = vld [vmem:[#allocation3 + $0x62] sm:$0xff]
    %v4158 = vld [vmem:[#allocation3 + $0x72] sm:$0xff]
    %v4159 = vld [vmem:[#allocation3 + $0xa2] sm:$0xff]
    %v4160 = vld [vmem:[#allocation3 + $0xb2] sm:$0xff]
    %v4161 = vld [vmem:[#allocation3 + $0xc2] sm:$0xff]
    %v4162 = vld [vmem:[#allocation3 + $0xd2] sm:$0xff]
    %v4163 = vld [vmem:[#allocation3 + $0xe2] sm:$0xff]
    %v4164 = vld [vmem:[#allocation3 + $0xf2] sm:$0xff]
    %v4165 = vld [vmem:[#allocation3 + $0x102] sm:$0xff]
    %v4166 = vld [vmem:[#allocation3 + $0x112] sm:$0xff]
    %v4167 = vpack.c.bf16 %v4152, %v4151
    %v4168 = vpack.c.bf16 %v4154, %v4153
    %v4169 = vpack.c.bf16 %v4156, %v4155
    %v4170 = vpack.c.bf16 %v4158, %v4157
    %v4171 = vpack.c.bf16 %v4160, %v4159
    %v4172 = vpack.c.bf16 %v4162, %v4161
    %v4173 = vpack.c.bf16 %v4164, %v4163
    %v4174 = vpack.c.bf16 %v4166, %v4165
    %s4175 = scalar_lea.vmem %s3, 16
    %v4176 = vld [vmem:[%s4175] sm:$0xf]
    %v4177 = vld [vmem:[%s4175 + $0x4] sm:$0xf]
    %v4180 = vunpack.c.l.b16 %v4176
    %v4181 = vunpack.c.l.b16 %v4177
    %v4182 = vpack.c.b16 %v4181, %v4180
    %v4185 = vsel %vm3008, %v4167, 0
    %v4188 = vsel %vm3008, %v4168, 0
    %v4191 = vsel %vm3008, %v4169, 0
    %v4194 = vsel %vm3008, %v4170, 0
    %v4197 = vsel %vm3008, %v4171, 0
    %v4200 = vsel %vm3008, %v4172, 0
    %v4203 = vsel %vm3008, %v4173, 0
    %v4206 = vsel %vm3008, %v4174, 0
    %4208 = vmatprep.subr.bf16.mxu0 0
    %4209 = vmatpush1.bf16.msra.mxu0 %v4182
    %4210 = vmatprep.subr.bf16.mxu0 0
    %4211 = vmatpush1.bf16.msra.mxu0 0
    %4212 = vmatprep.subr.bf16.mxu0 0
    %4213 = vmatpush1.bf16.msra.mxu0 0
    %4214 = vmatprep.subr.bf16.mxu0 0
    %4215 = vmatpush1.bf16.msra.mxu0 0
    %4216 = vmatprep.subr.bf16.mxu0 0
    %4217 = vmatpush1.bf16.msra.mxu0 0
    %4218 = vmatprep.subr.bf16.mxu0 0
    %4219 = vmatpush1.bf16.msra.mxu0 0
    %4220 = vmatprep.subr.bf16.mxu0 0
    %4221 = vmatpush1.bf16.msra.mxu0 0
    %4222 = vmatprep.subr.bf16.mxu0 0
    %4223 = vmatpush1.bf16.msra.mxu0 0
    %4224 = vmatprep.subr.bf16.mxu0 0
    %4225 = vmatpush1.bf16.msra.mxu0 0
    %4226 = vmatprep.subr.bf16.mxu0 0
    %4227 = vmatpush1.bf16.msra.mxu0 0
    %4228 = vmatprep.subr.bf16.mxu0 0
    %4229 = vmatpush1.bf16.msra.mxu0 0
    %4230 = vmatprep.subr.bf16.mxu0 0
    %4231 = vmatpush1.bf16.msra.mxu0 0
    %4232 = vmatprep.subr.bf16.mxu0 0
    %4233 = vmatpush1.bf16.msra.mxu0 0
    %4234 = vmatprep.subr.bf16.mxu0 0
    %4235 = vmatpush1.bf16.msra.mxu0 0
    %4236 = vmatprep.subr.bf16.mxu0 0
    %4237 = vmatpush1.bf16.msra.mxu0 0
    %4238 = vmatprep.subr.bf16.mxu0 0
    %4239 = vmatpush1.bf16.msra.mxu0 0
    %4240 = vmatprep.mubr.bf16.mxu0 0
    %4241 = vmatmul.mubr.bf16.gmra.mrb[0].mxu0 %v4185
    %v4242 = vpop.f32.mrb[0].mxu0
    %v4243 = vadd.f32 0.0, %v4242
    %v4244 = vpop.f32.mrb[0].mxu0
    %v4245 = vpop.f32.mrb[0].mxu0
    %v4246 = vadd.f32 0.0, %v4245
    %v4247 = vpop.f32.mrb[0].mxu0
    %4248 = vmatprep.mubr.bf16.mxu0 0
    %4249 = vmatmul.mubr.bf16.gmra.mrb[0].mxu0 %v4188
    %v4250 = vpop.f32.mrb[0].mxu0
    %v4251 = vadd.f32 0.0, %v4250
    %v4252 = vpop.f32.mrb[0].mxu0
    %v4253 = vpop.f32.mrb[0].mxu0
    %v4254 = vadd.f32 0.0, %v4253
    %v4255 = vpop.f32.mrb[0].mxu0
    %4256 = vmatprep.mubr.bf16.mxu0 0
    %4257 = vmatmul.mubr.bf16.gmra.mrb[0].mxu0 %v4191
    %v4258 = vpop.f32.mrb[0].mxu0
    %v4259 = vadd.f32 0.0, %v4258
    %v4260 = vpop.f32.mrb[0].mxu0
    %v4261 = vpop.f32.mrb[0].mxu0
    %v4262 = vadd.f32 0.0, %v4261
    %v4263 = vpop.f32.mrb[0].mxu0
    %4264 = vmatprep.mubr.bf16.mxu0 0
    %4265 = vmatmul.mubr.bf16.gmra.mrb[0].mxu0 %v4194
    %v4266 = vpop.f32.mrb[0].mxu0
    %v4267 = vadd.f32 0.0, %v4266
    %v4268 = vpop.f32.mrb[0].mxu0
    %v4269 = vpop.f32.mrb[0].mxu0
    %v4270 = vadd.f32 0.0, %v4269
    %v4271 = vpop.f32.mrb[0].mxu0
    %4272 = vmatprep.mubr.bf16.mxu0 0
    %4273 = vmatmul.mubr.bf16.gmra.mrb[0].mxu0 %v4197
    %v4274 = vpop.f32.mrb[0].mxu0
    %v4275 = vadd.f32 0.0, %v4274
    %v4276 = vpop.f32.mrb[0].mxu0
    %v4277 = vpop.f32.mrb[0].mxu0
    %v4278 = vadd.f32 0.0, %v4277
    %v4279 = vpop.f32.mrb[0].mxu0
    %4280 = vmatprep.mubr.bf16.mxu0 0
    %4281 = vmatmul.mubr.bf16.gmra.mrb[0].mxu0 %v4200
    %v4282 = vpop.f32.mrb[0].mxu0
    %v4283 = vadd.f32 0.0, %v4282
    %v4284 = vpop.f32.mrb[0].mxu0
    %v4285 = vpop.f32.mrb[0].mxu0
    %v4286 = vadd.f32 0.0, %v4285
    %v4287 = vpop.f32.mrb[0].mxu0
    %4288 = vmatprep.mubr.bf16.mxu0 0
    %4289 = vmatmul.mubr.bf16.gmra.mrb[0].mxu0 %v4203
    %v4290 = vpop.f32.mrb[0].mxu0
    %v4291 = vadd.f32 0.0, %v4290
    %v4292 = vpop.f32.mrb[0].mxu0
    %v4293 = vpop.f32.mrb[0].mxu0
    %v4294 = vadd.f32 0.0, %v4293
    %v4295 = vpop.f32.mrb[0].mxu0
    %4296 = vmatprep.mubr.bf16.mxu0 0
    %4297 = vmatmul.mubr.bf16.gmra.mrb[0].mxu0 %v4206
    %v4298 = vpop.f32.mrb[0].mxu0
    %v4299 = vadd.f32 0.0, %v4298
    %v4300 = vpop.f32.mrb[0].mxu0
    %v4301 = vpop.f32.mrb[0].mxu0
    %v4302 = vadd.f32 0.0, %v4301
    %v4303 = vpop.f32.mrb[0].mxu0
    %4304 = vdwg.mxu0
    %v4305 = vadd.f32 %v4089, %v4243
    %v4306 = vadd.f32 %v4092, %v4246
    %v4307 = vadd.f32 %v4097, %v4251
    %v4308 = vadd.f32 %v4100, %v4254
    %v4309 = vadd.f32 %v4105, %v4259
    %v4310 = vadd.f32 %v4108, %v4262
    %v4311 = vadd.f32 %v4113, %v4267
    %v4312 = vadd.f32 %v4116, %v4270
    %v4313 = vadd.f32 %v4121, %v4275
    %v4314 = vadd.f32 %v4124, %v4278
    %v4315 = vadd.f32 %v4129, %v4283
    %v4316 = vadd.f32 %v4132, %v4286
    %v4317 = vadd.f32 %v4137, %v4291
    %v4318 = vadd.f32 %v4140, %v4294
    %v4319 = vadd.f32 %v4145, %v4299
    %v4320 = vadd.f32 %v4148, %v4302
    %v4321 = vld [vmem:[%s3019] sm:$0xff]
    %v4322 = vld [vmem:[%s3019 + $0x10] sm:$0xff]
    %v4323 = vld [vmem:[%s3019 + $0x20] sm:$0xff]
    %v4324 = vld [vmem:[%s3019 + $0x30] sm:$0xff]
    %v4325 = vld [vmem:[%s3019 + $0x40] sm:$0xff]
    %v4326 = vld [vmem:[%s3019 + $0x50] sm:$0xff]
    %v4327 = vld [vmem:[%s3019 + $0x60] sm:$0xff]
    %v4328 = vld [vmem:[%s3019 + $0x70] sm:$0xff]
    %v4329 = vld [vmem:[%s3019 + $0xa0] sm:$0xff]
    %v4330 = vld [vmem:[%s3019 + $0xb0] sm:$0xff]
    %v4331 = vld [vmem:[%s3019 + $0xc0] sm:$0xff]
    %v4332 = vld [vmem:[%s3019 + $0xd0] sm:$0xff]
    %v4333 = vld [vmem:[%s3019 + $0xe0] sm:$0xff]
    %v4334 = vld [vmem:[%s3019 + $0xf0] sm:$0xff]
    %v4335 = vld [vmem:[%s3019 + $0x100] sm:$0xff]
    %v4336 = vld [vmem:[%s3019 + $0x110] sm:$0xff]
    %v4337 = vpack.c.bf16 %v4322, %v4321
    %v4338 = vpack.c.bf16 %v4324, %v4323
    %v4339 = vpack.c.bf16 %v4326, %v4325
    %v4340 = vpack.c.bf16 %v4328, %v4327
    %v4341 = vpack.c.bf16 %v4330, %v4329
    %v4342 = vpack.c.bf16 %v4332, %v4331
    %v4343 = vpack.c.bf16 %v4334, %v4333
    %v4344 = vpack.c.bf16 %v4336, %v4335
    %s4345 = scalar_lea.vmem %s3, 24
    %v4346 = vld [vmem:[%s4345] sm:$0xf]
    %v4347 = vld [vmem:[%s4345 + $0x4] sm:$0xf]
    %v4350 = vunpack.c.l.b16 %v4346
    %v4351 = vunpack.c.l.b16 %v4347
    %v4352 = vpack.c.b16 %v4351, %v4350
    %v4355 = vsel %vm3008, %v4337, 0
    %v4358 = vsel %vm3008, %v4338, 0
    %v4361 = vsel %vm3008, %v4339, 0
    %v4364 = vsel %vm3008, %v4340, 0
    %v4367 = vsel %vm3008, %v4341, 0
    %v4370 = vsel %vm3008, %v4342, 0
    %v4373 = vsel %vm3008, %v4343, 0
    %v4376 = vsel %vm3008, %v4344, 0
    %4378 = vmatprep.subr.bf16.mxu0 0
    %4379 = vmatpush1.bf16.msra.mxu0 %v4352
    %4380 = vmatprep.subr.bf16.mxu0 0
    %4381 = vmatpush1.bf16.msra.mxu0 0
    %4382 = vmatprep.subr.bf16.mxu0 0
    %4383 = vmatpush1.bf16.msra.mxu0 0
    %4384 = vmatprep.subr.bf16.mxu0 0
    %4385 = vmatpush1.bf16.msra.mxu0 0
    %4386 = vmatprep.subr.bf16.mxu0 0
    %4387 = vmatpush1.bf16.msra.mxu0 0
    %4388 = vmatprep.subr.bf16.mxu0 0
    %4389 = vmatpush1.bf16.msra.mxu0 0
    %4390 = vmatprep.subr.bf16.mxu0 0
    %4391 = vmatpush1.bf16.msra.mxu0 0
    %4392 = vmatprep.subr.bf16.mxu0 0
    %4393 = vmatpush1.bf16.msra.mxu0 0
    %4394 = vmatprep.subr.bf16.mxu0 0
    %4395 = vmatpush1.bf16.msra.mxu0 0
    %4396 = vmatprep.subr.bf16.mxu0 0
    %4397 = vmatpush1.bf16.msra.mxu0 0
    %4398 = vmatprep.subr.bf16.mxu0 0
    %4399 = vmatpush1.bf16.msra.mxu0 0
    %4400 = vmatprep.subr.bf16.mxu0 0
    %4401 = vmatpush1.bf16.msra.mxu0 0
    %4402 = vmatprep.subr.bf16.mxu0 0
    %4403 = vmatpush1.bf16.msra.mxu0 0
    %4404 = vmatprep.subr.bf16.mxu0 0
    %4405 = vmatpush1.bf16.msra.mxu0 0
    %4406 = vmatprep.subr.bf16.mxu0 0
    %4407 = vmatpush1.bf16.msra.mxu0 0
    %4408 = vmatprep.subr.bf16.mxu0 0
    %4409 = vmatpush1.bf16.msra.mxu0 0
    %4410 = vmatprep.mubr.bf16.mxu0 0
    %4411 = vmatmul.mubr.bf16.gmra.mrb[0].mxu0 %v4355
    %v4412 = vpop.f32.mrb[0].mxu0
    %v4413 = vadd.f32 0.0, %v4412
    %v4414 = vpop.f32.mrb[0].mxu0
    %v4415 = vpop.f32.mrb[0].mxu0
    %v4416 = vadd.f32 0.0, %v4415
    %v4417 = vpop.f32.mrb[0].mxu0
    %4418 = vmatprep.mubr.bf16.mxu0 0
    %4419 = vmatmul.mubr.bf16.gmra.mrb[0].mxu0 %v4358
    %v4420 = vpop.f32.mrb[0].mxu0
    %v4421 = vadd.f32 0.0, %v4420
    %v4422 = vpop.f32.mrb[0].mxu0
    %v4423 = vpop.f32.mrb[0].mxu0
    %v4424 = vadd.f32 0.0, %v4423
    %v4425 = vpop.f32.mrb[0].mxu0
    %4426 = vmatprep.mubr.bf16.mxu0 0
    %4427 = vmatmul.mubr.bf16.gmra.mrb[0].mxu0 %v4361
    %v4428 = vpop.f32.mrb[0].mxu0
    %v4429 = vadd.f32 0.0, %v4428
    %v4430 = vpop.f32.mrb[0].mxu0
    %v4431 = vpop.f32.mrb[0].mxu0
    %v4432 = vadd.f32 0.0, %v4431
    %v4433 = vpop.f32.mrb[0].mxu0
    %4434 = vmatprep.mubr.bf16.mxu0 0
    %4435 = vmatmul.mubr.bf16.gmra.mrb[0].mxu0 %v4364
    %v4436 = vpop.f32.mrb[0].mxu0
    %v4437 = vadd.f32 0.0, %v4436
    %v4438 = vpop.f32.mrb[0].mxu0
    %v4439 = vpop.f32.mrb[0].mxu0
    %v4440 = vadd.f32 0.0, %v4439
    %v4441 = vpop.f32.mrb[0].mxu0
    %4442 = vmatprep.mubr.bf16.mxu0 0
    %4443 = vmatmul.mubr.bf16.gmra.mrb[0].mxu0 %v4367
    %v4444 = vpop.f32.mrb[0].mxu0
    %v4445 = vadd.f32 0.0, %v4444
    %v4446 = vpop.f32.mrb[0].mxu0
    %v4447 = vpop.f32.mrb[0].mxu0
    %v4448 = vadd.f32 0.0, %v4447
    %v4449 = vpop.f32.mrb[0].mxu0
    %4450 = vmatprep.mubr.bf16.mxu0 0
    %4451 = vmatmul.mubr.bf16.gmra.mrb[0].mxu0 %v4370
    %v4452 = vpop.f32.mrb[0].mxu0
    %v4453 = vadd.f32 0.0, %v4452
    %v4454 = vpop.f32.mrb[0].mxu0
    %v4455 = vpop.f32.mrb[0].mxu0
    %v4456 = vadd.f32 0.0, %v4455
    %v4457 = vpop.f32.mrb[0].mxu0
    %4458 = vmatprep.mubr.bf16.mxu0 0
    %4459 = vmatmul.mubr.bf16.gmra.mrb[0].mxu0 %v4373
    %v4460 = vpop.f32.mrb[0].mxu0
    %v4461 = vadd.f32 0.0, %v4460
    %v4462 = vpop.f32.mrb[0].mxu0
    %v4463 = vpop.f32.mrb[0].mxu0
    %v4464 = vadd.f32 0.0, %v4463
    %v4465 = vpop.f32.mrb[0].mxu0
    %4466 = vmatprep.mubr.bf16.mxu0 0
    %4467 = vmatmul.mubr.bf16.gmra.mrb[0].mxu0 %v4376
    %v4468 = vpop.f32.mrb[0].mxu0
    %v4469 = vadd.f32 0.0, %v4468
    %v4470 = vpop.f32.mrb[0].mxu0
    %v4471 = vpop.f32.mrb[0].mxu0
    %v4472 = vadd.f32 0.0, %v4471
    %v4473 = vpop.f32.mrb[0].mxu0
    %4474 = vdwg.mxu0
    %v4475 = vadd.f32 %v4305, %v4413
    %v4476 = vadd.f32 %v4306, %v4416
    %v4477 = vadd.f32 %v4307, %v4421
    %v4478 = vadd.f32 %v4308, %v4424
    %v4479 = vadd.f32 %v4309, %v4429
    %v4480 = vadd.f32 %v4310, %v4432
    %v4481 = vadd.f32 %v4311, %v4437
    %v4482 = vadd.f32 %v4312, %v4440
    %v4483 = vadd.f32 %v4313, %v4445
    %v4484 = vadd.f32 %v4314, %v4448
    %v4485 = vadd.f32 %v4315, %v4453
    %v4486 = vadd.f32 %v4316, %v4456
    %v4487 = vadd.f32 %v4317, %v4461
    %v4488 = vadd.f32 %v4318, %v4464
    %v4489 = vadd.f32 %v4319, %v4469
    %v4490 = vadd.f32 %v4320, %v4472
    %v4491 = vld [vmem:[%s3019 + $0x1] sm:$0xff]
    %v4492 = vld [vmem:[%s3019 + $0x11] sm:$0xff]
    %v4493 = vld [vmem:[%s3019 + $0x21] sm:$0xff]
    %v4494 = vld [vmem:[%s3019 + $0x31] sm:$0xff]
    %v4495 = vld [vmem:[%s3019 + $0x41] sm:$0xff]
    %v4496 = vld [vmem:[%s3019 + $0x51] sm:$0xff]
    %v4497 = vld [vmem:[%s3019 + $0x61] sm:$0xff]
    %v4498 = vld [vmem:[%s3019 + $0x71] sm:$0xff]
    %v4499 = vld [vmem:[%s3019 + $0xa1] sm:$0xff]
    %v4500 = vld [vmem:[%s3019 + $0xb1] sm:$0xff]
    %v4501 = vld [vmem:[%s3019 + $0xc1] sm:$0xff]
    %v4502 = vld [vmem:[%s3019 + $0xd1] sm:$0xff]
    %v4503 = vld [vmem:[%s3019 + $0xe1] sm:$0xff]
    %v4504 = vld [vmem:[%s3019 + $0xf1] sm:$0xff]
    %v4505 = vld [vmem:[%s3019 + $0x101] sm:$0xff]
    %v4506 = vld [vmem:[%s3019 + $0x111] sm:$0xff]
    %v4507 = vpack.c.bf16 %v4492, %v4491
    %v4508 = vpack.c.bf16 %v4494, %v4493
    %v4509 = vpack.c.bf16 %v4496, %v4495
    %v4510 = vpack.c.bf16 %v4498, %v4497
    %v4511 = vpack.c.bf16 %v4500, %v4499
    %v4512 = vpack.c.bf16 %v4502, %v4501
    %v4513 = vpack.c.bf16 %v4504, %v4503
    %v4514 = vpack.c.bf16 %v4506, %v4505
    %s4515 = scalar_lea.vmem %s3, 32
    %v4516 = vld [vmem:[%s4515] sm:$0xf]
    %v4517 = vld [vmem:[%s4515 + $0x4] sm:$0xf]
    %v4520 = vunpack.c.l.b16 %v4516
    %v4521 = vunpack.c.l.b16 %v4517
    %v4522 = vpack.c.b16 %v4521, %v4520
    %v4525 = vsel %vm3008, %v4507, 0
    %v4528 = vsel %vm3008, %v4508, 0
    %v4531 = vsel %vm3008, %v4509, 0
    %v4534 = vsel %vm3008, %v4510, 0
    %v4537 = vsel %vm3008, %v4511, 0
    %v4540 = vsel %vm3008, %v4512, 0
    %v4543 = vsel %vm3008, %v4513, 0
    %v4546 = vsel %vm3008, %v4514, 0
    %4548 = vmatprep.subr.bf16.mxu0 0
    %4549 = vmatpush1.bf16.msra.mxu0 %v4522
    %4550 = vmatprep.subr.bf16.mxu0 0
    %4551 = vmatpush1.bf16.msra.mxu0 0
    %4552 = vmatprep.subr.bf16.mxu0 0
    %4553 = vmatpush1.bf16.msra.mxu0 0
    %4554 = vmatprep.subr.bf16.mxu0 0
    %4555 = vmatpush1.bf16.msra.mxu0 0
    %4556 = vmatprep.subr.bf16.mxu0 0
    %4557 = vmatpush1.bf16.msra.mxu0 0
    %4558 = vmatprep.subr.bf16.mxu0 0
    %4559 = vmatpush1.bf16.msra.mxu0 0
    %4560 = vmatprep.subr.bf16.mxu0 0
    %4561 = vmatpush1.bf16.msra.mxu0 0
    %4562 = vmatprep.subr.bf16.mxu0 0
    %4563 = vmatpush1.bf16.msra.mxu0 0
    %4564 = vmatprep.subr.bf16.mxu0 0
    %4565 = vmatpush1.bf16.msra.mxu0 0
    %4566 = vmatprep.subr.bf16.mxu0 0
    %4567 = vmatpush1.bf16.msra.mxu0 0
    %4568 = vmatprep.subr.bf16.mxu0 0
    %4569 = vmatpush1.bf16.msra.mxu0 0
    %4570 = vmatprep.subr.bf16.mxu0 0
    %4571 = vmatpush1.bf16.msra.mxu0 0
    %4572 = vmatprep.subr.bf16.mxu0 0
    %4573 = vmatpush1.bf16.msra.mxu0 0
    %4574 = vmatprep.subr.bf16.mxu0 0
    %4575 = vmatpush1.bf16.msra.mxu0 0
    %4576 = vmatprep.subr.bf16.mxu0 0
    %4577 = vmatpush1.bf16.msra.mxu0 0
    %4578 = vmatprep.subr.bf16.mxu0 0
    %4579 = vmatpush1.bf16.msra.mxu0 0
    %4580 = vmatprep.mubr.bf16.mxu0 0
    %4581 = vmatmul.mubr.bf16.gmra.mrb[0].mxu0 %v4525
    %v4582 = vpop.f32.mrb[0].mxu0
    %v4583 = vadd.f32 0.0, %v4582
    %v4584 = vpop.f32.mrb[0].mxu0
    %v4585 = vpop.f32.mrb[0].mxu0
    %v4586 = vadd.f32 0.0, %v4585
    %v4587 = vpop.f32.mrb[0].mxu0
    %4588 = vmatprep.mubr.bf16.mxu0 0
    %4589 = vmatmul.mubr.bf16.gmra.mrb[0].mxu0 %v4528
    %v4590 = vpop.f32.mrb[0].mxu0
    %v4591 = vadd.f32 0.0, %v4590
    %v4592 = vpop.f32.mrb[0].mxu0
    %v4593 = vpop.f32.mrb[0].mxu0
    %v4594 = vadd.f32 0.0, %v4593
    %v4595 = vpop.f32.mrb[0].mxu0
    %4596 = vmatprep.mubr.bf16.mxu0 0
    %4597 = vmatmul.mubr.bf16.gmra.mrb[0].mxu0 %v4531
    %v4598 = vpop.f32.mrb[0].mxu0
    %v4599 = vadd.f32 0.0, %v4598
    %v4600 = vpop.f32.mrb[0].mxu0
    %v4601 = vpop.f32.mrb[0].mxu0
    %v4602 = vadd.f32 0.0, %v4601
    %v4603 = vpop.f32.mrb[0].mxu0
    %4604 = vmatprep.mubr.bf16.mxu0 0
    %4605 = vmatmul.mubr.bf16.gmra.mrb[0].mxu0 %v4534
    %v4606 = vpop.f32.mrb[0].mxu0
    %v4607 = vadd.f32 0.0, %v4606
    %v4608 = vpop.f32.mrb[0].mxu0
    %v4609 = vpop.f32.mrb[0].mxu0
    %v4610 = vadd.f32 0.0, %v4609
    %v4611 = vpop.f32.mrb[0].mxu0
    %4612 = vmatprep.mubr.bf16.mxu0 0
    %4613 = vmatmul.mubr.bf16.gmra.mrb[0].mxu0 %v4537
    %v4614 = vpop.f32.mrb[0].mxu0
    %v4615 = vadd.f32 0.0, %v4614
    %v4616 = vpop.f32.mrb[0].mxu0
    %v4617 = vpop.f32.mrb[0].mxu0
    %v4618 = vadd.f32 0.0, %v4617
    %v4619 = vpop.f32.mrb[0].mxu0
    %4620 = vmatprep.mubr.bf16.mxu0 0
    %4621 = vmatmul.mubr.bf16.gmra.mrb[0].mxu0 %v4540
    %v4622 = vpop.f32.mrb[0].mxu0
    %v4623 = vadd.f32 0.0, %v4622
    %v4624 = vpop.f32.mrb[0].mxu0
    %v4625 = vpop.f32.mrb[0].mxu0
    %v4626 = vadd.f32 0.0, %v4625
    %v4627 = vpop.f32.mrb[0].mxu0
    %4628 = vmatprep.mubr.bf16.mxu0 0
    %4629 = vmatmul.mubr.bf16.gmra.mrb[0].mxu0 %v4543
    %v4630 = vpop.f32.mrb[0].mxu0
    %v4631 = vadd.f32 0.0, %v4630
    %v4632 = vpop.f32.mrb[0].mxu0
    %v4633 = vpop.f32.mrb[0].mxu0
    %v4634 = vadd.f32 0.0, %v4633
    %v4635 = vpop.f32.mrb[0].mxu0
    %4636 = vmatprep.mubr.bf16.mxu0 0
    %4637 = vmatmul.mubr.bf16.gmra.mrb[0].mxu0 %v4546
    %v4638 = vpop.f32.mrb[0].mxu0
    %v4639 = vadd.f32 0.0, %v4638
    %v4640 = vpop.f32.mrb[0].mxu0
    %v4641 = vpop.f32.mrb[0].mxu0
    %v4642 = vadd.f32 0.0, %v4641
    %v4643 = vpop.f32.mrb[0].mxu0
    %4644 = vdwg.mxu0
    %v4645 = vadd.f32 %v4475, %v4583
    %v4646 = vadd.f32 %v4476, %v4586
    %v4647 = vadd.f32 %v4477, %v4591
    %v4648 = vadd.f32 %v4478, %v4594
    %v4649 = vadd.f32 %v4479, %v4599
    %v4650 = vadd.f32 %v4480, %v4602
    %v4651 = vadd.f32 %v4481, %v4607
    %v4652 = vadd.f32 %v4482, %v4610
    %v4653 = vadd.f32 %v4483, %v4615
    %v4654 = vadd.f32 %v4484, %v4618
    %v4655 = vadd.f32 %v4485, %v4623
    %v4656 = vadd.f32 %v4486, %v4626
    %v4657 = vadd.f32 %v4487, %v4631
    %v4658 = vadd.f32 %v4488, %v4634
    %v4659 = vadd.f32 %v4489, %v4639
    %v4660 = vadd.f32 %v4490, %v4642
    %v4661 = vld [vmem:[%s3019 + $0x2] sm:$0xff]
    %v4662 = vld [vmem:[%s3019 + $0x12] sm:$0xff]
    %v4663 = vld [vmem:[%s3019 + $0x22] sm:$0xff]
    %v4664 = vld [vmem:[%s3019 + $0x32] sm:$0xff]
    %v4665 = vld [vmem:[%s3019 + $0x42] sm:$0xff]
    %v4666 = vld [vmem:[%s3019 + $0x52] sm:$0xff]
    %v4667 = vld [vmem:[%s3019 + $0x62] sm:$0xff]
    %v4668 = vld [vmem:[%s3019 + $0x72] sm:$0xff]
    %v4669 = vld [vmem:[%s3019 + $0xa2] sm:$0xff]
    %v4670 = vld [vmem:[%s3019 + $0xb2] sm:$0xff]
    %v4671 = vld [vmem:[%s3019 + $0xc2] sm:$0xff]
    %v4672 = vld [vmem:[%s3019 + $0xd2] sm:$0xff]
    %v4673 = vld [vmem:[%s3019 + $0xe2] sm:$0xff]
    %v4674 = vld [vmem:[%s3019 + $0xf2] sm:$0xff]
    %v4675 = vld [vmem:[%s3019 + $0x102] sm:$0xff]
    %v4676 = vld [vmem:[%s3019 + $0x112] sm:$0xff]
    %v4677 = vpack.c.bf16 %v4662, %v4661
    %v4678 = vpack.c.bf16 %v4664, %v4663
    %v4679 = vpack.c.bf16 %v4666, %v4665
    %v4680 = vpack.c.bf16 %v4668, %v4667
    %v4681 = vpack.c.bf16 %v4670, %v4669
    %v4682 = vpack.c.bf16 %v4672, %v4671
    %v4683 = vpack.c.bf16 %v4674, %v4673
    %v4684 = vpack.c.bf16 %v4676, %v4675
    %s4685 = scalar_lea.vmem %s3, 40
    %v4686 = vld [vmem:[%s4685] sm:$0xf]
    %v4687 = vld [vmem:[%s4685 + $0x4] sm:$0xf]
    %v4690 = vunpack.c.l.b16 %v4686
    %v4691 = vunpack.c.l.b16 %v4687
    %v4692 = vpack.c.b16 %v4691, %v4690
    %v4695 = vsel %vm3008, %v4677, 0
    %v4698 = vsel %vm3008, %v4678, 0
    %v4701 = vsel %vm3008, %v4679, 0
    %v4704 = vsel %vm3008, %v4680, 0
    %v4707 = vsel %vm3008, %v4681, 0
    %v4710 = vsel %vm3008, %v4682, 0
    %v4713 = vsel %vm3008, %v4683, 0
    %v4716 = vsel %vm3008, %v4684, 0
    %4718 = vmatprep.subr.bf16.mxu0 0
    %4719 = vmatpush1.bf16.msra.mxu0 %v4692
    %4720 = vmatprep.subr.bf16.mxu0 0
    %4721 = vmatpush1.bf16.msra.mxu0 0
    %4722 = vmatprep.subr.bf16.mxu0 0
    %4723 = vmatpush1.bf16.msra.mxu0 0
    %4724 = vmatprep.subr.bf16.mxu0 0
    %4725 = vmatpush1.bf16.msra.mxu0 0
    %4726 = vmatprep.subr.bf16.mxu0 0
    %4727 = vmatpush1.bf16.msra.mxu0 0
    %4728 = vmatprep.subr.bf16.mxu0 0
    %4729 = vmatpush1.bf16.msra.mxu0 0
    %4730 = vmatprep.subr.bf16.mxu0 0
    %4731 = vmatpush1.bf16.msra.mxu0 0
    %4732 = vmatprep.subr.bf16.mxu0 0
    %4733 = vmatpush1.bf16.msra.mxu0 0
    %4734 = vmatprep.subr.bf16.mxu0 0
    %4735 = vmatpush1.bf16.msra.mxu0 0
    %4736 = vmatprep.subr.bf16.mxu0 0
    %4737 = vmatpush1.bf16.msra.mxu0 0
    %4738 = vmatprep.subr.bf16.mxu0 0
    %4739 = vmatpush1.bf16.msra.mxu0 0
    %4740 = vmatprep.subr.bf16.mxu0 0
    %4741 = vmatpush1.bf16.msra.mxu0 0
    %4742 = vmatprep.subr.bf16.mxu0 0
    %4743 = vmatpush1.bf16.msra.mxu0 0
    %4744 = vmatprep.subr.bf16.mxu0 0
    %4745 = vmatpush1.bf16.msra.mxu0 0
    %4746 = vmatprep.subr.bf16.mxu0 0
    %4747 = vmatpush1.bf16.msra.mxu0 0
    %4748 = vmatprep.subr.bf16.mxu0 0
    %4749 = vmatpush1.bf16.msra.mxu0 0
    %4750 = vmatprep.mubr.bf16.mxu0 0
    %4751 = vmatmul.mubr.bf16.gmra.mrb[0].mxu0 %v4695
    %v4752 = vpop.f32.mrb[0].mxu0
    %v4753 = vadd.f32 0.0, %v4752
    %v4754 = vpop.f32.mrb[0].mxu0
    %v4755 = vpop.f32.mrb[0].mxu0
    %v4756 = vadd.f32 0.0, %v4755
    %v4757 = vpop.f32.mrb[0].mxu0
    %4758 = vmatprep.mubr.bf16.mxu0 0
    %4759 = vmatmul.mubr.bf16.gmra.mrb[0].mxu0 %v4698
    %v4760 = vpop.f32.mrb[0].mxu0
    %v4761 = vadd.f32 0.0, %v4760
    %v4762 = vpop.f32.mrb[0].mxu0
    %v4763 = vpop.f32.mrb[0].mxu0
    %v4764 = vadd.f32 0.0, %v4763
    %v4765 = vpop.f32.mrb[0].mxu0
    %4766 = vmatprep.mubr.bf16.mxu0 0
    %4767 = vmatmul.mubr.bf16.gmra.mrb[0].mxu0 %v4701
    %v4768 = vpop.f32.mrb[0].mxu0
    %v4769 = vadd.f32 0.0, %v4768
    %v4770 = vpop.f32.mrb[0].mxu0
    %v4771 = vpop.f32.mrb[0].mxu0
    %v4772 = vadd.f32 0.0, %v4771
    %v4773 = vpop.f32.mrb[0].mxu0
    %4774 = vmatprep.mubr.bf16.mxu0 0
    %4775 = vmatmul.mubr.bf16.gmra.mrb[0].mxu0 %v4704
    %v4776 = vpop.f32.mrb[0].mxu0
    %v4777 = vadd.f32 0.0, %v4776
    %v4778 = vpop.f32.mrb[0].mxu0
    %v4779 = vpop.f32.mrb[0].mxu0
    %v4780 = vadd.f32 0.0, %v4779
    %v4781 = vpop.f32.mrb[0].mxu0
    %4782 = vmatprep.mubr.bf16.mxu0 0
    %4783 = vmatmul.mubr.bf16.gmra.mrb[0].mxu0 %v4707
    %v4784 = vpop.f32.mrb[0].mxu0
    %v4785 = vadd.f32 0.0, %v4784
    %v4786 = vpop.f32.mrb[0].mxu0
    %v4787 = vpop.f32.mrb[0].mxu0
    %v4788 = vadd.f32 0.0, %v4787
    %v4789 = vpop.f32.mrb[0].mxu0
    %4790 = vmatprep.mubr.bf16.mxu0 0
    %4791 = vmatmul.mubr.bf16.gmra.mrb[0].mxu0 %v4710
    %v4792 = vpop.f32.mrb[0].mxu0
    %v4793 = vadd.f32 0.0, %v4792
    %v4794 = vpop.f32.mrb[0].mxu0
    %v4795 = vpop.f32.mrb[0].mxu0
    %v4796 = vadd.f32 0.0, %v4795
    %v4797 = vpop.f32.mrb[0].mxu0
    %4798 = vmatprep.mubr.bf16.mxu0 0
    %4799 = vmatmul.mubr.bf16.gmra.mrb[0].mxu0 %v4713
    %v4800 = vpop.f32.mrb[0].mxu0
    %v4801 = vadd.f32 0.0, %v4800
    %v4802 = vpop.f32.mrb[0].mxu0
    %v4803 = vpop.f32.mrb[0].mxu0
    %v4804 = vadd.f32 0.0, %v4803
    %v4805 = vpop.f32.mrb[0].mxu0
    %4806 = vmatprep.mubr.bf16.mxu0 0
    %4807 = vmatmul.mubr.bf16.gmra.mrb[0].mxu0 %v4716
    %v4808 = vpop.f32.mrb[0].mxu0
    %v4809 = vadd.f32 0.0, %v4808
    %v4810 = vpop.f32.mrb[0].mxu0
    %v4811 = vpop.f32.mrb[0].mxu0
    %v4812 = vadd.f32 0.0, %v4811
    %v4813 = vpop.f32.mrb[0].mxu0
    %4814 = vdwg.mxu0
    %v4815 = vadd.f32 %v4645, %v4753
    %v4816 = vadd.f32 %v4646, %v4756
    %v4817 = vadd.f32 %v4647, %v4761
    %v4818 = vadd.f32 %v4648, %v4764
    %v4819 = vadd.f32 %v4649, %v4769
    %v4820 = vadd.f32 %v4650, %v4772
    %v4821 = vadd.f32 %v4651, %v4777
    %v4822 = vadd.f32 %v4652, %v4780
    %v4823 = vadd.f32 %v4653, %v4785
    %v4824 = vadd.f32 %v4654, %v4788
    %v4825 = vadd.f32 %v4655, %v4793
    %v4826 = vadd.f32 %v4656, %v4796
    %v4827 = vadd.f32 %v4657, %v4801
    %v4828 = vadd.f32 %v4658, %v4804
    %v4829 = vadd.f32 %v4659, %v4809
    %v4830 = vadd.f32 %v4660, %v4812
    %s4831 = scalar_lea.vmem [#allocation3], 32
    %v4832 = vld [vmem:[%s4831] sm:$0xff]
    %v4833 = vld [vmem:[%s4831 + $0x10] sm:$0xff]
    %v4834 = vld [vmem:[%s4831 + $0x20] sm:$0xff]
    %v4835 = vld [vmem:[%s4831 + $0x30] sm:$0xff]
    %v4836 = vld [vmem:[%s4831 + $0x40] sm:$0xff]
    %v4837 = vld [vmem:[%s4831 + $0x50] sm:$0xff]
    %v4838 = vld [vmem:[%s4831 + $0x60] sm:$0xff]
    %v4839 = vld [vmem:[%s4831 + $0x70] sm:$0xff]
    %v4840 = vld [vmem:[%s4831 + $0xa0] sm:$0xff]
    %v4841 = vld [vmem:[%s4831 + $0xb0] sm:$0xff]
    %v4842 = vld [vmem:[%s4831 + $0xc0] sm:$0xff]
    %v4843 = vld [vmem:[%s4831 + $0xd0] sm:$0xff]
    %v4844 = vld [vmem:[%s4831 + $0xe0] sm:$0xff]
    %v4845 = vld [vmem:[%s4831 + $0xf0] sm:$0xff]
    %v4846 = vld [vmem:[%s4831 + $0x100] sm:$0xff]
    %v4847 = vld [vmem:[%s4831 + $0x110] sm:$0xff]
    %v4848 = vpack.c.bf16 %v4833, %v4832
    %v4849 = vpack.c.bf16 %v4835, %v4834
    %v4850 = vpack.c.bf16 %v4837, %v4836
    %v4851 = vpack.c.bf16 %v4839, %v4838
    %v4852 = vpack.c.bf16 %v4841, %v4840
    %v4853 = vpack.c.bf16 %v4843, %v4842
    %v4854 = vpack.c.bf16 %v4845, %v4844
    %v4855 = vpack.c.bf16 %v4847, %v4846
    %s4856 = scalar_lea.vmem %s3, 48
    %v4857 = vld [vmem:[%s4856] sm:$0xf]
    %v4858 = vld [vmem:[%s4856 + $0x4] sm:$0xf]
    %v4861 = vunpack.c.l.b16 %v4857
    %v4862 = vunpack.c.l.b16 %v4858
    %v4863 = vpack.c.b16 %v4862, %v4861
    %v4866 = vsel %vm3008, %v4848, 0
    %v4869 = vsel %vm3008, %v4849, 0
    %v4872 = vsel %vm3008, %v4850, 0
    %v4875 = vsel %vm3008, %v4851, 0
    %v4878 = vsel %vm3008, %v4852, 0
    %v4881 = vsel %vm3008, %v4853, 0
    %v4884 = vsel %vm3008, %v4854, 0
    %v4887 = vsel %vm3008, %v4855, 0
    %4889 = vmatprep.subr.bf16.mxu0 0
    %4890 = vmatpush1.bf16.msra.mxu0 %v4863
    %4891 = vmatprep.subr.bf16.mxu0 0
    %4892 = vmatpush1.bf16.msra.mxu0 0
    %4893 = vmatprep.subr.bf16.mxu0 0
    %4894 = vmatpush1.bf16.msra.mxu0 0
    %4895 = vmatprep.subr.bf16.mxu0 0
    %4896 = vmatpush1.bf16.msra.mxu0 0
    %4897 = vmatprep.subr.bf16.mxu0 0
    %4898 = vmatpush1.bf16.msra.mxu0 0
    %4899 = vmatprep.subr.bf16.mxu0 0
    %4900 = vmatpush1.bf16.msra.mxu0 0
    %4901 = vmatprep.subr.bf16.mxu0 0
    %4902 = vmatpush1.bf16.msra.mxu0 0
    %4903 = vmatprep.subr.bf16.mxu0 0
    %4904 = vmatpush1.bf16.msra.mxu0 0
    %4905 = vmatprep.subr.bf16.mxu0 0
    %4906 = vmatpush1.bf16.msra.mxu0 0
    %4907 = vmatprep.subr.bf16.mxu0 0
    %4908 = vmatpush1.bf16.msra.mxu0 0
    %4909 = vmatprep.subr.bf16.mxu0 0
    %4910 = vmatpush1.bf16.msra.mxu0 0
    %4911 = vmatprep.subr.bf16.mxu0 0
    %4912 = vmatpush1.bf16.msra.mxu0 0
    %4913 = vmatprep.subr.bf16.mxu0 0
    %4914 = vmatpush1.bf16.msra.mxu0 0
    %4915 = vmatprep.subr.bf16.mxu0 0
    %4916 = vmatpush1.bf16.msra.mxu0 0
    %4917 = vmatprep.subr.bf16.mxu0 0
    %4918 = vmatpush1.bf16.msra.mxu0 0
    %4919 = vmatprep.subr.bf16.mxu0 0
    %4920 = vmatpush1.bf16.msra.mxu0 0
    %4921 = vmatprep.mubr.bf16.mxu0 0
    %4922 = vmatmul.mubr.bf16.gmra.mrb[0].mxu0 %v4866
    %v4923 = vpop.f32.mrb[0].mxu0
    %v4924 = vadd.f32 0.0, %v4923
    %v4925 = vpop.f32.mrb[0].mxu0
    %v4926 = vpop.f32.mrb[0].mxu0
    %v4927 = vadd.f32 0.0, %v4926
    %v4928 = vpop.f32.mrb[0].mxu0
    %4929 = vmatprep.mubr.bf16.mxu0 0
    %4930 = vmatmul.mubr.bf16.gmra.mrb[0].mxu0 %v4869
    %v4931 = vpop.f32.mrb[0].mxu0
    %v4932 = vadd.f32 0.0, %v4931
    %v4933 = vpop.f32.mrb[0].mxu0
    %v4934 = vpop.f32.mrb[0].mxu0
    %v4935 = vadd.f32 0.0, %v4934
    %v4936 = vpop.f32.mrb[0].mxu0
    %4937 = vmatprep.mubr.bf16.mxu0 0
    %4938 = vmatmul.mubr.bf16.gmra.mrb[0].mxu0 %v4872
    %v4939 = vpop.f32.mrb[0].mxu0
    %v4940 = vadd.f32 0.0, %v4939
    %v4941 = vpop.f32.mrb[0].mxu0
    %v4942 = vpop.f32.mrb[0].mxu0
    %v4943 = vadd.f32 0.0, %v4942
    %v4944 = vpop.f32.mrb[0].mxu0
    %4945 = vmatprep.mubr.bf16.mxu0 0
    %4946 = vmatmul.mubr.bf16.gmra.mrb[0].mxu0 %v4875
    %v4947 = vpop.f32.mrb[0].mxu0
    %v4948 = vadd.f32 0.0, %v4947
    %v4949 = vpop.f32.mrb[0].mxu0
    %v4950 = vpop.f32.mrb[0].mxu0
    %v4951 = vadd.f32 0.0, %v4950
    %v4952 = vpop.f32.mrb[0].mxu0
    %4953 = vmatprep.mubr.bf16.mxu0 0
    %4954 = vmatmul.mubr.bf16.gmra.mrb[0].mxu0 %v4878
    %v4955 = vpop.f32.mrb[0].mxu0
    %v4956 = vadd.f32 0.0, %v4955
    %v4957 = vpop.f32.mrb[0].mxu0
    %v4958 = vpop.f32.mrb[0].mxu0
    %v4959 = vadd.f32 0.0, %v4958
    %v4960 = vpop.f32.mrb[0].mxu0
    %4961 = vmatprep.mubr.bf16.mxu0 0
    %4962 = vmatmul.mubr.bf16.gmra.mrb[0].mxu0 %v4881
    %v4963 = vpop.f32.mrb[0].mxu0
    %v4964 = vadd.f32 0.0, %v4963
    %v4965 = vpop.f32.mrb[0].mxu0
    %v4966 = vpop.f32.mrb[0].mxu0
    %v4967 = vadd.f32 0.0, %v4966
    %v4968 = vpop.f32.mrb[0].mxu0
    %4969 = vmatprep.mubr.bf16.mxu0 0
    %4970 = vmatmul.mubr.bf16.gmra.mrb[0].mxu0 %v4884
    %v4971 = vpop.f32.mrb[0].mxu0
    %v4972 = vadd.f32 0.0, %v4971
    %v4973 = vpop.f32.mrb[0].mxu0
    %v4974 = vpop.f32.mrb[0].mxu0
    %v4975 = vadd.f32 0.0, %v4974
    %v4976 = vpop.f32.mrb[0].mxu0
    %4977 = vmatprep.mubr.bf16.mxu0 0
    %4978 = vmatmul.mubr.bf16.gmra.mrb[0].mxu0 %v4887
    %v4979 = vpop.f32.mrb[0].mxu0
    %v4980 = vadd.f32 0.0, %v4979
    %v4981 = vpop.f32.mrb[0].mxu0
    %v4982 = vpop.f32.mrb[0].mxu0
    %v4983 = vadd.f32 0.0, %v4982
    %v4984 = vpop.f32.mrb[0].mxu0
    %4985 = vdwg.mxu0
    %v4986 = vadd.f32 %v4815, %v4924
    %v4987 = vadd.f32 %v4816, %v4927
    %v4988 = vadd.f32 %v4817, %v4932
    %v4989 = vadd.f32 %v4818, %v4935
    %v4990 = vadd.f32 %v4819, %v4940
    %v4991 = vadd.f32 %v4820, %v4943
    %v4992 = vadd.f32 %v4821, %v4948
    %v4993 = vadd.f32 %v4822, %v4951
    %v4994 = vadd.f32 %v4823, %v4956
    %v4995 = vadd.f32 %v4824, %v4959
    %v4996 = vadd.f32 %v4825, %v4964
    %v4997 = vadd.f32 %v4826, %v4967
    %v4998 = vadd.f32 %v4827, %v4972
    %v4999 = vadd.f32 %v4828, %v4975
    %v5000 = vadd.f32 %v4829, %v4980
    %v5001 = vadd.f32 %v4830, %v4983
    %v5002 = vld [vmem:[%s4831 + $0x1] sm:$0xff]
    %v5003 = vld [vmem:[%s4831 + $0x11] sm:$0xff]
    %v5004 = vld [vmem:[%s4831 + $0x21] sm:$0xff]
    %v5005 = vld [vmem:[%s4831 + $0x31] sm:$0xff]
    %v5006 = vld [vmem:[%s4831 + $0x41] sm:$0xff]
    %v5007 = vld [vmem:[%s4831 + $0x51] sm:$0xff]
    %v5008 = vld [vmem:[%s4831 + $0x61] sm:$0xff]
    %v5009 = vld [vmem:[%s4831 + $0x71] sm:$0xff]
    %v5010 = vld [vmem:[%s4831 + $0xa1] sm:$0xff]
    %v5011 = vld [vmem:[%s4831 + $0xb1] sm:$0xff]
    %v5012 = vld [vmem:[%s4831 + $0xc1] sm:$0xff]
    %v5013 = vld [vmem:[%s4831 + $0xd1] sm:$0xff]
    %v5014 = vld [vmem:[%s4831 + $0xe1] sm:$0xff]
    %v5015 = vld [vmem:[%s4831 + $0xf1] sm:$0xff]
    %v5016 = vld [vmem:[%s4831 + $0x101] sm:$0xff]
    %v5017 = vld [vmem:[%s4831 + $0x111] sm:$0xff]
    %v5018 = vpack.c.bf16 %v5003, %v5002
    %v5019 = vpack.c.bf16 %v5005, %v5004
    %v5020 = vpack.c.bf16 %v5007, %v5006
    %v5021 = vpack.c.bf16 %v5009, %v5008
    %v5022 = vpack.c.bf16 %v5011, %v5010
    %v5023 = vpack.c.bf16 %v5013, %v5012
    %v5024 = vpack.c.bf16 %v5015, %v5014
    %v5025 = vpack.c.bf16 %v5017, %v5016
    %s5026 = scalar_lea.vmem %s3, 56
    %v5027 = vld [vmem:[%s5026] sm:$0xf]
    %v5028 = vld [vmem:[%s5026 + $0x4] sm:$0xf]
    %v5031 = vunpack.c.l.b16 %v5027
    %v5032 = vunpack.c.l.b16 %v5028
    %v5033 = vpack.c.b16 %v5032, %v5031
    %v5036 = vsel %vm3008, %v5018, 0
    %v5039 = vsel %vm3008, %v5019, 0
    %v5042 = vsel %vm3008, %v5020, 0
    %v5045 = vsel %vm3008, %v5021, 0
    %v5048 = vsel %vm3008, %v5022, 0
    %v5051 = vsel %vm3008, %v5023, 0
    %v5054 = vsel %vm3008, %v5024, 0
    %v5057 = vsel %vm3008, %v5025, 0
    %5059 = vmatprep.subr.bf16.mxu0 0
    %5060 = vmatpush1.bf16.msra.mxu0 %v5033
    %5061 = vmatprep.subr.bf16.mxu0 0
    %5062 = vmatpush1.bf16.msra.mxu0 0
    %5063 = vmatprep.subr.bf16.mxu0 0
    %5064 = vmatpush1.bf16.msra.mxu0 0
    %5065 = vmatprep.subr.bf16.mxu0 0
    %5066 = vmatpush1.bf16.msra.mxu0 0
    %5067 = vmatprep.subr.bf16.mxu0 0
    %5068 = vmatpush1.bf16.msra.mxu0 0
    %5069 = vmatprep.subr.bf16.mxu0 0
    %5070 = vmatpush1.bf16.msra.mxu0 0
    %5071 = vmatprep.subr.bf16.mxu0 0
    %5072 = vmatpush1.bf16.msra.mxu0 0
    %5073 = vmatprep.subr.bf16.mxu0 0
    %5074 = vmatpush1.bf16.msra.mxu0 0
    %5075 = vmatprep.subr.bf16.mxu0 0
    %5076 = vmatpush1.bf16.msra.mxu0 0
    %5077 = vmatprep.subr.bf16.mxu0 0
    %5078 = vmatpush1.bf16.msra.mxu0 0
    %5079 = vmatprep.subr.bf16.mxu0 0
    %5080 = vmatpush1.bf16.msra.mxu0 0
    %5081 = vmatprep.subr.bf16.mxu0 0
    %5082 = vmatpush1.bf16.msra.mxu0 0
    %5083 = vmatprep.subr.bf16.mxu0 0
    %5084 = vmatpush1.bf16.msra.mxu0 0
    %5085 = vmatprep.subr.bf16.mxu0 0
    %5086 = vmatpush1.bf16.msra.mxu0 0
    %5087 = vmatprep.subr.bf16.mxu0 0
    %5088 = vmatpush1.bf16.msra.mxu0 0
    %5089 = vmatprep.subr.bf16.mxu0 0
    %5090 = vmatpush1.bf16.msra.mxu0 0
    %5091 = vmatprep.mubr.bf16.mxu0 0
    %5092 = vmatmul.mubr.bf16.gmra.mrb[0].mxu0 %v5036
    %v5093 = vpop.f32.mrb[0].mxu0
    %v5094 = vadd.f32 0.0, %v5093
    %v5095 = vpop.f32.mrb[0].mxu0
    %v5096 = vpop.f32.mrb[0].mxu0
    %v5097 = vadd.f32 0.0, %v5096
    %v5098 = vpop.f32.mrb[0].mxu0
    %5099 = vmatprep.mubr.bf16.mxu0 0
    %5100 = vmatmul.mubr.bf16.gmra.mrb[0].mxu0 %v5039
    %v5101 = vpop.f32.mrb[0].mxu0
    %v5102 = vadd.f32 0.0, %v5101
    %v5103 = vpop.f32.mrb[0].mxu0
    %v5104 = vpop.f32.mrb[0].mxu0
    %v5105 = vadd.f32 0.0, %v5104
    %v5106 = vpop.f32.mrb[0].mxu0
    %5107 = vmatprep.mubr.bf16.mxu0 0
    %5108 = vmatmul.mubr.bf16.gmra.mrb[0].mxu0 %v5042
    %v5109 = vpop.f32.mrb[0].mxu0
    %v5110 = vadd.f32 0.0, %v5109
    %v5111 = vpop.f32.mrb[0].mxu0
    %v5112 = vpop.f32.mrb[0].mxu0
    %v5113 = vadd.f32 0.0, %v5112
    %v5114 = vpop.f32.mrb[0].mxu0
    %5115 = vmatprep.mubr.bf16.mxu0 0
    %5116 = vmatmul.mubr.bf16.gmra.mrb[0].mxu0 %v5045
    %v5117 = vpop.f32.mrb[0].mxu0
    %v5118 = vadd.f32 0.0, %v5117
    %v5119 = vpop.f32.mrb[0].mxu0
    %v5120 = vpop.f32.mrb[0].mxu0
    %v5121 = vadd.f32 0.0, %v5120
    %v5122 = vpop.f32.mrb[0].mxu0
    %5123 = vmatprep.mubr.bf16.mxu0 0
    %5124 = vmatmul.mubr.bf16.gmra.mrb[0].mxu0 %v5048
    %v5125 = vpop.f32.mrb[0].mxu0
    %v5126 = vadd.f32 0.0, %v5125
    %v5127 = vpop.f32.mrb[0].mxu0
    %v5128 = vpop.f32.mrb[0].mxu0
    %v5129 = vadd.f32 0.0, %v5128
    %v5130 = vpop.f32.mrb[0].mxu0
    %5131 = vmatprep.mubr.bf16.mxu0 0
    %5132 = vmatmul.mubr.bf16.gmra.mrb[0].mxu0 %v5051
    %v5133 = vpop.f32.mrb[0].mxu0
    %v5134 = vadd.f32 0.0, %v5133
    %v5135 = vpop.f32.mrb[0].mxu0
    %v5136 = vpop.f32.mrb[0].mxu0
    %v5137 = vadd.f32 0.0, %v5136
    %v5138 = vpop.f32.mrb[0].mxu0
    %5139 = vmatprep.mubr.bf16.mxu0 0
    %5140 = vmatmul.mubr.bf16.gmra.mrb[0].mxu0 %v5054
    %v5141 = vpop.f32.mrb[0].mxu0
    %v5142 = vadd.f32 0.0, %v5141
    %v5143 = vpop.f32.mrb[0].mxu0
    %v5144 = vpop.f32.mrb[0].mxu0
    %v5145 = vadd.f32 0.0, %v5144
    %v5146 = vpop.f32.mrb[0].mxu0
    %5147 = vmatprep.mubr.bf16.mxu0 0
    %5148 = vmatmul.mubr.bf16.gmra.mrb[0].mxu0 %v5057
    %v5149 = vpop.f32.mrb[0].mxu0
    %v5150 = vadd.f32 0.0, %v5149
    %v5151 = vpop.f32.mrb[0].mxu0
    %v5152 = vpop.f32.mrb[0].mxu0
    %v5153 = vadd.f32 0.0, %v5152
    %v5154 = vpop.f32.mrb[0].mxu0
    %5155 = vdwg.mxu0
    %v5156 = vadd.f32 %v4986, %v5094
    %v5157 = vadd.f32 %v4987, %v5097
    %v5158 = vadd.f32 %v4988, %v5102
    %v5159 = vadd.f32 %v4989, %v5105
    %v5160 = vadd.f32 %v4990, %v5110
    %v5161 = vadd.f32 %v4991, %v5113
    %v5162 = vadd.f32 %v4992, %v5118
    %v5163 = vadd.f32 %v4993, %v5121
    %v5164 = vadd.f32 %v4994, %v5126
    %v5165 = vadd.f32 %v4995, %v5129
    %v5166 = vadd.f32 %v4996, %v5134
    %v5167 = vadd.f32 %v4997, %v5137
    %v5168 = vadd.f32 %v4998, %v5142
    %v5169 = vadd.f32 %v4999, %v5145
    %v5170 = vadd.f32 %v5000, %v5150
    %v5171 = vadd.f32 %v5001, %v5153
    %v5172 = vld [vmem:[%s4831 + $0x2] sm:$0xff]
    %v5173 = vld [vmem:[%s4831 + $0x12] sm:$0xff]
    %v5174 = vld [vmem:[%s4831 + $0x22] sm:$0xff]
    %v5175 = vld [vmem:[%s4831 + $0x32] sm:$0xff]
    %v5176 = vld [vmem:[%s4831 + $0x42] sm:$0xff]
    %v5177 = vld [vmem:[%s4831 + $0x52] sm:$0xff]
    %v5178 = vld [vmem:[%s4831 + $0x62] sm:$0xff]
    %v5179 = vld [vmem:[%s4831 + $0x72] sm:$0xff]
    %v5180 = vld [vmem:[%s4831 + $0xa2] sm:$0xff]
    %v5181 = vld [vmem:[%s4831 + $0xb2] sm:$0xff]
    %v5182 = vld [vmem:[%s4831 + $0xc2] sm:$0xff]
    %v5183 = vld [vmem:[%s4831 + $0xd2] sm:$0xff]
    %v5184 = vld [vmem:[%s4831 + $0xe2] sm:$0xff]
    %v5185 = vld [vmem:[%s4831 + $0xf2] sm:$0xff]
    %v5186 = vld [vmem:[%s4831 + $0x102] sm:$0xff]
    %v5187 = vld [vmem:[%s4831 + $0x112] sm:$0xff]
    %v5188 = vpack.c.bf16 %v5173, %v5172
    %v5189 = vpack.c.bf16 %v5175, %v5174
    %v5190 = vpack.c.bf16 %v5177, %v5176
    %v5191 = vpack.c.bf16 %v5179, %v5178
    %v5192 = vpack.c.bf16 %v5181, %v5180
    %v5193 = vpack.c.bf16 %v5183, %v5182
    %v5194 = vpack.c.bf16 %v5185, %v5184
    %v5195 = vpack.c.bf16 %v5187, %v5186
    %s5196 = scalar_lea.vmem %s3, 64
    %v5197 = vld [vmem:[%s5196] sm:$0xf]
    %v5198 = vld [vmem:[%s5196 + $0x4] sm:$0xf]
    %v5201 = vunpack.c.l.b16 %v5197
    %v5202 = vunpack.c.l.b16 %v5198
    %v5203 = vpack.c.b16 %v5202, %v5201
    %v5206 = vsel %vm3008, %v5188, 0
    %v5209 = vsel %vm3008, %v5189, 0
    %v5212 = vsel %vm3008, %v5190, 0
    %v5215 = vsel %vm3008, %v5191, 0
    %v5218 = vsel %vm3008, %v5192, 0
    %v5221 = vsel %vm3008, %v5193, 0
    %v5224 = vsel %vm3008, %v5194, 0
    %v5227 = vsel %vm3008, %v5195, 0
    %5229 = vmatprep.subr.bf16.mxu0 0
    %5230 = vmatpush1.bf16.msra.mxu0 %v5203
    %5231 = vmatprep.subr.bf16.mxu0 0
    %5232 = vmatpush1.bf16.msra.mxu0 0
    %5233 = vmatprep.subr.bf16.mxu0 0
    %5234 = vmatpush1.bf16.msra.mxu0 0
    %5235 = vmatprep.subr.bf16.mxu0 0
    %5236 = vmatpush1.bf16.msra.mxu0 0
    %5237 = vmatprep.subr.bf16.mxu0 0
    %5238 = vmatpush1.bf16.msra.mxu0 0
    %5239 = vmatprep.subr.bf16.mxu0 0
    %5240 = vmatpush1.bf16.msra.mxu0 0
    %5241 = vmatprep.subr.bf16.mxu0 0
    %5242 = vmatpush1.bf16.msra.mxu0 0
    %5243 = vmatprep.subr.bf16.mxu0 0
    %5244 = vmatpush1.bf16.msra.mxu0 0
    %5245 = vmatprep.subr.bf16.mxu0 0
    %5246 = vmatpush1.bf16.msra.mxu0 0
    %5247 = vmatprep.subr.bf16.mxu0 0
    %5248 = vmatpush1.bf16.msra.mxu0 0
    %5249 = vmatprep.subr.bf16.mxu0 0
    %5250 = vmatpush1.bf16.msra.mxu0 0
    %5251 = vmatprep.subr.bf16.mxu0 0
    %5252 = vmatpush1.bf16.msra.mxu0 0
    %5253 = vmatprep.subr.bf16.mxu0 0
    %5254 = vmatpush1.bf16.msra.mxu0 0
    %5255 = vmatprep.subr.bf16.mxu0 0
    %5256 = vmatpush1.bf16.msra.mxu0 0
    %5257 = vmatprep.subr.bf16.mxu0 0
    %5258 = vmatpush1.bf16.msra.mxu0 0
    %5259 = vmatprep.subr.bf16.mxu0 0
    %5260 = vmatpush1.bf16.msra.mxu0 0
    %5261 = vmatprep.mubr.bf16.mxu0 0
    %5262 = vmatmul.mubr.bf16.gmra.mrb[0].mxu0 %v5206
    %v5263 = vpop.f32.mrb[0].mxu0
    %v5264 = vadd.f32 0.0, %v5263
    %v5265 = vpop.f32.mrb[0].mxu0
    %v5266 = vpop.f32.mrb[0].mxu0
    %v5267 = vadd.f32 0.0, %v5266
    %v5268 = vpop.f32.mrb[0].mxu0
    %5269 = vmatprep.mubr.bf16.mxu0 0
    %5270 = vmatmul.mubr.bf16.gmra.mrb[0].mxu0 %v5209
    %v5271 = vpop.f32.mrb[0].mxu0
    %v5272 = vadd.f32 0.0, %v5271
    %v5273 = vpop.f32.mrb[0].mxu0
    %v5274 = vpop.f32.mrb[0].mxu0
    %v5275 = vadd.f32 0.0, %v5274
    %v5276 = vpop.f32.mrb[0].mxu0
    %5277 = vmatprep.mubr.bf16.mxu0 0
    %5278 = vmatmul.mubr.bf16.gmra.mrb[0].mxu0 %v5212
    %v5279 = vpop.f32.mrb[0].mxu0
    %v5280 = vadd.f32 0.0, %v5279
    %v5281 = vpop.f32.mrb[0].mxu0
    %v5282 = vpop.f32.mrb[0].mxu0
    %v5283 = vadd.f32 0.0, %v5282
    %v5284 = vpop.f32.mrb[0].mxu0
    %5285 = vmatprep.mubr.bf16.mxu0 0
    %5286 = vmatmul.mubr.bf16.gmra.mrb[0].mxu0 %v5215
    %v5287 = vpop.f32.mrb[0].mxu0
    %v5288 = vadd.f32 0.0, %v5287
    %v5289 = vpop.f32.mrb[0].mxu0
    %v5290 = vpop.f32.mrb[0].mxu0
    %v5291 = vadd.f32 0.0, %v5290
    %v5292 = vpop.f32.mrb[0].mxu0
    %5293 = vmatprep.mubr.bf16.mxu0 0
    %5294 = vmatmul.mubr.bf16.gmra.mrb[0].mxu0 %v5218
    %v5295 = vpop.f32.mrb[0].mxu0
    %v5296 = vadd.f32 0.0, %v5295
    %v5297 = vpop.f32.mrb[0].mxu0
    %v5298 = vpop.f32.mrb[0].mxu0
    %v5299 = vadd.f32 0.0, %v5298
    %v5300 = vpop.f32.mrb[0].mxu0
    %5301 = vmatprep.mubr.bf16.mxu0 0
    %5302 = vmatmul.mubr.bf16.gmra.mrb[0].mxu0 %v5221
    %v5303 = vpop.f32.mrb[0].mxu0
    %v5304 = vadd.f32 0.0, %v5303
    %v5305 = vpop.f32.mrb[0].mxu0
    %v5306 = vpop.f32.mrb[0].mxu0
    %v5307 = vadd.f32 0.0, %v5306
    %v5308 = vpop.f32.mrb[0].mxu0
    %5309 = vmatprep.mubr.bf16.mxu0 0
    %5310 = vmatmul.mubr.bf16.gmra.mrb[0].mxu0 %v5224
    %v5311 = vpop.f32.mrb[0].mxu0
    %v5312 = vadd.f32 0.0, %v5311
    %v5313 = vpop.f32.mrb[0].mxu0
    %v5314 = vpop.f32.mrb[0].mxu0
    %v5315 = vadd.f32 0.0, %v5314
    %v5316 = vpop.f32.mrb[0].mxu0
    %5317 = vmatprep.mubr.bf16.mxu0 0
    %5318 = vmatmul.mubr.bf16.gmra.mrb[0].mxu0 %v5227
    %v5319 = vpop.f32.mrb[0].mxu0
    %v5320 = vadd.f32 0.0, %v5319
    %v5321 = vpop.f32.mrb[0].mxu0
    %v5322 = vpop.f32.mrb[0].mxu0
    %v5323 = vadd.f32 0.0, %v5322
    %v5324 = vpop.f32.mrb[0].mxu0
    %5325 = vdwg.mxu0
    %v5326 = vadd.f32 %v5156, %v5264
    %v5327 = vadd.f32 %v5157, %v5267
    %v5328 = vadd.f32 %v5158, %v5272
    %v5329 = vadd.f32 %v5159, %v5275
    %v5330 = vadd.f32 %v5160, %v5280
    %v5331 = vadd.f32 %v5161, %v5283
    %v5332 = vadd.f32 %v5162, %v5288
    %v5333 = vadd.f32 %v5163, %v5291
    %v5334 = vadd.f32 %v5164, %v5296
    %v5335 = vadd.f32 %v5165, %v5299
    %v5336 = vadd.f32 %v5166, %v5304
    %v5337 = vadd.f32 %v5167, %v5307
    %v5338 = vadd.f32 %v5168, %v5312
    %v5339 = vadd.f32 %v5169, %v5315
    %v5340 = vadd.f32 %v5170, %v5320
    %v5341 = vadd.f32 %v5171, %v5323
    %v5358 = vcombine.high %v5326, %v5326
    %v5360 = vunpack.c.l.s4 1983009808
    %v5361 = vunpack.c.0.s8 %v5360
    %v5362 = vlaneseq
    %v5363 = vshrl.u32 %v5362, 7
    %v5364 = vsub.s32 %v5361, %v5363
    %v5365 = vrot.slane %v5326, %v5364
    %v5367 = vunpack.c.l.s4 1983009808
    %v5368 = vunpack.c.0.s8 %v5367
    %v5369 = vlaneseq
    %v5370 = vshrl.u32 %v5369, 7
    %v5371 = vsub.s32 %v5368, %v5370
    %v5372 = vrot.slane %v5358, %v5371
    %v5373 = vcombine.high %v5365, %v5365
    %v5374 = vcombine.high %v5372, %v5372
    %v5375 = vcombine.high %v5327, %v5327
    %v5377 = vunpack.c.l.s4 1983009808
    %v5378 = vunpack.c.0.s8 %v5377
    %v5379 = vlaneseq
    %v5380 = vshrl.u32 %v5379, 7
    %v5381 = vsub.s32 %v5378, %v5380
    %v5382 = vrot.slane %v5327, %v5381
    %v5384 = vunpack.c.l.s4 1983009808
    %v5385 = vunpack.c.0.s8 %v5384
    %v5386 = vlaneseq
    %v5387 = vshrl.u32 %v5386, 7
    %v5388 = vsub.s32 %v5385, %v5387
    %v5389 = vrot.slane %v5375, %v5388
    %v5390 = vcombine.high %v5382, %v5382
    %v5391 = vcombine.high %v5389, %v5389
    %v5392 = vcombine.high %v5328, %v5328
    %v5394 = vunpack.c.l.s4 1983009808
    %v5395 = vunpack.c.0.s8 %v5394
    %v5396 = vlaneseq
    %v5397 = vshrl.u32 %v5396, 7
    %v5398 = vsub.s32 %v5395, %v5397
    %v5399 = vrot.slane %v5328, %v5398
    %v5401 = vunpack.c.l.s4 1983009808
    %v5402 = vunpack.c.0.s8 %v5401
    %v5403 = vlaneseq
    %v5404 = vshrl.u32 %v5403, 7
    %v5405 = vsub.s32 %v5402, %v5404
    %v5406 = vrot.slane %v5392, %v5405
    %v5407 = vcombine.high %v5399, %v5399
    %v5408 = vcombine.high %v5406, %v5406
    %v5409 = vcombine.high %v5329, %v5329
    %v5411 = vunpack.c.l.s4 1983009808
    %v5412 = vunpack.c.0.s8 %v5411
    %v5413 = vlaneseq
    %v5414 = vshrl.u32 %v5413, 7
    %v5415 = vsub.s32 %v5412, %v5414
    %v5416 = vrot.slane %v5329, %v5415
    %v5418 = vunpack.c.l.s4 1983009808
    %v5419 = vunpack.c.0.s8 %v5418
    %v5420 = vlaneseq
    %v5421 = vshrl.u32 %v5420, 7
    %v5422 = vsub.s32 %v5419, %v5421
    %v5423 = vrot.slane %v5409, %v5422
    %v5424 = vcombine.high %v5416, %v5416
    %v5425 = vcombine.high %v5423, %v5423
    %v5426 = vcombine.high %v5330, %v5330
    %v5428 = vunpack.c.l.s4 1983009808
    %v5429 = vunpack.c.0.s8 %v5428
    %v5430 = vlaneseq
    %v5431 = vshrl.u32 %v5430, 7
    %v5432 = vsub.s32 %v5429, %v5431
    %v5433 = vrot.slane %v5330, %v5432
    %v5435 = vunpack.c.l.s4 1983009808
    %v5436 = vunpack.c.0.s8 %v5435
    %v5437 = vlaneseq
    %v5438 = vshrl.u32 %v5437, 7
    %v5439 = vsub.s32 %v5436, %v5438
    %v5440 = vrot.slane %v5426, %v5439
    %v5441 = vcombine.high %v5433, %v5433
    %v5442 = vcombine.high %v5440, %v5440
    %v5443 = vcombine.high %v5331, %v5331
    %v5445 = vunpack.c.l.s4 1983009808
    %v5446 = vunpack.c.0.s8 %v5445
    %v5447 = vlaneseq
    %v5448 = vshrl.u32 %v5447, 7
    %v5449 = vsub.s32 %v5446, %v5448
    %v5450 = vrot.slane %v5331, %v5449
    %v5452 = vunpack.c.l.s4 1983009808
    %v5453 = vunpack.c.0.s8 %v5452
    %v5454 = vlaneseq
    %v5455 = vshrl.u32 %v5454, 7
    %v5456 = vsub.s32 %v5453, %v5455
    %v5457 = vrot.slane %v5443, %v5456
    %v5458 = vcombine.high %v5450, %v5450
    %v5459 = vcombine.high %v5457, %v5457
    %v5460 = vcombine.high %v5332, %v5332
    %v5462 = vunpack.c.l.s4 1983009808
    %v5463 = vunpack.c.0.s8 %v5462
    %v5464 = vlaneseq
    %v5465 = vshrl.u32 %v5464, 7
    %v5466 = vsub.s32 %v5463, %v5465
    %v5467 = vrot.slane %v5332, %v5466
    %v5469 = vunpack.c.l.s4 1983009808
    %v5470 = vunpack.c.0.s8 %v5469
    %v5471 = vlaneseq
    %v5472 = vshrl.u32 %v5471, 7
    %v5473 = vsub.s32 %v5470, %v5472
    %v5474 = vrot.slane %v5460, %v5473
    %v5475 = vcombine.high %v5467, %v5467
    %v5476 = vcombine.high %v5474, %v5474
    %v5477 = vcombine.high %v5333, %v5333
    %v5479 = vunpack.c.l.s4 1983009808
    %v5480 = vunpack.c.0.s8 %v5479
    %v5481 = vlaneseq
    %v5482 = vshrl.u32 %v5481, 7
    %v5483 = vsub.s32 %v5480, %v5482
    %v5484 = vrot.slane %v5333, %v5483
    %v5486 = vunpack.c.l.s4 1983009808
    %v5487 = vunpack.c.0.s8 %v5486
    %v5488 = vlaneseq
    %v5489 = vshrl.u32 %v5488, 7
    %v5490 = vsub.s32 %v5487, %v5489
    %v5491 = vrot.slane %v5477, %v5490
    %v5492 = vcombine.high %v5484, %v5484
    %v5493 = vcombine.high %v5491, %v5491
    %v5494 = vcombine.high %v5334, %v5334
    %v5496 = vunpack.c.l.s4 1983009808
    %v5497 = vunpack.c.0.s8 %v5496
    %v5498 = vlaneseq
    %v5499 = vshrl.u32 %v5498, 7
    %v5500 = vsub.s32 %v5497, %v5499
    %v5501 = vrot.slane %v5334, %v5500
    %v5503 = vunpack.c.l.s4 1983009808
    %v5504 = vunpack.c.0.s8 %v5503
    %v5505 = vlaneseq
    %v5506 = vshrl.u32 %v5505, 7
    %v5507 = vsub.s32 %v5504, %v5506
    %v5508 = vrot.slane %v5494, %v5507
    %v5509 = vcombine.high %v5501, %v5501
    %v5510 = vcombine.high %v5508, %v5508
    %v5511 = vcombine.high %v5335, %v5335
    %v5513 = vunpack.c.l.s4 1983009808
    %v5514 = vunpack.c.0.s8 %v5513
    %v5515 = vlaneseq
    %v5516 = vshrl.u32 %v5515, 7
    %v5517 = vsub.s32 %v5514, %v5516
    %v5518 = vrot.slane %v5335, %v5517
    %v5520 = vunpack.c.l.s4 1983009808
    %v5521 = vunpack.c.0.s8 %v5520
    %v5522 = vlaneseq
    %v5523 = vshrl.u32 %v5522, 7
    %v5524 = vsub.s32 %v5521, %v5523
    %v5525 = vrot.slane %v5511, %v5524
    %v5526 = vcombine.high %v5518, %v5518
    %v5527 = vcombine.high %v5525, %v5525
    %v5528 = vcombine.high %v5336, %v5336
    %v5530 = vunpack.c.l.s4 1983009808
    %v5531 = vunpack.c.0.s8 %v5530
    %v5532 = vlaneseq
    %v5533 = vshrl.u32 %v5532, 7
    %v5534 = vsub.s32 %v5531, %v5533
    %v5535 = vrot.slane %v5336, %v5534
    %v5537 = vunpack.c.l.s4 1983009808
    %v5538 = vunpack.c.0.s8 %v5537
    %v5539 = vlaneseq
    %v5540 = vshrl.u32 %v5539, 7
    %v5541 = vsub.s32 %v5538, %v5540
    %v5542 = vrot.slane %v5528, %v5541
    %v5543 = vcombine.high %v5535, %v5535
    %v5544 = vcombine.high %v5542, %v5542
    %v5545 = vcombine.high %v5337, %v5337
    %v5547 = vunpack.c.l.s4 1983009808
    %v5548 = vunpack.c.0.s8 %v5547
    %v5549 = vlaneseq
    %v5550 = vshrl.u32 %v5549, 7
    %v5551 = vsub.s32 %v5548, %v5550
    %v5552 = vrot.slane %v5337, %v5551
    %v5554 = vunpack.c.l.s4 1983009808
    %v5555 = vunpack.c.0.s8 %v5554
    %v5556 = vlaneseq
    %v5557 = vshrl.u32 %v5556, 7
    %v5558 = vsub.s32 %v5555, %v5557
    %v5559 = vrot.slane %v5545, %v5558
    %v5560 = vcombine.high %v5552, %v5552
    %v5561 = vcombine.high %v5559, %v5559
    %v5562 = vcombine.high %v5338, %v5338
    %v5564 = vunpack.c.l.s4 1983009808
    %v5565 = vunpack.c.0.s8 %v5564
    %v5566 = vlaneseq
    %v5567 = vshrl.u32 %v5566, 7
    %v5568 = vsub.s32 %v5565, %v5567
    %v5569 = vrot.slane %v5338, %v5568
    %v5571 = vunpack.c.l.s4 1983009808
    %v5572 = vunpack.c.0.s8 %v5571
    %v5573 = vlaneseq
    %v5574 = vshrl.u32 %v5573, 7
    %v5575 = vsub.s32 %v5572, %v5574
    %v5576 = vrot.slane %v5562, %v5575
    %v5577 = vcombine.high %v5569, %v5569
    %v5578 = vcombine.high %v5576, %v5576
    %v5579 = vcombine.high %v5339, %v5339
    %v5581 = vunpack.c.l.s4 1983009808
    %v5582 = vunpack.c.0.s8 %v5581
    %v5583 = vlaneseq
    %v5584 = vshrl.u32 %v5583, 7
    %v5585 = vsub.s32 %v5582, %v5584
    %v5586 = vrot.slane %v5339, %v5585
    %v5588 = vunpack.c.l.s4 1983009808
    %v5589 = vunpack.c.0.s8 %v5588
    %v5590 = vlaneseq
    %v5591 = vshrl.u32 %v5590, 7
    %v5592 = vsub.s32 %v5589, %v5591
    %v5593 = vrot.slane %v5579, %v5592
    %v5594 = vcombine.high %v5586, %v5586
    %v5595 = vcombine.high %v5593, %v5593
    %v5596 = vcombine.high %v5340, %v5340
    %v5598 = vunpack.c.l.s4 1983009808
    %v5599 = vunpack.c.0.s8 %v5598
    %v5600 = vlaneseq
    %v5601 = vshrl.u32 %v5600, 7
    %v5602 = vsub.s32 %v5599, %v5601
    %v5603 = vrot.slane %v5340, %v5602
    %v5605 = vunpack.c.l.s4 1983009808
    %v5606 = vunpack.c.0.s8 %v5605
    %v5607 = vlaneseq
    %v5608 = vshrl.u32 %v5607, 7
    %v5609 = vsub.s32 %v5606, %v5608
    %v5610 = vrot.slane %v5596, %v5609
    %v5611 = vcombine.high %v5603, %v5603
    %v5612 = vcombine.high %v5610, %v5610
    %v5613 = vcombine.high %v5341, %v5341
    %v5615 = vunpack.c.l.s4 1983009808
    %v5616 = vunpack.c.0.s8 %v5615
    %v5617 = vlaneseq
    %v5618 = vshrl.u32 %v5617, 7
    %v5619 = vsub.s32 %v5616, %v5618
    %v5620 = vrot.slane %v5341, %v5619
    %v5622 = vunpack.c.l.s4 1983009808
    %v5623 = vunpack.c.0.s8 %v5622
    %v5624 = vlaneseq
    %v5625 = vshrl.u32 %v5624, 7
    %v5626 = vsub.s32 %v5623, %v5625
    %v5627 = vrot.slane %v5613, %v5626
    %v5628 = vcombine.high %v5620, %v5620
    %v5629 = vcombine.high %v5627, %v5627
    %v5694 = vrot.slane %v5365, 7
    %v5695 = vrot.slane %v5694, 2
    %v5696 = vrot.slane %v5373, 7
    %v5697 = vrot.slane %v5696, 2
    %v5698 = vrot.slane %v5372, 7
    %v5699 = vrot.slane %v5698, 2
    %v5700 = vrot.slane %v5374, 7
    %v5701 = vrot.slane %v5700, 2
    %v5702 = vrot.slane %v5382, 7
    %v5703 = vrot.slane %v5702, 2
    %v5704 = vrot.slane %v5390, 7
    %v5705 = vrot.slane %v5704, 2
    %v5706 = vrot.slane %v5389, 7
    %v5707 = vrot.slane %v5706, 2
    %v5708 = vrot.slane %v5391, 7
    %v5709 = vrot.slane %v5708, 2
    %v5710 = vrot.slane %v5399, 7
    %v5711 = vrot.slane %v5710, 2
    %v5712 = vrot.slane %v5407, 7
    %v5713 = vrot.slane %v5712, 2
    %v5714 = vrot.slane %v5406, 7
    %v5715 = vrot.slane %v5714, 2
    %v5716 = vrot.slane %v5408, 7
    %v5717 = vrot.slane %v5716, 2
    %v5718 = vrot.slane %v5416, 7
    %v5719 = vrot.slane %v5718, 2
    %v5720 = vrot.slane %v5424, 7
    %v5721 = vrot.slane %v5720, 2
    %v5722 = vrot.slane %v5423, 7
    %v5723 = vrot.slane %v5722, 2
    %v5724 = vrot.slane %v5425, 7
    %v5725 = vrot.slane %v5724, 2
    %v5726 = vrot.slane %v5433, 7
    %v5727 = vrot.slane %v5726, 2
    %v5728 = vrot.slane %v5441, 7
    %v5729 = vrot.slane %v5728, 2
    %v5730 = vrot.slane %v5440, 7
    %v5731 = vrot.slane %v5730, 2
    %v5732 = vrot.slane %v5442, 7
    %v5733 = vrot.slane %v5732, 2
    %v5734 = vrot.slane %v5450, 7
    %v5735 = vrot.slane %v5734, 2
    %v5736 = vrot.slane %v5458, 7
    %v5737 = vrot.slane %v5736, 2
    %v5738 = vrot.slane %v5457, 7
    %v5739 = vrot.slane %v5738, 2
    %v5740 = vrot.slane %v5459, 7
    %v5741 = vrot.slane %v5740, 2
    %v5742 = vrot.slane %v5467, 7
    %v5743 = vrot.slane %v5742, 2
    %v5744 = vrot.slane %v5475, 7
    %v5745 = vrot.slane %v5744, 2
    %v5746 = vrot.slane %v5474, 7
    %v5747 = vrot.slane %v5746, 2
    %v5748 = vrot.slane %v5476, 7
    %v5749 = vrot.slane %v5748, 2
    %v5750 = vrot.slane %v5484, 7
    %v5751 = vrot.slane %v5750, 2
    %v5752 = vrot.slane %v5492, 7
    %v5753 = vrot.slane %v5752, 2
    %v5754 = vrot.slane %v5491, 7
    %v5755 = vrot.slane %v5754, 2
    %v5756 = vrot.slane %v5493, 7
    %v5757 = vrot.slane %v5756, 2
    %v5758 = vrot.slane %v5501, 7
    %v5759 = vrot.slane %v5758, 2
    %v5760 = vrot.slane %v5509, 7
    %v5761 = vrot.slane %v5760, 2
    %v5762 = vrot.slane %v5508, 7
    %v5763 = vrot.slane %v5762, 2
    %v5764 = vrot.slane %v5510, 7
    %v5765 = vrot.slane %v5764, 2
    %v5766 = vrot.slane %v5518, 7
    %v5767 = vrot.slane %v5766, 2
    %v5768 = vrot.slane %v5526, 7
    %v5769 = vrot.slane %v5768, 2
    %v5770 = vrot.slane %v5525, 7
    %v5771 = vrot.slane %v5770, 2
    %v5772 = vrot.slane %v5527, 7
    %v5773 = vrot.slane %v5772, 2
    %v5774 = vrot.slane %v5535, 7
    %v5775 = vrot.slane %v5774, 2
    %v5776 = vrot.slane %v5543, 7
    %v5777 = vrot.slane %v5776, 2
    %v5778 = vrot.slane %v5542, 7
    %v5779 = vrot.slane %v5778, 2
    %v5780 = vrot.slane %v5544, 7
    %v5781 = vrot.slane %v5780, 2
    %v5782 = vrot.slane %v5552, 7
    %v5783 = vrot.slane %v5782, 2
    %v5784 = vrot.slane %v5560, 7
    %v5785 = vrot.slane %v5784, 2
    %v5786 = vrot.slane %v5559, 7
    %v5787 = vrot.slane %v5786, 2
    %v5788 = vrot.slane %v5561, 7
    %v5789 = vrot.slane %v5788, 2
    %v5790 = vrot.slane %v5569, 7
    %v5791 = vrot.slane %v5790, 2
    %v5792 = vrot.slane %v5577, 7
    %v5793 = vrot.slane %v5792, 2
    %v5794 = vrot.slane %v5576, 7
    %v5795 = vrot.slane %v5794, 2
    %v5796 = vrot.slane %v5578, 7
    %v5797 = vrot.slane %v5796, 2
    %v5798 = vrot.slane %v5586, 7
    %v5799 = vrot.slane %v5798, 2
    %v5800 = vrot.slane %v5594, 7
    %v5801 = vrot.slane %v5800, 2
    %v5802 = vrot.slane %v5593, 7
    %v5803 = vrot.slane %v5802, 2
    %v5804 = vrot.slane %v5595, 7
    %v5805 = vrot.slane %v5804, 2
    %v5806 = vrot.slane %v5603, 7
    %v5807 = vrot.slane %v5806, 2
    %v5808 = vrot.slane %v5611, 7
    %v5809 = vrot.slane %v5808, 2
    %v5810 = vrot.slane %v5610, 7
    %v5811 = vrot.slane %v5810, 2
    %v5812 = vrot.slane %v5612, 7
    %v5813 = vrot.slane %v5812, 2
    %v5814 = vrot.slane %v5620, 7
    %v5815 = vrot.slane %v5814, 2
    %v5816 = vrot.slane %v5628, 7
    %v5817 = vrot.slane %v5816, 2
    %v5818 = vrot.slane %v5627, 7
    %v5819 = vrot.slane %v5818, 2
    %v5820 = vrot.slane %v5629, 7
    %v5821 = vrot.slane %v5820, 2
    %v5886 = vmax.f32 %v5365, %v5695
    %v5887 = vmax.f32 %v5373, %v5697
    %v5888 = vmax.f32 %v5372, %v5699
    %v5889 = vmax.f32 %v5374, %v5701
    %v5890 = vmax.f32 %v5382, %v5703
    %v5891 = vmax.f32 %v5390, %v5705
    %v5892 = vmax.f32 %v5389, %v5707
    %v5893 = vmax.f32 %v5391, %v5709
    %v5894 = vmax.f32 %v5399, %v5711
    %v5895 = vmax.f32 %v5407, %v5713
    %v5896 = vmax.f32 %v5406, %v5715
    %v5897 = vmax.f32 %v5408, %v5717
    %v5898 = vmax.f32 %v5416, %v5719
    %v5899 = vmax.f32 %v5424, %v5721
    %v5900 = vmax.f32 %v5423, %v5723
    %v5901 = vmax.f32 %v5425, %v5725
    %v5902 = vmax.f32 %v5433, %v5727
    %v5903 = vmax.f32 %v5441, %v5729
    %v5904 = vmax.f32 %v5440, %v5731
    %v5905 = vmax.f32 %v5442, %v5733
    %v5906 = vmax.f32 %v5450, %v5735
    %v5907 = vmax.f32 %v5458, %v5737
    %v5908 = vmax.f32 %v5457, %v5739
    %v5909 = vmax.f32 %v5459, %v5741
    %v5910 = vmax.f32 %v5467, %v5743
    %v5911 = vmax.f32 %v5475, %v5745
    %v5912 = vmax.f32 %v5474, %v5747
    %v5913 = vmax.f32 %v5476, %v5749
    %v5914 = vmax.f32 %v5484, %v5751
    %v5915 = vmax.f32 %v5492, %v5753
    %v5916 = vmax.f32 %v5491, %v5755
    %v5917 = vmax.f32 %v5493, %v5757
    %v5918 = vmax.f32 %v5501, %v5759
    %v5919 = vmax.f32 %v5509, %v5761
    %v5920 = vmax.f32 %v5508, %v5763
    %v5921 = vmax.f32 %v5510, %v5765
    %v5922 = vmax.f32 %v5518, %v5767
    %v5923 = vmax.f32 %v5526, %v5769
    %v5924 = vmax.f32 %v5525, %v5771
    %v5925 = vmax.f32 %v5527, %v5773
    %v5926 = vmax.f32 %v5535, %v5775
    %v5927 = vmax.f32 %v5543, %v5777
    %v5928 = vmax.f32 %v5542, %v5779
    %v5929 = vmax.f32 %v5544, %v5781
    %v5930 = vmax.f32 %v5552, %v5783
    %v5931 = vmax.f32 %v5560, %v5785
    %v5932 = vmax.f32 %v5559, %v5787
    %v5933 = vmax.f32 %v5561, %v5789
    %v5934 = vmax.f32 %v5569, %v5791
    %v5935 = vmax.f32 %v5577, %v5793
    %v5936 = vmax.f32 %v5576, %v5795
    %v5937 = vmax.f32 %v5578, %v5797
    %v5938 = vmax.f32 %v5586, %v5799
    %v5939 = vmax.f32 %v5594, %v5801
    %v5940 = vmax.f32 %v5593, %v5803
    %v5941 = vmax.f32 %v5595, %v5805
    %v5942 = vmax.f32 %v5603, %v5807
    %v5943 = vmax.f32 %v5611, %v5809
    %v5944 = vmax.f32 %v5610, %v5811
    %v5945 = vmax.f32 %v5612, %v5813
    %v5946 = vmax.f32 %v5620, %v5815
    %v5947 = vmax.f32 %v5628, %v5817
    %v5948 = vmax.f32 %v5627, %v5819
    %v5949 = vmax.f32 %v5629, %v5821
    %v5950 = vld [vmem:[%s4] sm:$0x1]
    %v5952 = vlaneseq
    %v5953 = vshrl.u32 %v5952, 7
    %v5954 = vsub.s32 0, %v5953
    %v5955 = vrot.slane %v5950, %v5954
    %v5956 = vcombine.high %v5955, %v5955
    %v5958 = vunpack.c.l.s4 1983009808
    %v5959 = vunpack.c.0.s8 %v5958
    %v5960 = vlaneseq
    %v5961 = vshrl.u32 %v5960, 7
    %v5962 = vsub.s32 %v5959, %v5961
    %v5963 = vrot.slane %v5955, %v5962
    %v5965 = vunpack.c.l.s4 1983009808
    %v5966 = vunpack.c.0.s8 %v5965
    %v5967 = vlaneseq
    %v5968 = vshrl.u32 %v5967, 7
    %v5969 = vsub.s32 %v5966, %v5968
    %v5970 = vrot.slane %v5956, %v5969
    %v5971 = vcombine.high %v5963, %v5963
    %v5972 = vcombine.high %v5970, %v5970
    %v5973 = vrot.slane %v5963, 1
    %v5974 = vrot.slane %v5971, 1
    %v5975 = vrot.slane %v5970, 1
    %v5976 = vrot.slane %v5972, 1
    %v5985 = vadd.f32 %v5886, %v5963
    %v5986 = vadd.f32 %v5887, %v5973
    %v5987 = vadd.f32 %v5888, %v5971
    %v5988 = vadd.f32 %v5889, %v5974
    %v5989 = vadd.f32 %v5890, %v5970
    %v5990 = vadd.f32 %v5891, %v5975
    %v5991 = vadd.f32 %v5892, %v5972
    %v5992 = vadd.f32 %v5893, %v5976
    %v5993 = vadd.f32 %v5894, %v5963
    %v5994 = vadd.f32 %v5895, %v5973
    %v5995 = vadd.f32 %v5896, %v5971
    %v5996 = vadd.f32 %v5897, %v5974
    %v5997 = vadd.f32 %v5898, %v5970
    %v5998 = vadd.f32 %v5899, %v5975
    %v5999 = vadd.f32 %v5900, %v5972
    %v6000 = vadd.f32 %v5901, %v5976
    %v6001 = vadd.f32 %v5902, %v5963
    %v6002 = vadd.f32 %v5903, %v5973
    %v6003 = vadd.f32 %v5904, %v5971
    %v6004 = vadd.f32 %v5905, %v5974
    %v6005 = vadd.f32 %v5906, %v5970
    %v6006 = vadd.f32 %v5907, %v5975
    %v6007 = vadd.f32 %v5908, %v5972
    %v6008 = vadd.f32 %v5909, %v5976
    %v6009 = vadd.f32 %v5910, %v5963
    %v6010 = vadd.f32 %v5911, %v5973
    %v6011 = vadd.f32 %v5912, %v5971
    %v6012 = vadd.f32 %v5913, %v5974
    %v6013 = vadd.f32 %v5914, %v5970
    %v6014 = vadd.f32 %v5915, %v5975
    %v6015 = vadd.f32 %v5916, %v5972
    %v6016 = vadd.f32 %v5917, %v5976
    %v6017 = vadd.f32 %v5918, %v5963
    %v6018 = vadd.f32 %v5919, %v5973
    %v6019 = vadd.f32 %v5920, %v5971
    %v6020 = vadd.f32 %v5921, %v5974
    %v6021 = vadd.f32 %v5922, %v5970
    %v6022 = vadd.f32 %v5923, %v5975
    %v6023 = vadd.f32 %v5924, %v5972
    %v6024 = vadd.f32 %v5925, %v5976
    %v6025 = vadd.f32 %v5926, %v5963
    %v6026 = vadd.f32 %v5927, %v5973
    %v6027 = vadd.f32 %v5928, %v5971
    %v6028 = vadd.f32 %v5929, %v5974
    %v6029 = vadd.f32 %v5930, %v5970
    %v6030 = vadd.f32 %v5931, %v5975
    %v6031 = vadd.f32 %v5932, %v5972
    %v6032 = vadd.f32 %v5933, %v5976
    %v6033 = vadd.f32 %v5934, %v5963
    %v6034 = vadd.f32 %v5935, %v5973
    %v6035 = vadd.f32 %v5936, %v5971
    %v6036 = vadd.f32 %v5937, %v5974
    %v6037 = vadd.f32 %v5938, %v5970
    %v6038 = vadd.f32 %v5939, %v5975
    %v6039 = vadd.f32 %v5940, %v5972
    %v6040 = vadd.f32 %v5941, %v5976
    %v6041 = vadd.f32 %v5942, %v5963
    %v6042 = vadd.f32 %v5943, %v5973
    %v6043 = vadd.f32 %v5944, %v5971
    %v6044 = vadd.f32 %v5945, %v5974
    %v6045 = vadd.f32 %v5946, %v5970
    %v6046 = vadd.f32 %v5947, %v5975
    %v6047 = vadd.f32 %v5948, %v5972
    %v6048 = vadd.f32 %v5949, %v5976
    %v6049 = vmax.f32 %v5985, 0.0
    %v6050 = vmax.f32 %v5986, 0.0
    %v6051 = vmax.f32 %v5987, 0.0
    %v6052 = vmax.f32 %v5988, 0.0
    %v6053 = vmax.f32 %v5989, 0.0
    %v6054 = vmax.f32 %v5990, 0.0
    %v6055 = vmax.f32 %v5991, 0.0
    %v6056 = vmax.f32 %v5992, 0.0
    %v6057 = vmax.f32 %v5993, 0.0
    %v6058 = vmax.f32 %v5994, 0.0
    %v6059 = vmax.f32 %v5995, 0.0
    %v6060 = vmax.f32 %v5996, 0.0
    %v6061 = vmax.f32 %v5997, 0.0
    %v6062 = vmax.f32 %v5998, 0.0
    %v6063 = vmax.f32 %v5999, 0.0
    %v6064 = vmax.f32 %v6000, 0.0
    %v6065 = vmax.f32 %v6001, 0.0
    %v6066 = vmax.f32 %v6002, 0.0
    %v6067 = vmax.f32 %v6003, 0.0
    %v6068 = vmax.f32 %v6004, 0.0
    %v6069 = vmax.f32 %v6005, 0.0
    %v6070 = vmax.f32 %v6006, 0.0
    %v6071 = vmax.f32 %v6007, 0.0
    %v6072 = vmax.f32 %v6008, 0.0
    %v6073 = vmax.f32 %v6009, 0.0
    %v6074 = vmax.f32 %v6010, 0.0
    %v6075 = vmax.f32 %v6011, 0.0
    %v6076 = vmax.f32 %v6012, 0.0
    %v6077 = vmax.f32 %v6013, 0.0
    %v6078 = vmax.f32 %v6014, 0.0
    %v6079 = vmax.f32 %v6015, 0.0
    %v6080 = vmax.f32 %v6016, 0.0
    %v6081 = vmax.f32 %v6017, 0.0
    %v6082 = vmax.f32 %v6018, 0.0
    %v6083 = vmax.f32 %v6019, 0.0
    %v6084 = vmax.f32 %v6020, 0.0
    %v6085 = vmax.f32 %v6021, 0.0
    %v6086 = vmax.f32 %v6022, 0.0
    %v6087 = vmax.f32 %v6023, 0.0
    %v6088 = vmax.f32 %v6024, 0.0
    %v6089 = vmax.f32 %v6025, 0.0
    %v6090 = vmax.f32 %v6026, 0.0
    %v6091 = vmax.f32 %v6027, 0.0
    %v6092 = vmax.f32 %v6028, 0.0
    %v6093 = vmax.f32 %v6029, 0.0
    %v6094 = vmax.f32 %v6030, 0.0
    %v6095 = vmax.f32 %v6031, 0.0
    %v6096 = vmax.f32 %v6032, 0.0
    %v6097 = vmax.f32 %v6033, 0.0
    %v6098 = vmax.f32 %v6034, 0.0
    %v6099 = vmax.f32 %v6035, 0.0
    %v6100 = vmax.f32 %v6036, 0.0
    %v6101 = vmax.f32 %v6037, 0.0
    %v6102 = vmax.f32 %v6038, 0.0
    %v6103 = vmax.f32 %v6039, 0.0
    %v6104 = vmax.f32 %v6040, 0.0
    %v6105 = vmax.f32 %v6041, 0.0
    %v6106 = vmax.f32 %v6042, 0.0
    %v6107 = vmax.f32 %v6043, 0.0
    %v6108 = vmax.f32 %v6044, 0.0
    %v6109 = vmax.f32 %v6045, 0.0
    %v6110 = vmax.f32 %v6046, 0.0
    %v6111 = vmax.f32 %v6047, 0.0
    %v6112 = vmax.f32 %v6048, 0.0
    %v6113 = vmax.f32 %v6049, %v6053
    %v6114 = vmax.f32 %v6050, %v6054
    %v6115 = vmax.f32 %v6051, %v6055
    %v6116 = vmax.f32 %v6052, %v6056
    %v6117 = vmax.f32 %v6057, %v6061
    %v6118 = vmax.f32 %v6058, %v6062
    %v6119 = vmax.f32 %v6059, %v6063
    %v6120 = vmax.f32 %v6060, %v6064
    %v6121 = vmax.f32 %v6065, %v6069
    %v6122 = vmax.f32 %v6066, %v6070
    %v6123 = vmax.f32 %v6067, %v6071
    %v6124 = vmax.f32 %v6068, %v6072
    %v6125 = vmax.f32 %v6073, %v6077
    %v6126 = vmax.f32 %v6074, %v6078
    %v6127 = vmax.f32 %v6075, %v6079
    %v6128 = vmax.f32 %v6076, %v6080
    %v6129 = vmax.f32 %v6081, %v6085
    %v6130 = vmax.f32 %v6082, %v6086
    %v6131 = vmax.f32 %v6083, %v6087
    %v6132 = vmax.f32 %v6084, %v6088
    %v6133 = vmax.f32 %v6089, %v6093
    %v6134 = vmax.f32 %v6090, %v6094
    %v6135 = vmax.f32 %v6091, %v6095
    %v6136 = vmax.f32 %v6092, %v6096
    %v6137 = vmax.f32 %v6097, %v6101
    %v6138 = vmax.f32 %v6098, %v6102
    %v6139 = vmax.f32 %v6099, %v6103
    %v6140 = vmax.f32 %v6100, %v6104
    %v6141 = vmax.f32 %v6105, %v6109
    %v6142 = vmax.f32 %v6106, %v6110
    %v6143 = vmax.f32 %v6107, %v6111
    %v6144 = vmax.f32 %v6108, %v6112
    %v6147 = vsel %vm3699, %v6113, %v6113
    %v6148 = vsel %vm3703, %v6113, %v6147
    %v6149 = vrot.slane %v6129, 7
    %v6150 = vsel %vm3693, %v6149, %v6148
    %v6151 = vsel %vm3697, %v6149, %v6150
    %v6152 = vsel %vm3701, %v6149, %v6151
    %v6153 = vsel %vm3705, %v6149, %v6152
    %vm6155 = vcmask 254976
    %6156 = vst.msk [vmem:[#allocation4] sm:$0x3] %vm6155, %v6153
    %v6159 = vsel %vm3699, %v6114, %v6114
    %v6160 = vsel %vm3703, %v6114, %v6159
    %v6161 = vrot.slane %v6130, 7
    %v6162 = vsel %vm3693, %v6161, %v6160
    %v6163 = vsel %vm3697, %v6161, %v6162
    %v6164 = vsel %vm3701, %v6161, %v6163
    %v6165 = vsel %vm3705, %v6161, %v6164
    %6166 = vrot.lane.b32.xlu0 %v6165, 32
    %v6167 = vpop.permute.xlu0 %6166
    %vm6169 = vcmask 517376
    %6170 = vst.msk [vmem:[#allocation4] sm:$0x3] %vm6169, %v6167
    %v6173 = vsel %vm3699, %v6115, %v6115
    %v6174 = vsel %vm3703, %v6115, %v6173
    %v6175 = vrot.slane %v6131, 7
    %v6176 = vsel %vm3693, %v6175, %v6174
    %v6177 = vsel %vm3697, %v6175, %v6176
    %v6178 = vsel %vm3701, %v6175, %v6177
    %v6179 = vsel %vm3705, %v6175, %v6178
    %6180 = vrot.lane.b32.xlu0 %v6179, 64
    %v6181 = vpop.permute.xlu0 %6180
    %vm6183 = vcmask 779776
    %6184 = vst.msk [vmem:[#allocation4] sm:$0x3] %vm6183, %v6181
    %v6187 = vsel %vm3699, %v6116, %v6116
    %v6188 = vsel %vm3703, %v6116, %v6187
    %v6189 = vrot.slane %v6132, 7
    %v6190 = vsel %vm3693, %v6189, %v6188
    %v6191 = vsel %vm3697, %v6189, %v6190
    %v6192 = vsel %vm3701, %v6189, %v6191
    %v6193 = vsel %vm3705, %v6189, %v6192
    %6194 = vrot.lane.b32.xlu0 %v6193, 96
    %v6195 = vpop.permute.xlu0 %6194
    %vm6197 = vcmask 1042176
    %6198 = vst.msk [vmem:[#allocation4] sm:$0x3] %vm6197, %v6195
    %v6201 = vsel %vm3699, %v6117, %v6117
    %v6202 = vsel %vm3703, %v6117, %v6201
    %v6203 = vrot.slane %v6133, 7
    %v6204 = vsel %vm3693, %v6203, %v6202
    %v6205 = vsel %vm3697, %v6203, %v6204
    %v6206 = vsel %vm3701, %v6203, %v6205
    %v6207 = vsel %vm3705, %v6203, %v6206
    %6209 = vst.msk [vmem:[#allocation4 + $0x2] sm:$0x3] %vm6155, %v6207
    %v6212 = vsel %vm3699, %v6118, %v6118
    %v6213 = vsel %vm3703, %v6118, %v6212
    %v6214 = vrot.slane %v6134, 7
    %v6215 = vsel %vm3693, %v6214, %v6213
    %v6216 = vsel %vm3697, %v6214, %v6215
    %v6217 = vsel %vm3701, %v6214, %v6216
    %v6218 = vsel %vm3705, %v6214, %v6217
    %6219 = vrot.lane.b32.xlu0 %v6218, 32
    %v6220 = vpop.permute.xlu0 %6219
    %6222 = vst.msk [vmem:[#allocation4 + $0x2] sm:$0x3] %vm6169, %v6220
    %v6225 = vsel %vm3699, %v6119, %v6119
    %v6226 = vsel %vm3703, %v6119, %v6225
    %v6227 = vrot.slane %v6135, 7
    %v6228 = vsel %vm3693, %v6227, %v6226
    %v6229 = vsel %vm3697, %v6227, %v6228
    %v6230 = vsel %vm3701, %v6227, %v6229
    %v6231 = vsel %vm3705, %v6227, %v6230
    %6232 = vrot.lane.b32.xlu0 %v6231, 64
    %v6233 = vpop.permute.xlu0 %6232
    %6235 = vst.msk [vmem:[#allocation4 + $0x2] sm:$0x3] %vm6183, %v6233
    %v6238 = vsel %vm3699, %v6120, %v6120
    %v6239 = vsel %vm3703, %v6120, %v6238
    %v6240 = vrot.slane %v6136, 7
    %v6241 = vsel %vm3693, %v6240, %v6239
    %v6242 = vsel %vm3697, %v6240, %v6241
    %v6243 = vsel %vm3701, %v6240, %v6242
    %v6244 = vsel %vm3705, %v6240, %v6243
    %6245 = vrot.lane.b32.xlu0 %v6244, 96
    %v6246 = vpop.permute.xlu0 %6245
    %6248 = vst.msk [vmem:[#allocation4 + $0x2] sm:$0x3] %vm6197, %v6246
    %v6251 = vsel %vm3699, %v6121, %v6121
    %v6252 = vsel %vm3703, %v6121, %v6251
    %v6253 = vrot.slane %v6137, 7
    %v6254 = vsel %vm3693, %v6253, %v6252
    %v6255 = vsel %vm3697, %v6253, %v6254
    %v6256 = vsel %vm3701, %v6253, %v6255
    %v6257 = vsel %vm3705, %v6253, %v6256
    %6259 = vst.msk [vmem:[#allocation4 + $0x4] sm:$0x3] %vm6155, %v6257
    %v6262 = vsel %vm3699, %v6122, %v6122
    %v6263 = vsel %vm3703, %v6122, %v6262
    %v6264 = vrot.slane %v6138, 7
    %v6265 = vsel %vm3693, %v6264, %v6263
    %v6266 = vsel %vm3697, %v6264, %v6265
    %v6267 = vsel %vm3701, %v6264, %v6266
    %v6268 = vsel %vm3705, %v6264, %v6267
    %6269 = vrot.lane.b32.xlu0 %v6268, 32
    %v6270 = vpop.permute.xlu0 %6269
    %6272 = vst.msk [vmem:[#allocation4 + $0x4] sm:$0x3] %vm6169, %v6270
    %v6275 = vsel %vm3699, %v6123, %v6123
    %v6276 = vsel %vm3703, %v6123, %v6275
    %v6277 = vrot.slane %v6139, 7
    %v6278 = vsel %vm3693, %v6277, %v6276
    %v6279 = vsel %vm3697, %v6277, %v6278
    %v6280 = vsel %vm3701, %v6277, %v6279
    %v6281 = vsel %vm3705, %v6277, %v6280
    %6282 = vrot.lane.b32.xlu0 %v6281, 64
    %v6283 = vpop.permute.xlu0 %6282
    %6285 = vst.msk [vmem:[#allocation4 + $0x4] sm:$0x3] %vm6183, %v6283
    %v6288 = vsel %vm3699, %v6124, %v6124
    %v6289 = vsel %vm3703, %v6124, %v6288
    %v6290 = vrot.slane %v6140, 7
    %v6291 = vsel %vm3693, %v6290, %v6289
    %v6292 = vsel %vm3697, %v6290, %v6291
    %v6293 = vsel %vm3701, %v6290, %v6292
    %v6294 = vsel %vm3705, %v6290, %v6293
    %6295 = vrot.lane.b32.xlu0 %v6294, 96
    %v6296 = vpop.permute.xlu0 %6295
    %6298 = vst.msk [vmem:[#allocation4 + $0x4] sm:$0x3] %vm6197, %v6296
    %v6301 = vsel %vm3699, %v6125, %v6125
    %v6302 = vsel %vm3703, %v6125, %v6301
    %v6303 = vrot.slane %v6141, 7
    %v6304 = vsel %vm3693, %v6303, %v6302
    %v6305 = vsel %vm3697, %v6303, %v6304
    %v6306 = vsel %vm3701, %v6303, %v6305
    %v6307 = vsel %vm3705, %v6303, %v6306
    %6309 = vst.msk [vmem:[#allocation4 + $0x6] sm:$0x3] %vm6155, %v6307
    %v6312 = vsel %vm3699, %v6126, %v6126
    %v6313 = vsel %vm3703, %v6126, %v6312
    %v6314 = vrot.slane %v6142, 7
    %v6315 = vsel %vm3693, %v6314, %v6313
    %v6316 = vsel %vm3697, %v6314, %v6315
    %v6317 = vsel %vm3701, %v6314, %v6316
    %v6318 = vsel %vm3705, %v6314, %v6317
    %6319 = vrot.lane.b32.xlu0 %v6318, 32
    %v6320 = vpop.permute.xlu0 %6319
    %6322 = vst.msk [vmem:[#allocation4 + $0x6] sm:$0x3] %vm6169, %v6320
    %v6325 = vsel %vm3699, %v6127, %v6127
    %v6326 = vsel %vm3703, %v6127, %v6325
    %v6327 = vrot.slane %v6143, 7
    %v6328 = vsel %vm3693, %v6327, %v6326
    %v6329 = vsel %vm3697, %v6327, %v6328
    %v6330 = vsel %vm3701, %v6327, %v6329
    %v6331 = vsel %vm3705, %v6327, %v6330
    %6332 = vrot.lane.b32.xlu0 %v6331, 64
    %v6333 = vpop.permute.xlu0 %6332
    %6335 = vst.msk [vmem:[#allocation4 + $0x6] sm:$0x3] %vm6183, %v6333
    %v6338 = vsel %vm3699, %v6128, %v6128
    %v6339 = vsel %vm3703, %v6128, %v6338
    %v6340 = vrot.slane %v6144, 7
    %v6341 = vsel %vm3693, %v6340, %v6339
    %v6342 = vsel %vm3697, %v6340, %v6341
    %v6343 = vsel %vm3701, %v6340, %v6342
    %v6344 = vsel %vm3705, %v6340, %v6343
    %6345 = vrot.lane.b32.xlu0 %v6344, 96
    %v6346 = vpop.permute.xlu0 %6345
    %6348 = vst.msk [vmem:[#allocation4 + $0x6] sm:$0x3] %vm6197, %v6346
    %v6349 = vld [vmem:[#allocation4] sm:$0xff]
    %v6351 = vcombine.high %v6349, %v6349
    %v6353 = vunpack.c.l.s4 1983009808
    %v6354 = vunpack.c.0.s8 %v6353
    %v6355 = vlaneseq
    %v6356 = vshrl.u32 %v6355, 7
    %v6357 = vsub.s32 %v6354, %v6356
    %v6358 = vrot.slane %v6349, %v6357
    %v6360 = vunpack.c.l.s4 1983009808
    %v6361 = vunpack.c.0.s8 %v6360
    %v6362 = vlaneseq
    %v6363 = vshrl.u32 %v6362, 7
    %v6364 = vsub.s32 %v6361, %v6363
    %v6365 = vrot.slane %v6351, %v6364
    %v6366 = vcombine.high %v6358, %v6358
    %v6367 = vcombine.high %v6365, %v6365
    %v6372 = vpack.c.bf16 %v6358, %v6358
    %v6373 = vpack.c.bf16 %v6366, %v6366
    %v6374 = vpack.c.bf16 %v6365, %v6365
    %v6375 = vpack.c.bf16 %v6367, %v6367
    %v6376 = vld [vmem:[%s5] sm:$0xf]
    %v6377 = vld [vmem:[%s5 + $0x4] sm:$0xf]
    %v6378 = vld [vmem:[%s5 + $0x8] sm:$0xf]
    %v6379 = vld [vmem:[%s5 + $0xc] sm:$0xf]
    %v6380 = vld [vmem:[%s5 + $0x10] sm:$0xf]
    %v6381 = vld [vmem:[%s5 + $0x14] sm:$0xf]
    %v6382 = vld [vmem:[%s5 + $0x18] sm:$0xf]
    %v6383 = vld [vmem:[%s5 + $0x1c] sm:$0xf]
    %v6384 = vld [vmem:[%s5 + $0x20] sm:$0xf]
    %v6385 = vld [vmem:[%s5 + $0x24] sm:$0xf]
    %v6386 = vld [vmem:[%s5 + $0x28] sm:$0xf]
    %v6387 = vld [vmem:[%s5 + $0x2c] sm:$0xf]
    %v6388 = vld [vmem:[%s5 + $0x30] sm:$0xf]
    %v6389 = vld [vmem:[%s5 + $0x34] sm:$0xf]
    %v6390 = vld [vmem:[%s5 + $0x38] sm:$0xf]
    %v6391 = vld [vmem:[%s5 + $0x3c] sm:$0xf]
    %v6392 = vld [vmem:[%s5 + $0x40] sm:$0xf]
    %v6393 = vld [vmem:[%s5 + $0x44] sm:$0xf]
    %v6394 = vld [vmem:[%s5 + $0x48] sm:$0xf]
    %v6395 = vld [vmem:[%s5 + $0x4c] sm:$0xf]
    %v6396 = vld [vmem:[%s5 + $0x50] sm:$0xf]
    %v6397 = vld [vmem:[%s5 + $0x54] sm:$0xf]
    %v6398 = vld [vmem:[%s5 + $0x58] sm:$0xf]
    %v6399 = vld [vmem:[%s5 + $0x5c] sm:$0xf]
    %v6400 = vld [vmem:[%s5 + $0x60] sm:$0xf]
    %v6401 = vld [vmem:[%s5 + $0x64] sm:$0xf]
    %v6402 = vld [vmem:[%s5 + $0x68] sm:$0xf]
    %v6403 = vld [vmem:[%s5 + $0x6c] sm:$0xf]
    %v6404 = vld [vmem:[%s5 + $0x70] sm:$0xf]
    %v6405 = vld [vmem:[%s5 + $0x74] sm:$0xf]
    %v6406 = vld [vmem:[%s5 + $0x78] sm:$0xf]
    %v6407 = vld [vmem:[%s5 + $0x7c] sm:$0xf]
    %v6408 = vld [vmem:[%s5 + $0x80] sm:$0xf]
    %v6409 = vld [vmem:[%s5 + $0x84] sm:$0xf]
    %v6410 = vld [vmem:[%s5 + $0x88] sm:$0xf]
    %v6411 = vld [vmem:[%s5 + $0x8c] sm:$0xf]
    %v6412 = vld [vmem:[%s5 + $0x90] sm:$0xf]
    %v6413 = vld [vmem:[%s5 + $0x94] sm:$0xf]
    %v6414 = vld [vmem:[%s5 + $0x98] sm:$0xf]
    %v6415 = vld [vmem:[%s5 + $0x9c] sm:$0xf]
    %v6416 = vld [vmem:[%s5 + $0xa0] sm:$0xf]
    %v6417 = vld [vmem:[%s5 + $0xa4] sm:$0xf]
    %v6418 = vld [vmem:[%s5 + $0xa8] sm:$0xf]
    %v6419 = vld [vmem:[%s5 + $0xac] sm:$0xf]
    %v6420 = vld [vmem:[%s5 + $0xb0] sm:$0xf]
    %v6421 = vld [vmem:[%s5 + $0xb4] sm:$0xf]
    %v6422 = vld [vmem:[%s5 + $0xb8] sm:$0xf]
    %v6423 = vld [vmem:[%s5 + $0xbc] sm:$0xf]
    %v6424 = vld [vmem:[%s5 + $0xc0] sm:$0xf]
    %v6425 = vld [vmem:[%s5 + $0xc4] sm:$0xf]
    %v6426 = vld [vmem:[%s5 + $0xc8] sm:$0xf]
    %v6427 = vld [vmem:[%s5 + $0xcc] sm:$0xf]
    %v6428 = vld [vmem:[%s5 + $0xd0] sm:$0xf]
    %v6429 = vld [vmem:[%s5 + $0xd4] sm:$0xf]
    %v6430 = vld [vmem:[%s5 + $0xd8] sm:$0xf]
    %v6431 = vld [vmem:[%s5 + $0xdc] sm:$0xf]
    %v6432 = vld [vmem:[%s5 + $0xe0] sm:$0xf]
    %v6433 = vld [vmem:[%s5 + $0xe4] sm:$0xf]
    %v6434 = vld [vmem:[%s5 + $0xe8] sm:$0xf]
    %v6435 = vld [vmem:[%s5 + $0xec] sm:$0xf]
    %v6436 = vld [vmem:[%s5 + $0xf0] sm:$0xf]
    %v6437 = vld [vmem:[%s5 + $0xf4] sm:$0xf]
    %v6438 = vld [vmem:[%s5 + $0xf8] sm:$0xf]
    %v6439 = vld [vmem:[%s5 + $0xfc] sm:$0xf]
    %v6440 = vld [vmem:[%s6] sm:$0x1]
    %v6442 = vlaneseq
    %v6443 = vshrl.u32 %v6442, 7
    %v6444 = vsub.s32 0, %v6443
    %v6445 = vrot.slane %v6440, %v6444
    %v6511 = vunpack.c.l.b16 %v6376
    %v6512 = vunpack.c.l.b16 %v6377
    %v6513 = vunpack.c.l.b16 %v6378
    %v6514 = vunpack.c.l.b16 %v6379
    %v6515 = vunpack.c.l.b16 %v6380
    %v6516 = vunpack.c.l.b16 %v6381
    %v6517 = vunpack.c.l.b16 %v6382
    %v6518 = vunpack.c.l.b16 %v6383
    %v6519 = vunpack.c.l.b16 %v6384
    %v6520 = vunpack.c.l.b16 %v6385
    %v6521 = vunpack.c.l.b16 %v6386
    %v6522 = vunpack.c.l.b16 %v6387
    %v6523 = vunpack.c.l.b16 %v6388
    %v6524 = vunpack.c.l.b16 %v6389
    %v6525 = vunpack.c.l.b16 %v6390
    %v6526 = vunpack.c.l.b16 %v6391
    %v6527 = vunpack.c.l.b16 %v6392
    %v6528 = vunpack.c.l.b16 %v6393
    %v6529 = vunpack.c.l.b16 %v6394
    %v6530 = vunpack.c.l.b16 %v6395
    %v6531 = vunpack.c.l.b16 %v6396
    %v6532 = vunpack.c.l.b16 %v6397
    %v6533 = vunpack.c.l.b16 %v6398
    %v6534 = vunpack.c.l.b16 %v6399
    %v6535 = vunpack.c.l.b16 %v6400
    %v6536 = vunpack.c.l.b16 %v6401
    %v6537 = vunpack.c.l.b16 %v6402
    %v6538 = vunpack.c.l.b16 %v6403
    %v6539 = vunpack.c.l.b16 %v6404
    %v6540 = vunpack.c.l.b16 %v6405
    %v6541 = vunpack.c.l.b16 %v6406
    %v6542 = vunpack.c.l.b16 %v6407
    %v6543 = vunpack.c.l.b16 %v6408
    %v6544 = vunpack.c.l.b16 %v6409
    %v6545 = vunpack.c.l.b16 %v6410
    %v6546 = vunpack.c.l.b16 %v6411
    %v6547 = vunpack.c.l.b16 %v6412
    %v6548 = vunpack.c.l.b16 %v6413
    %v6549 = vunpack.c.l.b16 %v6414
    %v6550 = vunpack.c.l.b16 %v6415
    %v6551 = vunpack.c.l.b16 %v6416
    %v6552 = vunpack.c.l.b16 %v6417
    %v6553 = vunpack.c.l.b16 %v6418
    %v6554 = vunpack.c.l.b16 %v6419
    %v6555 = vunpack.c.l.b16 %v6420
    %v6556 = vunpack.c.l.b16 %v6421
    %v6557 = vunpack.c.l.b16 %v6422
    %v6558 = vunpack.c.l.b16 %v6423
    %v6559 = vunpack.c.l.b16 %v6424
    %v6560 = vunpack.c.l.b16 %v6425
    %v6561 = vunpack.c.l.b16 %v6426
    %v6562 = vunpack.c.l.b16 %v6427
    %v6563 = vunpack.c.l.b16 %v6428
    %v6564 = vunpack.c.l.b16 %v6429
    %v6565 = vunpack.c.l.b16 %v6430
    %v6566 = vunpack.c.l.b16 %v6431
    %v6567 = vunpack.c.l.b16 %v6432
    %v6568 = vunpack.c.l.b16 %v6433
    %v6569 = vunpack.c.l.b16 %v6434
    %v6570 = vunpack.c.l.b16 %v6435
    %v6571 = vunpack.c.l.b16 %v6436
    %v6572 = vunpack.c.l.b16 %v6437
    %v6573 = vunpack.c.l.b16 %v6438
    %v6574 = vunpack.c.l.b16 %v6439
    %v6575 = vpack.c.b16 %v6512, %v6511
    %v6576 = vpack.c.b16 %v6514, %v6513
    %v6577 = vpack.c.b16 %v6516, %v6515
    %v6578 = vpack.c.b16 %v6518, %v6517
    %v6579 = vpack.c.b16 %v6520, %v6519
    %v6580 = vpack.c.b16 %v6522, %v6521
    %v6581 = vpack.c.b16 %v6524, %v6523
    %v6582 = vpack.c.b16 %v6526, %v6525
    %v6583 = vpack.c.b16 %v6528, %v6527
    %v6584 = vpack.c.b16 %v6530, %v6529
    %v6585 = vpack.c.b16 %v6532, %v6531
    %v6586 = vpack.c.b16 %v6534, %v6533
    %v6587 = vpack.c.b16 %v6536, %v6535
    %v6588 = vpack.c.b16 %v6538, %v6537
    %v6589 = vpack.c.b16 %v6540, %v6539
    %v6590 = vpack.c.b16 %v6542, %v6541
    %v6591 = vpack.c.b16 %v6544, %v6543
    %v6592 = vpack.c.b16 %v6546, %v6545
    %v6593 = vpack.c.b16 %v6548, %v6547
    %v6594 = vpack.c.b16 %v6550, %v6549
    %v6595 = vpack.c.b16 %v6552, %v6551
    %v6596 = vpack.c.b16 %v6554, %v6553
    %v6597 = vpack.c.b16 %v6556, %v6555
    %v6598 = vpack.c.b16 %v6558, %v6557
    %v6599 = vpack.c.b16 %v6560, %v6559
    %v6600 = vpack.c.b16 %v6562, %v6561
    %v6601 = vpack.c.b16 %v6564, %v6563
    %v6602 = vpack.c.b16 %v6566, %v6565
    %v6603 = vpack.c.b16 %v6568, %v6567
    %v6604 = vpack.c.b16 %v6570, %v6569
    %v6605 = vpack.c.b16 %v6572, %v6571
    %v6606 = vpack.c.b16 %v6574, %v6573
    %6639 = vmatprep.subr.bf16.mxu0 0
    %6640 = vmatpush1.bf16.msra.mxu0 %v6575
    %6641 = vmatprep.subr.bf16.mxu0 0
    %6642 = vmatpush1.bf16.msra.mxu0 %v6576
    %6643 = vmatprep.subr.bf16.mxu0 0
    %6644 = vmatpush1.bf16.msra.mxu0 %v6577
    %6645 = vmatprep.subr.bf16.mxu0 0
    %6646 = vmatpush1.bf16.msra.mxu0 %v6578
    %6647 = vmatprep.subr.bf16.mxu0 0
    %6648 = vmatpush1.bf16.msra.mxu0 %v6579
    %6649 = vmatprep.subr.bf16.mxu0 0
    %6650 = vmatpush1.bf16.msra.mxu0 %v6580
    %6651 = vmatprep.subr.bf16.mxu0 0
    %6652 = vmatpush1.bf16.msra.mxu0 %v6581
    %6653 = vmatprep.subr.bf16.mxu0 0
    %6654 = vmatpush1.bf16.msra.mxu0 %v6582
    %6655 = vmatprep.subr.bf16.mxu0 0
    %6656 = vmatpush1.bf16.msra.mxu0 %v6583
    %6657 = vmatprep.subr.bf16.mxu0 0
    %6658 = vmatpush1.bf16.msra.mxu0 %v6584
    %6659 = vmatprep.subr.bf16.mxu0 0
    %6660 = vmatpush1.bf16.msra.mxu0 %v6585
    %6661 = vmatprep.subr.bf16.mxu0 0
    %6662 = vmatpush1.bf16.msra.mxu0 %v6586
    %6663 = vmatprep.subr.bf16.mxu0 0
    %6664 = vmatpush1.bf16.msra.mxu0 %v6587
    %6665 = vmatprep.subr.bf16.mxu0 0
    %6666 = vmatpush1.bf16.msra.mxu0 %v6588
    %6667 = vmatprep.subr.bf16.mxu0 0
    %6668 = vmatpush1.bf16.msra.mxu0 %v6589
    %6669 = vmatprep.subr.bf16.mxu0 0
    %6670 = vmatpush1.bf16.msra.mxu0 %v6590
    %6671 = vmatprep.mubr.bf16.mxu0 %v6373
    %6672 = vmatmul.mubr.bf16.gmra.mrb[0].mxu0 %v6372
    %v6673 = vpop.f32.mrb[0].mxu0
    %v6674 = vadd.f32 %v6445, %v6673
    %v6675 = vpop.f32.mrb[0].mxu0
    %v6676 = vpop.f32.mrb[0].mxu0
    %v6677 = vpop.f32.mrb[0].mxu0
    %6678 = vdwg.mxu0
    %6679 = vmatprep.subr.bf16.mxu0 0
    %6680 = vmatpush1.bf16.msra.mxu0 %v6591
    %6681 = vmatprep.subr.bf16.mxu0 0
    %6682 = vmatpush1.bf16.msra.mxu0 %v6592
    %6683 = vmatprep.subr.bf16.mxu0 0
    %6684 = vmatpush1.bf16.msra.mxu0 %v6593
    %6685 = vmatprep.subr.bf16.mxu0 0
    %6686 = vmatpush1.bf16.msra.mxu0 %v6594
    %6687 = vmatprep.subr.bf16.mxu0 0
    %6688 = vmatpush1.bf16.msra.mxu0 %v6595
    %6689 = vmatprep.subr.bf16.mxu0 0
    %6690 = vmatpush1.bf16.msra.mxu0 %v6596
    %6691 = vmatprep.subr.bf16.mxu0 0
    %6692 = vmatpush1.bf16.msra.mxu0 %v6597
    %6693 = vmatprep.subr.bf16.mxu0 0
    %6694 = vmatpush1.bf16.msra.mxu0 %v6598
    %6695 = vmatprep.subr.bf16.mxu0 0
    %6696 = vmatpush1.bf16.msra.mxu0 %v6599
    %6697 = vmatprep.subr.bf16.mxu0 0
    %6698 = vmatpush1.bf16.msra.mxu0 %v6600
    %6699 = vmatprep.subr.bf16.mxu0 0
    %6700 = vmatpush1.bf16.msra.mxu0 %v6601
    %6701 = vmatprep.subr.bf16.mxu0 0
    %6702 = vmatpush1.bf16.msra.mxu0 %v6602
    %6703 = vmatprep.subr.bf16.mxu0 0
    %6704 = vmatpush1.bf16.msra.mxu0 %v6603
    %6705 = vmatprep.subr.bf16.mxu0 0
    %6706 = vmatpush1.bf16.msra.mxu0 %v6604
    %6707 = vmatprep.subr.bf16.mxu0 0
    %6708 = vmatpush1.bf16.msra.mxu0 %v6605
    %6709 = vmatprep.subr.bf16.mxu0 0
    %6710 = vmatpush1.bf16.msra.mxu0 %v6606
    %6711 = vmatprep.mubr.bf16.mxu0 %v6375
    %6712 = vmatmul.mubr.bf16.gmra.mrb[0].mxu0 %v6374
    %v6713 = vpop.f32.mrb[0].mxu0
    %v6714 = vadd.f32 %v6674, %v6713
    %v6715 = vpop.f32.mrb[0].mxu0
    %v6716 = vpop.f32.mrb[0].mxu0
    %v6717 = vpop.f32.mrb[0].mxu0
    %6718 = vdwg.mxu0
    %v6719 = vmax.f32 %v6714, 0.0
    %v6720 = vpack.c.bf16 %v6719, %v6719
    %v6721 = vld [vmem:[%s7] sm:$0xf]
    %v6722 = vld [vmem:[%s7 + $0x4] sm:$0xf]
    %v6723 = vld [vmem:[%s7 + $0x8] sm:$0xf]
    %v6724 = vld [vmem:[%s7 + $0xc] sm:$0xf]
    %v6725 = vld [vmem:[%s7 + $0x10] sm:$0xf]
    %v6726 = vld [vmem:[%s7 + $0x14] sm:$0xf]
    %v6727 = vld [vmem:[%s7 + $0x18] sm:$0xf]
    %v6728 = vld [vmem:[%s7 + $0x1c] sm:$0xf]
    %v6729 = vld [vmem:[%s7 + $0x20] sm:$0xf]
    %v6730 = vld [vmem:[%s7 + $0x24] sm:$0xf]
    %v6731 = vld [vmem:[%s7 + $0x28] sm:$0xf]
    %v6732 = vld [vmem:[%s7 + $0x2c] sm:$0xf]
    %v6733 = vld [vmem:[%s7 + $0x30] sm:$0xf]
    %v6734 = vld [vmem:[%s7 + $0x34] sm:$0xf]
    %v6735 = vld [vmem:[%s7 + $0x38] sm:$0xf]
    %v6736 = vld [vmem:[%s7 + $0x3c] sm:$0xf]
    %v6737 = vld [vmem:[%s8] sm:$0x1]
    %v6739 = vlaneseq
    %v6740 = vshrl.u32 %v6739, 7
    %v6741 = vsub.s32 0, %v6740
    %v6742 = vrot.slane %v6737, %v6741
    %v6760 = vunpack.c.l.b16 %v6721
    %v6761 = vunpack.c.l.b16 %v6722
    %v6762 = vunpack.c.l.b16 %v6723
    %v6763 = vunpack.c.l.b16 %v6724
    %v6764 = vunpack.c.l.b16 %v6725
    %v6765 = vunpack.c.l.b16 %v6726
    %v6766 = vunpack.c.l.b16 %v6727
    %v6767 = vunpack.c.l.b16 %v6728
    %v6768 = vunpack.c.l.b16 %v6729
    %v6769 = vunpack.c.l.b16 %v6730
    %v6770 = vunpack.c.l.b16 %v6731
    %v6771 = vunpack.c.l.b16 %v6732
    %v6772 = vunpack.c.l.b16 %v6733
    %v6773 = vunpack.c.l.b16 %v6734
    %v6774 = vunpack.c.l.b16 %v6735
    %v6775 = vunpack.c.l.b16 %v6736
    %v6776 = vpack.c.b16 %v6761, %v6760
    %v6777 = vpack.c.b16 %v6763, %v6762
    %v6778 = vpack.c.b16 %v6765, %v6764
    %v6779 = vpack.c.b16 %v6767, %v6766
    %v6780 = vpack.c.b16 %v6769, %v6768
    %v6781 = vpack.c.b16 %v6771, %v6770
    %v6782 = vpack.c.b16 %v6773, %v6772
    %v6783 = vpack.c.b16 %v6775, %v6774
    %6792 = vmatprep.subr.bf16.mxu0 0
    %6793 = vmatpush1.bf16.msra.mxu0 %v6776
    %6794 = vmatprep.subr.bf16.mxu0 0
    %6795 = vmatpush1.bf16.msra.mxu0 %v6777
    %6796 = vmatprep.subr.bf16.mxu0 0
    %6797 = vmatpush1.bf16.msra.mxu0 %v6778
    %6798 = vmatprep.subr.bf16.mxu0 0
    %6799 = vmatpush1.bf16.msra.mxu0 %v6779
    %6800 = vmatprep.subr.bf16.mxu0 0
    %6801 = vmatpush1.bf16.msra.mxu0 %v6780
    %6802 = vmatprep.subr.bf16.mxu0 0
    %6803 = vmatpush1.bf16.msra.mxu0 %v6781
    %6804 = vmatprep.subr.bf16.mxu0 0
    %6805 = vmatpush1.bf16.msra.mxu0 %v6782
    %6806 = vmatprep.subr.bf16.mxu0 0
    %6807 = vmatpush1.bf16.msra.mxu0 %v6783
    %6808 = vmatprep.subr.bf16.mxu0 0
    %6809 = vmatpush1.bf16.msra.mxu0 0
    %6810 = vmatprep.subr.bf16.mxu0 0
    %6811 = vmatpush1.bf16.msra.mxu0 0
    %6812 = vmatprep.subr.bf16.mxu0 0
    %6813 = vmatpush1.bf16.msra.mxu0 0
    %6814 = vmatprep.subr.bf16.mxu0 0
    %6815 = vmatpush1.bf16.msra.mxu0 0
    %6816 = vmatprep.subr.bf16.mxu0 0
    %6817 = vmatpush1.bf16.msra.mxu0 0
    %6818 = vmatprep.subr.bf16.mxu0 0
    %6819 = vmatpush1.bf16.msra.mxu0 0
    %6820 = vmatprep.subr.bf16.mxu0 0
    %6821 = vmatpush1.bf16.msra.mxu0 0
    %6822 = vmatprep.subr.bf16.mxu0 0
    %6823 = vmatpush1.bf16.msra.mxu0 0
    %6824 = vmatprep.mubr.bf16.mxu0 0
    %6825 = vmatmul.mubr.bf16.gmra.mrb[0].mxu0 %v6720
    %v6826 = vpop.f32.mrb[0].mxu0
    %v6827 = vadd.f32 %v6742, %v6826
    %v6828 = vpop.f32.mrb[0].mxu0
    %v6829 = vpop.f32.mrb[0].mxu0
    %v6830 = vpop.f32.mrb[0].mxu0
    %6831 = vdwg.mxu0
    %6832 = vst [vmem:[#allocation5] sm:$0x3] %v6827
    // Predicated region
    $region38: #{deepvol_forward.1} parent=1 // pred_check
      _
    $region39: #{deepvol_forward.1} parent=1 // pred_check_branch
      %6834 = sbr.rel (0) target = $region41
    $region40: #{deepvol_forward.1} parent=1 // pred_region
      %s6836 = ssub.s32 32, 32
      %6837 = vsyncadd [#allocation6], %s6836
      %s6839 = sshll.u32 [#allocation5], 4
      %s6840 = int_to_ptr.vmem [resolvable:$true] %s6839
      %6842 = dma.vmem_to_hbm [thread:$0]  %s6840, 32, %s9, [#allocation6]
    $region41: #{deepvol_forward.1} parent=1 // pred_fallthru
      _
    // Predicated region
    $region42: #{deepvol_forward.1} parent=1 // pred_check
      _
    $region43: #{deepvol_forward.1} parent=1 // pred_check_branch
      %6844 = sbr.rel (0) target = $region45
    $region44: #{deepvol_forward.1} parent=1 // pred_region
      %6845 = dma.done [#allocation6], 32
    $region45: #{deepvol_forward.1} parent=1 // pred_fallthru
      _
    %6846 = vsyncpa [#allocation6], 1

</llo_original>
